<compile_context>
chip_gen: v7x
topology: tpu7x:2x2x1
jax: 0.10.0
libtpu: 0.0.40
codegen_flags: <defaults>
</compile_context>

<pallas_src>
import jax
import jax.numpy as jnp
from jax.experimental import pallas as pl

# ----------------- hyperparameters (small, args-consistent) -----------------
B = 2              # batch
N_ATOMS = 16       # args.num_atoms
NBR = 4            # args.num_neighbors
H_A = 32           # args.h_a   (atom feature dim)
H_G = 16           # args.h_g   (graph embedding dim)
N_CLASSES = 5      # args.num_classes
N_CONV = 2         # args.n_conv
DMIN, DMAX, STEP = 0.0, 4.0, 0.5                              # GaussianDistance params
MU = jnp.arange(DMIN, DMAX + STEP, STEP, dtype=jnp.float32)   # gaussian centers
H_B = int(MU.shape[0])                                        # gauss.num_features (= 9)
INV_VAR2 = 1.0 / (STEP * STEP)

R = B * N_ATOMS    # batch-stacked atom rows  (32)
NR = NBR * R       # neighbor+batch-stacked rows (128) — ordered (nbr, batch, atom)


# ------------------------------- Pallas kernel ------------------------------
def graphvamp_kernel(dist_ref, onehot_ref, sel_ref, mu_ref, emb_ref,
                     w_init_ref, w_f1_ref, b_f1_ref, w_f2_ref, b_f2_ref,
                     nbr_filt_ref, w_o1_ref, b_o1_ref, w_o2_ref, b_o2_ref,
                     w_pool_ref, a_pool_ref, w_amino_ref, b_amino_ref,
                     w_cls_ref, b_cls_ref, out_ref):
    f32 = jnp.float32

    # ---- Gaussian RBF expansion: layer-invariant, computed once for all
    #      layers / neighbors / batch items (stacked rows ordered (j, b, i)).
    mu = mu_ref[...]                                   # [1, H_B]
    d = dist_ref[...]                                  # [NR, 1]
    rbf = jnp.exp(-((d - mu) ** 2) * INV_VAR2)         # [NR, H_B]

    onehot = onehot_ref[...]                           # [NR, R] block-diagonal gather matrix
    sel = sel_ref[...]                                 # [B, R]  batch-selection for pooling
    h = emb_ref[...]                                   # [R, H_A] batch-stacked shared embeddings

    # ---- n_conv SchNet GCNInteraction blocks (residual) ----
    for l in range(N_CONV):
        # continuous-filter generator: one stacked Linear->tanh->Linear chain
        f1 = jnp.tanh(jnp.dot(rbf, w_f1_ref[l], preferred_element_type=f32) + b_f1_ref[l])
        filt = jnp.dot(f1, w_f2_ref[l], preferred_element_type=f32) + b_f2_ref[l]     # [NR, H_A]

        init = jnp.dot(h, w_init_ref[l], preferred_element_type=f32)                  # [R, H_A] (no bias)
        nbr_feat = jnp.dot(onehot, init, preferred_element_type=f32)                  # [NR, H_A] gather
        conv = nbr_feat * filt                                                        # cfconv features

        # attention over the neighbor axis: softmax per (batch, atom) row group.
        # Global-max shift is per-group-softmax invariant and keeps one exp push.
        score = jnp.sum(conv * nbr_filt_ref[l], axis=-1, keepdims=True)               # [NR, 1]
        w_un = jnp.exp(score - jnp.max(score))                                        # [NR, 1]
        w_j = [w_un[j * R:(j + 1) * R, :] for j in range(NBR)]                        # 32-row aligned slices
        denom = w_j[0]
        for j in range(1, NBR):
            denom = denom + w_j[j]
        inv_denom = 1.0 / denom                                                       # [R, 1]

        agg = (w_j[0] * inv_denom) * conv[0:R, :]
        for j in range(1, NBR):
            agg = agg + (w_j[j] * inv_denom) * conv[j * R:(j + 1) * R, :]             # [R, H_A]

        # output dense: Linear -> tanh -> Linear, residual
        o1 = jnp.tanh(jnp.dot(agg, w_o1_ref[l], preferred_element_type=f32) + b_o1_ref[l])
        h = h + jnp.dot(o1, w_o2_ref[l], preferred_element_type=f32) + b_o2_ref[l]

    # ---- ReLU + attention pooling over atoms (per batch item) ----
    # TODO(synk): PyGGAT source is not provided; attention_pool is implemented as a
    # single-head GAT-style attention-weighted pooling (LeakyReLU alpha=0.2) over atoms.
    h = jnp.maximum(h, 0.0)
    z = jnp.dot(h, w_pool_ref[...], preferred_element_type=f32)                        # [R, H_A]
    e = jnp.sum(z * a_pool_ref[...], axis=-1, keepdims=True)                           # [R, 1]
    e = jnp.where(e >= 0, e, 0.2 * e)                                                  # LeakyReLU(0.2)
    w_att = jnp.exp(e - jnp.max(e))                                                    # global-max shift
    num = jnp.dot(sel, z * w_att, preferred_element_type=f32)                          # [B, H_A]
    den = jnp.dot(sel, w_att, preferred_element_type=f32)                              # [B, 1]
    graph = num * (1.0 / den)                                                          # per-batch softmax pool

    # ---- amino_emb + classifier + softmax (per batch row) ----
    g = jnp.dot(graph, w_amino_ref[...], preferred_element_type=f32) + b_amino_ref[...]
    logits = jnp.dot(g, w_cls_ref[...], preferred_element_type=f32) + b_cls_ref[...]
    p = jnp.exp(logits - jnp.max(logits, axis=-1, keepdims=True))
    out_ref[...] = p / jnp.sum(p, axis=-1, keepdims=True)                              # [B, N_CLASSES]


# ------------------------------- wrapper (glue) ------------------------------
def graph_vamp_forward(data, params):
    """data: [B, N_ATOMS, 2*NBR]  (distances | neighbor indices, as in the torch module)."""
    nbr_dist = data[..., :NBR]                                   # [B, N, NBR]
    nbr_list = data[..., NBR:].astype(jnp.int32)                 # [B, N, NBR]

    # stack rows as (neighbor, batch, atom) -> NR rows
    dist_stk = jnp.transpose(nbr_dist, (2, 0, 1)).reshape(NR, 1)
    cols = nbr_list + (jnp.arange(B, dtype=jnp.int32) * N_ATOMS)[:, None, None]   # column in batch-stacked init
    cols_stk = jnp.transpose(cols, (2, 0, 1)).reshape(NR)
    onehot = jax.nn.one_hot(cols_stk, R, dtype=jnp.float32)      # [NR, R] block-diagonal gather
    sel = jnp.repeat(jnp.eye(B, dtype=jnp.float32), N_ATOMS, axis=1)               # [B, R] pooling selector
    emb_stacked = jnp.tile(params['emb'], (B, 1))                # [R, H_A]  (== atom_embeddings.expand(B,...))
    mu2d = MU.reshape(1, H_B)

    inputs = (
        dist_stk, onehot, sel, mu2d, emb_stacked,
        params['w_init'], params['w_f1'], params['b_f1'], params['w_f2'], params['b_f2'],
        params['nbr_filt'], params['w_o1'], params['b_o1'], params['w_o2'], params['b_o2'],
        params['w_pool'], params['a_pool'], params['w_amino'], params['b_amino'],
        params['w_cls'], params['b_cls'],
    )

    # Single kernel invocation (no grid): B=2 is fused along sublanes, so the
    # whole forward is one pipelined step with all weights resident in VMEM.
    return pl.pallas_call(
        graphvamp_kernel,
        out_shape=jax.ShapeDtypeStruct((B, N_CLASSES), jnp.float32),
    )(*inputs)


# ------------------------------ plain-JAX reference --------------------------
def reference_forward(data, params):
    nbr_dist = data[..., :NBR]
    nbr_list = data[..., NBR:].astype(jnp.int32)
    rbf = jnp.exp(-((nbr_dist[..., None] - MU[None, None, None, :]) ** 2) * INV_VAR2)  # [B,N,NBR,H_B]
    h = jnp.broadcast_to(params['emb'][None], (B, N_ATOMS, H_A))
    for l in range(N_CONV):
        init = h @ params['w_init'][l]
        f1 = jnp.tanh(rbf @ params['w_f1'][l] + params['b_f1'][l, 0])
        filt = f1 @ params['w_f2'][l] + params['b_f2'][l, 0]
        idx = nbr_list.reshape(B, N_ATOMS * NBR)[..., None]
        idx = jnp.broadcast_to(idx, (B, N_ATOMS * NBR, H_A))
        nbr_feat = jnp.take_along_axis(init, idx, axis=1).reshape(B, N_ATOMS, NBR, H_A)
        conv = nbr_feat * filt
        scores = jnp.sum(conv * params['nbr_filt'][l, 0], axis=-1)
        alpha = jax.nn.softmax(scores, axis=-1)
        agg = jnp.sum(alpha[..., None] * conv, axis=2)
        o1 = jnp.tanh(agg @ params['w_o1'][l] + params['b_o1'][l, 0])
        h = h + (o1 @ params['w_o2'][l] + params['b_o2'][l, 0])
    h = jax.nn.relu(h)
    z = h @ params['w_pool']
    e = jnp.sum(z * params['a_pool'][0], axis=-1, keepdims=True)
    e = jnp.where(e >= 0, e, 0.2 * e)
    att = jax.nn.softmax(e, axis=1)
    graph = jnp.sum(z * att, axis=1)
    g = graph @ params['w_amino'] + params['b_amino'][0]
    logits = g @ params['w_cls'] + params['b_cls'][0]
    return jax.nn.softmax(logits, axis=-1)


# ------------------------------- param init ----------------------------------
def init_params(key):
    ks = iter(jax.random.split(key, 24))
    nrm = lambda k, shape, scale: jax.random.normal(k, shape, jnp.float32) * scale
    p = {}
    p['emb'] = jax.random.normal(next(ks), (N_ATOMS, H_A), jnp.float32)       # atom_embeddings ~ randn
    sa, sb, sg = 1.0 / (H_A ** 0.5), 1.0 / (H_B ** 0.5), 1.0 / (H_G ** 0.5)
    p['w_init'] = nrm(next(ks), (N_CONV, H_A, H_A), sa)
    p['w_f1'] = nrm(next(ks), (N_CONV, H_B, H_A), sb)
    p['b_f1'] = nrm(next(ks), (N_CONV, 1, H_A), 0.01)
    p['w_f2'] = nrm(next(ks), (N_CONV, H_A, H_A), sa)
    p['b_f2'] = nrm(next(ks), (N_CONV, 1, H_A), 0.01)
    p['nbr_filt'] = nrm(next(ks), (N_CONV, 1, H_A), sa)
    p['w_o1'] = nrm(next(ks), (N_CONV, H_A, H_A), sa)
    p['b_o1'] = nrm(next(ks), (N_CONV, 1, H_A), 0.01)
    p['w_o2'] = nrm(next(ks), (N_CONV, H_A, H_A), sa)
    p['b_o2'] = nrm(next(ks), (N_CONV, 1, H_A), 0.01)
    p['w_pool'] = nrm(next(ks), (H_A, H_A), sa)
    p['a_pool'] = nrm(next(ks), (1, H_A), sa)
    p['w_amino'] = nrm(next(ks), (H_A, H_G), sa)
    p['b_amino'] = nrm(next(ks), (1, H_G), 0.01)
    p['w_cls'] = nrm(next(ks), (H_G, N_CLASSES), sg)
    p['b_cls'] = nrm(next(ks), (1, N_CLASSES), 0.01)
    return p


if __name__ == "__main__":
    key = jax.random.PRNGKey(0)
    kp, kd, kn = jax.random.split(key, 3)
    params = init_params(kp)

    # data = [distances | neighbor indices (as float)], exactly as the torch forward expects
    dists = jax.random.uniform(kd, (B, N_ATOMS, NBR), jnp.float32, minval=0.5, maxval=4.0)
    nbrs = jax.random.randint(kn, (B, N_ATOMS, NBR), 0, N_ATOMS)
    data = jnp.concatenate([dists, nbrs.astype(jnp.float32)], axis=-1)   # [B, N_ATOMS, 2*NBR]

    probs = jax.block_until_ready(jax.jit(graph_vamp_forward)(data, params))
    assert probs.shape == (B, N_CLASSES)

    ref = jax.block_until_ready(reference_forward(data, params))
    assert jnp.allclose(jnp.sum(probs, axis=-1), 1.0, atol=1e-4)
    assert jnp.allclose(probs, ref, atol=5e-2, rtol=5e-2), (probs, ref)

    print("KERNEL_OK")
</pallas_src>

<mosaic_0001>
module attributes {stable_mosaic.version = 11 : i64} {
  func.func @graphvamp_kernel(%arg0: memref<128x1xf32, #tpu.memory_space<vmem>>, %arg1: memref<128x32xf32, #tpu.memory_space<vmem>>, %arg2: memref<2x32xf32, #tpu.memory_space<vmem>>, %arg3: memref<1x9xf32, #tpu.memory_space<vmem>>, %arg4: memref<32x32xf32, #tpu.memory_space<vmem>>, %arg5: memref<2x32x32xf32, #tpu.memory_space<vmem>>, %arg6: memref<2x9x32xf32, #tpu.memory_space<vmem>>, %arg7: memref<2x1x32xf32, #tpu.memory_space<vmem>>, %arg8: memref<2x32x32xf32, #tpu.memory_space<vmem>>, %arg9: memref<2x1x32xf32, #tpu.memory_space<vmem>>, %arg10: memref<2x1x32xf32, #tpu.memory_space<vmem>>, %arg11: memref<2x32x32xf32, #tpu.memory_space<vmem>>, %arg12: memref<2x1x32xf32, #tpu.memory_space<vmem>>, %arg13: memref<2x32x32xf32, #tpu.memory_space<vmem>>, %arg14: memref<2x1x32xf32, #tpu.memory_space<vmem>>, %arg15: memref<32x32xf32, #tpu.memory_space<vmem>>, %arg16: memref<1x32xf32, #tpu.memory_space<vmem>>, %arg17: memref<32x16xf32, #tpu.memory_space<vmem>>, %arg18: memref<1x16xf32, #tpu.memory_space<vmem>>, %arg19: memref<16x5xf32, #tpu.memory_space<vmem>>, %arg20: memref<1x5xf32, #tpu.memory_space<vmem>>, %arg21: memref<2x5xf32, #tpu.memory_space<vmem>>) attributes {dimension_semantics = [], scalar_prefetch = 0 : i64, scratch_operands = 0 : i64, tpu.core_type = #tpu.core_type<tc>} {
    %c0 = arith.constant 0 : index
    %c0_0 = arith.constant 0 : index
    %0 = vector.load %arg3[%c0, %c0_0] : memref<1x9xf32, #tpu.memory_space<vmem>>, vector<1x9xf32>
    %c0_1 = arith.constant 0 : index
    %c0_2 = arith.constant 0 : index
    %1 = vector.load %arg0[%c0_1, %c0_2] : memref<128x1xf32, #tpu.memory_space<vmem>>, vector<128x1xf32>
    %2 = vector.broadcast %1 : vector<128x1xf32> to vector<128x9xf32>
    %3 = vector.broadcast %0 : vector<1x9xf32> to vector<128x9xf32>
    %4 = arith.subf %2, %3 : vector<128x9xf32>
    %5 = arith.mulf %4, %4 : vector<128x9xf32>
    %cst = arith.constant 0.000000e+00 : f32
    %6 = vector.broadcast %cst : f32 to vector<128x9xf32>
    %7 = arith.subf %6, %5 : vector<128x9xf32>
    %cst_3 = arith.constant 4.000000e+00 : f32
    %8 = vector.broadcast %cst_3 : f32 to vector<128x9xf32>
    %9 = arith.mulf %7, %8 : vector<128x9xf32>
    %10 = math.exp %9 : vector<128x9xf32>
    %c0_4 = arith.constant 0 : index
    %c0_5 = arith.constant 0 : index
    %11 = vector.load %arg1[%c0_4, %c0_5] : memref<128x32xf32, #tpu.memory_space<vmem>>, vector<128x32xf32>
    %c0_6 = arith.constant 0 : index
    %c0_7 = arith.constant 0 : index
    %12 = vector.load %arg2[%c0_6, %c0_7] : memref<2x32xf32, #tpu.memory_space<vmem>>, vector<2x32xf32>
    %c0_8 = arith.constant 0 : index
    %c0_9 = arith.constant 0 : index
    %13 = vector.load %arg4[%c0_8, %c0_9] : memref<32x32xf32, #tpu.memory_space<vmem>>, vector<32x32xf32>
    %c0_10 = arith.constant 0 : index
    %c0_11 = arith.constant 0 : index
    %c0_12 = arith.constant 0 : index
    %14 = vector.load %arg6[%c0_10, %c0_11, %c0_12] : memref<2x9x32xf32, #tpu.memory_space<vmem>>, vector<1x9x32xf32>
    %15 = vector.shape_cast %14 : vector<1x9x32xf32> to vector<9x32xf32>
    %cst_13 = arith.constant dense<0.000000e+00> : vector<128x32xf32>
    %16 = tpu.matmul %10, %15, %cst_13 {dimension_numbers = #tpu.dot_dimension_numbers<[1], [0], [0], [1], [0, 0, 1, 1], [], []>} : vector<128x9xf32>, vector<9x32xf32>, vector<128x32xf32> -> vector<128x32xf32>
    %c0_14 = arith.constant 0 : index
    %c0_15 = arith.constant 0 : index
    %c0_16 = arith.constant 0 : index
    %17 = vector.load %arg7[%c0_14, %c0_15, %c0_16] : memref<2x1x32xf32, #tpu.memory_space<vmem>>, vector<1x1x32xf32>
    %18 = vector.shape_cast %17 : vector<1x1x32xf32> to vector<1x32xf32>
    %19 = vector.broadcast %18 : vector<1x32xf32> to vector<128x32xf32>
    %20 = arith.addf %16, %19 : vector<128x32xf32>
    %21 = math.tanh %20 : vector<128x32xf32>
    %c0_17 = arith.constant 0 : index
    %c0_18 = arith.constant 0 : index
    %c0_19 = arith.constant 0 : index
    %22 = vector.load %arg8[%c0_17, %c0_18, %c0_19] : memref<2x32x32xf32, #tpu.memory_space<vmem>>, vector<1x32x32xf32>
    %23 = vector.shape_cast %22 : vector<1x32x32xf32> to vector<32x32xf32>
    %cst_20 = arith.constant dense<0.000000e+00> : vector<128x32xf32>
    %24 = tpu.matmul %21, %23, %cst_20 {dimension_numbers = #tpu.dot_dimension_numbers<[1], [0], [0], [1], [0, 0, 1, 1], [], []>} : vector<128x32xf32>, vector<32x32xf32>, vector<128x32xf32> -> vector<128x32xf32>
    %c0_21 = arith.constant 0 : index
    %c0_22 = arith.constant 0 : index
    %c0_23 = arith.constant 0 : index
    %25 = vector.load %arg9[%c0_21, %c0_22, %c0_23] : memref<2x1x32xf32, #tpu.memory_space<vmem>>, vector<1x1x32xf32>
    %26 = vector.shape_cast %25 : vector<1x1x32xf32> to vector<1x32xf32>
    %27 = vector.broadcast %26 : vector<1x32xf32> to vector<128x32xf32>
    %28 = arith.addf %24, %27 : vector<128x32xf32>
    %c0_24 = arith.constant 0 : index
    %c0_25 = arith.constant 0 : index
    %c0_26 = arith.constant 0 : index
    %29 = vector.load %arg5[%c0_24, %c0_25, %c0_26] : memref<2x32x32xf32, #tpu.memory_space<vmem>>, vector<1x32x32xf32>
    %30 = vector.shape_cast %29 : vector<1x32x32xf32> to vector<32x32xf32>
    %cst_27 = arith.constant dense<0.000000e+00> : vector<32x32xf32>
    %31 = tpu.matmul %13, %30, %cst_27 {dimension_numbers = #tpu.dot_dimension_numbers<[1], [0], [0], [1], [0, 0, 1, 1], [], []>} : vector<32x32xf32>, vector<32x32xf32>, vector<32x32xf32> -> vector<32x32xf32>
    %cst_28 = arith.constant dense<0.000000e+00> : vector<128x32xf32>
    %32 = tpu.matmul %11, %31, %cst_28 {dimension_numbers = #tpu.dot_dimension_numbers<[1], [0], [0], [1], [0, 0, 1, 1], [], []>} : vector<128x32xf32>, vector<32x32xf32>, vector<128x32xf32> -> vector<128x32xf32>
    %33 = arith.mulf %32, %28 : vector<128x32xf32>
    %c0_29 = arith.constant 0 : index
    %c0_30 = arith.constant 0 : index
    %c0_31 = arith.constant 0 : index
    %34 = vector.load %arg10[%c0_29, %c0_30, %c0_31] : memref<2x1x32xf32, #tpu.memory_space<vmem>>, vector<1x1x32xf32>
    %35 = vector.shape_cast %34 : vector<1x1x32xf32> to vector<1x32xf32>
    %36 = vector.broadcast %35 : vector<1x32xf32> to vector<128x32xf32>
    %37 = arith.mulf %33, %36 : vector<128x32xf32>
    %cst_32 = arith.constant dense<0.000000e+00> : vector<128xf32>
    %38 = vector.multi_reduction <add>, %37, %cst_32 [1] : vector<128x32xf32> to vector<128xf32>
    %39 = vector.shape_cast %38 : vector<128xf32> to vector<128x1xf32>
    %40 = vector.shape_cast %39 : vector<128x1xf32> to vector<1x128x1xf32>
    %cst_33 = arith.constant dense<0xFF800000> : vector<1xf32>
    %41 = vector.multi_reduction <maximumf>, %40, %cst_33 [1, 2] : vector<1x128x1xf32> to vector<1xf32>
    %42 = vector.shape_cast %41 : vector<1xf32> to vector<1x1x1xf32>
    %43 = vector.extract %42[0, 0, 0] : f32 from vector<1x1x1xf32>
    %44 = vector.broadcast %43 : f32 to vector<128x1xf32>
    %45 = arith.subf %39, %44 : vector<128x1xf32>
    %46 = math.exp %45 : vector<128x1xf32>
    %47 = vector.extract_strided_slice %46 {offsets = [0, 0], sizes = [32, 1], strides = [1, 1]} : vector<128x1xf32> to vector<32x1xf32>
    %48 = vector.extract_strided_slice %46 {offsets = [32, 0], sizes = [32, 1], strides = [1, 1]} : vector<128x1xf32> to vector<32x1xf32>
    %49 = vector.extract_strided_slice %46 {offsets = [64, 0], sizes = [32, 1], strides = [1, 1]} : vector<128x1xf32> to vector<32x1xf32>
    %50 = vector.extract_strided_slice %46 {offsets = [96, 0], sizes = [32, 1], strides = [1, 1]} : vector<128x1xf32> to vector<32x1xf32>
    %51 = arith.addf %47, %48 : vector<32x1xf32>
    %52 = arith.addf %51, %49 : vector<32x1xf32>
    %53 = arith.addf %52, %50 : vector<32x1xf32>
    %cst_34 = arith.constant 1.000000e+00 : f32
    %54 = vector.broadcast %cst_34 : f32 to vector<32x1xf32>
    %55 = arith.divf %54, %53 : vector<32x1xf32>
    %56 = arith.mulf %47, %55 : vector<32x1xf32>
    %57 = vector.extract_strided_slice %33 {offsets = [0, 0], sizes = [32, 32], strides = [1, 1]} : vector<128x32xf32> to vector<32x32xf32>
    %58 = vector.broadcast %56 : vector<32x1xf32> to vector<32x32xf32>
    %59 = arith.mulf %58, %57 : vector<32x32xf32>
    %60 = arith.mulf %48, %55 : vector<32x1xf32>
    %61 = vector.extract_strided_slice %33 {offsets = [32, 0], sizes = [32, 32], strides = [1, 1]} : vector<128x32xf32> to vector<32x32xf32>
    %62 = vector.broadcast %60 : vector<32x1xf32> to vector<32x32xf32>
    %63 = arith.mulf %62, %61 : vector<32x32xf32>
    %64 = arith.addf %59, %63 : vector<32x32xf32>
    %65 = arith.mulf %49, %55 : vector<32x1xf32>
    %66 = vector.extract_strided_slice %33 {offsets = [64, 0], sizes = [32, 32], strides = [1, 1]} : vector<128x32xf32> to vector<32x32xf32>
    %67 = vector.broadcast %65 : vector<32x1xf32> to vector<32x32xf32>
    %68 = arith.mulf %67, %66 : vector<32x32xf32>
    %69 = arith.addf %64, %68 : vector<32x32xf32>
    %70 = arith.mulf %50, %55 : vector<32x1xf32>
    %71 = vector.extract_strided_slice %33 {offsets = [96, 0], sizes = [32, 32], strides = [1, 1]} : vector<128x32xf32> to vector<32x32xf32>
    %72 = vector.broadcast %70 : vector<32x1xf32> to vector<32x32xf32>
    %73 = arith.mulf %72, %71 : vector<32x32xf32>
    %74 = arith.addf %69, %73 : vector<32x32xf32>
    %c0_35 = arith.constant 0 : index
    %c0_36 = arith.constant 0 : index
    %c0_37 = arith.constant 0 : index
    %75 = vector.load %arg11[%c0_35, %c0_36, %c0_37] : memref<2x32x32xf32, #tpu.memory_space<vmem>>, vector<1x32x32xf32>
    %76 = vector.shape_cast %75 : vector<1x32x32xf32> to vector<32x32xf32>
    %cst_38 = arith.constant dense<0.000000e+00> : vector<32x32xf32>
    %77 = tpu.matmul %74, %76, %cst_38 {dimension_numbers = #tpu.dot_dimension_numbers<[1], [0], [0], [1], [0, 0, 1, 1], [], []>} : vector<32x32xf32>, vector<32x32xf32>, vector<32x32xf32> -> vector<32x32xf32>
    %c0_39 = arith.constant 0 : index
    %c0_40 = arith.constant 0 : index
    %c0_41 = arith.constant 0 : index
    %78 = vector.load %arg12[%c0_39, %c0_40, %c0_41] : memref<2x1x32xf32, #tpu.memory_space<vmem>>, vector<1x1x32xf32>
    %79 = vector.shape_cast %78 : vector<1x1x32xf32> to vector<1x32xf32>
    %80 = vector.broadcast %79 : vector<1x32xf32> to vector<32x32xf32>
    %81 = arith.addf %77, %80 : vector<32x32xf32>
    %82 = math.tanh %81 : vector<32x32xf32>
    %c0_42 = arith.constant 0 : index
    %c0_43 = arith.constant 0 : index
    %c0_44 = arith.constant 0 : index
    %83 = vector.load %arg13[%c0_42, %c0_43, %c0_44] : memref<2x32x32xf32, #tpu.memory_space<vmem>>, vector<1x32x32xf32>
    %84 = vector.shape_cast %83 : vector<1x32x32xf32> to vector<32x32xf32>
    %cst_45 = arith.constant dense<0.000000e+00> : vector<32x32xf32>
    %85 = tpu.matmul %82, %84, %cst_45 {dimension_numbers = #tpu.dot_dimension_numbers<[1], [0], [0], [1], [0, 0, 1, 1], [], []>} : vector<32x32xf32>, vector<32x32xf32>, vector<32x32xf32> -> vector<32x32xf32>
    %86 = arith.addf %13, %85 : vector<32x32xf32>
    %c0_46 = arith.constant 0 : index
    %c0_47 = arith.constant 0 : index
    %c0_48 = arith.constant 0 : index
    %87 = vector.load %arg14[%c0_46, %c0_47, %c0_48] : memref<2x1x32xf32, #tpu.memory_space<vmem>>, vector<1x1x32xf32>
    %88 = vector.shape_cast %87 : vector<1x1x32xf32> to vector<1x32xf32>
    %89 = vector.broadcast %88 : vector<1x32xf32> to vector<32x32xf32>
    %90 = arith.addf %86, %89 : vector<32x32xf32>
    %c1 = arith.constant 1 : index
    %c0_49 = arith.constant 0 : index
    %c0_50 = arith.constant 0 : index
    %91 = vector.load %arg6[%c1, %c0_49, %c0_50] : memref<2x9x32xf32, #tpu.memory_space<vmem>>, vector<1x9x32xf32>
    %92 = vector.shape_cast %91 : vector<1x9x32xf32> to vector<9x32xf32>
    %cst_51 = arith.constant dense<0.000000e+00> : vector<128x32xf32>
    %93 = tpu.matmul %10, %92, %cst_51 {dimension_numbers = #tpu.dot_dimension_numbers<[1], [0], [0], [1], [0, 0, 1, 1], [], []>} : vector<128x9xf32>, vector<9x32xf32>, vector<128x32xf32> -> vector<128x32xf32>
    %c1_52 = arith.constant 1 : index
    %c0_53 = arith.constant 0 : index
    %c0_54 = arith.constant 0 : index
    %94 = vector.load %arg7[%c1_52, %c0_53, %c0_54] : memref<2x1x32xf32, #tpu.memory_space<vmem>>, vector<1x1x32xf32>
    %95 = vector.shape_cast %94 : vector<1x1x32xf32> to vector<1x32xf32>
    %96 = vector.broadcast %95 : vector<1x32xf32> to vector<128x32xf32>
    %97 = arith.addf %93, %96 : vector<128x32xf32>
    %98 = math.tanh %97 : vector<128x32xf32>
    %c1_55 = arith.constant 1 : index
    %c0_56 = arith.constant 0 : index
    %c0_57 = arith.constant 0 : index
    %99 = vector.load %arg8[%c1_55, %c0_56, %c0_57] : memref<2x32x32xf32, #tpu.memory_space<vmem>>, vector<1x32x32xf32>
    %100 = vector.shape_cast %99 : vector<1x32x32xf32> to vector<32x32xf32>
    %cst_58 = arith.constant dense<0.000000e+00> : vector<128x32xf32>
    %101 = tpu.matmul %98, %100, %cst_58 {dimension_numbers = #tpu.dot_dimension_numbers<[1], [0], [0], [1], [0, 0, 1, 1], [], []>} : vector<128x32xf32>, vector<32x32xf32>, vector<128x32xf32> -> vector<128x32xf32>
    %c1_59 = arith.constant 1 : index
    %c0_60 = arith.constant 0 : index
    %c0_61 = arith.constant 0 : index
    %102 = vector.load %arg9[%c1_59, %c0_60, %c0_61] : memref<2x1x32xf32, #tpu.memory_space<vmem>>, vector<1x1x32xf32>
    %103 = vector.shape_cast %102 : vector<1x1x32xf32> to vector<1x32xf32>
    %104 = vector.broadcast %103 : vector<1x32xf32> to vector<128x32xf32>
    %105 = arith.addf %101, %104 : vector<128x32xf32>
    %c1_62 = arith.constant 1 : index
    %c0_63 = arith.constant 0 : index
    %c0_64 = arith.constant 0 : index
    %106 = vector.load %arg5[%c1_62, %c0_63, %c0_64] : memref<2x32x32xf32, #tpu.memory_space<vmem>>, vector<1x32x32xf32>
    %107 = vector.shape_cast %106 : vector<1x32x32xf32> to vector<32x32xf32>
    %cst_65 = arith.constant dense<0.000000e+00> : vector<32x32xf32>
    %108 = tpu.matmul %90, %107, %cst_65 {dimension_numbers = #tpu.dot_dimension_numbers<[1], [0], [0], [1], [0, 0, 1, 1], [], []>} : vector<32x32xf32>, vector<32x32xf32>, vector<32x32xf32> -> vector<32x32xf32>
    %cst_66 = arith.constant dense<0.000000e+00> : vector<128x32xf32>
    %109 = tpu.matmul %11, %108, %cst_66 {dimension_numbers = #tpu.dot_dimension_numbers<[1], [0], [0], [1], [0, 0, 1, 1], [], []>} : vector<128x32xf32>, vector<32x32xf32>, vector<128x32xf32> -> vector<128x32xf32>
    %110 = arith.mulf %109, %105 : vector<128x32xf32>
    %c1_67 = arith.constant 1 : index
    %c0_68 = arith.constant 0 : index
    %c0_69 = arith.constant 0 : index
    %111 = vector.load %arg10[%c1_67, %c0_68, %c0_69] : memref<2x1x32xf32, #tpu.memory_space<vmem>>, vector<1x1x32xf32>
    %112 = vector.shape_cast %111 : vector<1x1x32xf32> to vector<1x32xf32>
    %113 = vector.broadcast %112 : vector<1x32xf32> to vector<128x32xf32>
    %114 = arith.mulf %110, %113 : vector<128x32xf32>
    %cst_70 = arith.constant dense<0.000000e+00> : vector<128xf32>
    %115 = vector.multi_reduction <add>, %114, %cst_70 [1] : vector<128x32xf32> to vector<128xf32>
    %116 = vector.shape_cast %115 : vector<128xf32> to vector<128x1xf32>
    %117 = vector.shape_cast %116 : vector<128x1xf32> to vector<1x128x1xf32>
    %cst_71 = arith.constant dense<0xFF800000> : vector<1xf32>
    %118 = vector.multi_reduction <maximumf>, %117, %cst_71 [1, 2] : vector<1x128x1xf32> to vector<1xf32>
    %119 = vector.shape_cast %118 : vector<1xf32> to vector<1x1x1xf32>
    %120 = vector.extract %119[0, 0, 0] : f32 from vector<1x1x1xf32>
    %121 = vector.broadcast %120 : f32 to vector<128x1xf32>
    %122 = arith.subf %116, %121 : vector<128x1xf32>
    %123 = math.exp %122 : vector<128x1xf32>
    %124 = vector.extract_strided_slice %123 {offsets = [0, 0], sizes = [32, 1], strides = [1, 1]} : vector<128x1xf32> to vector<32x1xf32>
    %125 = vector.extract_strided_slice %123 {offsets = [32, 0], sizes = [32, 1], strides = [1, 1]} : vector<128x1xf32> to vector<32x1xf32>
    %126 = vector.extract_strided_slice %123 {offsets = [64, 0], sizes = [32, 1], strides = [1, 1]} : vector<128x1xf32> to vector<32x1xf32>
    %127 = vector.extract_strided_slice %123 {offsets = [96, 0], sizes = [32, 1], strides = [1, 1]} : vector<128x1xf32> to vector<32x1xf32>
    %128 = arith.addf %124, %125 : vector<32x1xf32>
    %129 = arith.addf %128, %126 : vector<32x1xf32>
    %130 = arith.addf %129, %127 : vector<32x1xf32>
    %cst_72 = arith.constant 1.000000e+00 : f32
    %131 = vector.broadcast %cst_72 : f32 to vector<32x1xf32>
    %132 = arith.divf %131, %130 : vector<32x1xf32>
    %133 = arith.mulf %124, %132 : vector<32x1xf32>
    %134 = vector.extract_strided_slice %110 {offsets = [0, 0], sizes = [32, 32], strides = [1, 1]} : vector<128x32xf32> to vector<32x32xf32>
    %135 = vector.broadcast %133 : vector<32x1xf32> to vector<32x32xf32>
    %136 = arith.mulf %135, %134 : vector<32x32xf32>
    %137 = arith.mulf %125, %132 : vector<32x1xf32>
    %138 = vector.extract_strided_slice %110 {offsets = [32, 0], sizes = [32, 32], strides = [1, 1]} : vector<128x32xf32> to vector<32x32xf32>
    %139 = vector.broadcast %137 : vector<32x1xf32> to vector<32x32xf32>
    %140 = arith.mulf %139, %138 : vector<32x32xf32>
    %141 = arith.addf %136, %140 : vector<32x32xf32>
    %142 = arith.mulf %126, %132 : vector<32x1xf32>
    %143 = vector.extract_strided_slice %110 {offsets = [64, 0], sizes = [32, 32], strides = [1, 1]} : vector<128x32xf32> to vector<32x32xf32>
    %144 = vector.broadcast %142 : vector<32x1xf32> to vector<32x32xf32>
    %145 = arith.mulf %144, %143 : vector<32x32xf32>
    %146 = arith.addf %141, %145 : vector<32x32xf32>
    %147 = arith.mulf %127, %132 : vector<32x1xf32>
    %148 = vector.extract_strided_slice %110 {offsets = [96, 0], sizes = [32, 32], strides = [1, 1]} : vector<128x32xf32> to vector<32x32xf32>
    %149 = vector.broadcast %147 : vector<32x1xf32> to vector<32x32xf32>
    %150 = arith.mulf %149, %148 : vector<32x32xf32>
    %151 = arith.addf %146, %150 : vector<32x32xf32>
    %c1_73 = arith.constant 1 : index
    %c0_74 = arith.constant 0 : index
    %c0_75 = arith.constant 0 : index
    %152 = vector.load %arg11[%c1_73, %c0_74, %c0_75] : memref<2x32x32xf32, #tpu.memory_space<vmem>>, vector<1x32x32xf32>
    %153 = vector.shape_cast %152 : vector<1x32x32xf32> to vector<32x32xf32>
    %cst_76 = arith.constant dense<0.000000e+00> : vector<32x32xf32>
    %154 = tpu.matmul %151, %153, %cst_76 {dimension_numbers = #tpu.dot_dimension_numbers<[1], [0], [0], [1], [0, 0, 1, 1], [], []>} : vector<32x32xf32>, vector<32x32xf32>, vector<32x32xf32> -> vector<32x32xf32>
    %c1_77 = arith.constant 1 : index
    %c0_78 = arith.constant 0 : index
    %c0_79 = arith.constant 0 : index
    %155 = vector.load %arg12[%c1_77, %c0_78, %c0_79] : memref<2x1x32xf32, #tpu.memory_space<vmem>>, vector<1x1x32xf32>
    %156 = vector.shape_cast %155 : vector<1x1x32xf32> to vector<1x32xf32>
    %157 = vector.broadcast %156 : vector<1x32xf32> to vector<32x32xf32>
    %158 = arith.addf %154, %157 : vector<32x32xf32>
    %159 = math.tanh %158 : vector<32x32xf32>
    %c1_80 = arith.constant 1 : index
    %c0_81 = arith.constant 0 : index
    %c0_82 = arith.constant 0 : index
    %160 = vector.load %arg13[%c1_80, %c0_81, %c0_82] : memref<2x32x32xf32, #tpu.memory_space<vmem>>, vector<1x32x32xf32>
    %161 = vector.shape_cast %160 : vector<1x32x32xf32> to vector<32x32xf32>
    %cst_83 = arith.constant dense<0.000000e+00> : vector<32x32xf32>
    %162 = tpu.matmul %159, %161, %cst_83 {dimension_numbers = #tpu.dot_dimension_numbers<[1], [0], [0], [1], [0, 0, 1, 1], [], []>} : vector<32x32xf32>, vector<32x32xf32>, vector<32x32xf32> -> vector<32x32xf32>
    %163 = arith.addf %90, %162 : vector<32x32xf32>
    %c1_84 = arith.constant 1 : index
    %c0_85 = arith.constant 0 : index
    %c0_86 = arith.constant 0 : index
    %164 = vector.load %arg14[%c1_84, %c0_85, %c0_86] : memref<2x1x32xf32, #tpu.memory_space<vmem>>, vector<1x1x32xf32>
    %165 = vector.shape_cast %164 : vector<1x1x32xf32> to vector<1x32xf32>
    %166 = vector.broadcast %165 : vector<1x32xf32> to vector<32x32xf32>
    %167 = arith.addf %163, %166 : vector<32x32xf32>
    %cst_87 = arith.constant 0.000000e+00 : f32
    %168 = vector.broadcast %cst_87 : f32 to vector<32x32xf32>
    %169 = arith.maximumf %167, %168 : vector<32x32xf32>
    %c0_88 = arith.constant 0 : index
    %c0_89 = arith.constant 0 : index
    %170 = vector.load %arg15[%c0_88, %c0_89] : memref<32x32xf32, #tpu.memory_space<vmem>>, vector<32x32xf32>
    %cst_90 = arith.constant dense<0.000000e+00> : vector<32x32xf32>
    %171 = tpu.matmul %169, %170, %cst_90 {dimension_numbers = #tpu.dot_dimension_numbers<[1], [0], [0], [1], [0, 0, 1, 1], [], []>} : vector<32x32xf32>, vector<32x32xf32>, vector<32x32xf32> -> vector<32x32xf32>
    %c0_91 = arith.constant 0 : index
    %c0_92 = arith.constant 0 : index
    %172 = vector.load %arg16[%c0_91, %c0_92] : memref<1x32xf32, #tpu.memory_space<vmem>>, vector<1x32xf32>
    %173 = vector.broadcast %172 : vector<1x32xf32> to vector<32x32xf32>
    %174 = arith.mulf %171, %173 : vector<32x32xf32>
    %cst_93 = arith.constant dense<0.000000e+00> : vector<32xf32>
    %175 = vector.multi_reduction <add>, %174, %cst_93 [1] : vector<32x32xf32> to vector<32xf32>
    %176 = vector.shape_cast %175 : vector<32xf32> to vector<32x1xf32>
    %cst_94 = arith.constant 0.000000e+00 : f32
    %177 = vector.broadcast %cst_94 : f32 to vector<32x1xf32>
    %178 = arith.cmpf oge, %176, %177 : vector<32x1xf32>
    %cst_95 = arith.constant 2.000000e-01 : f32
    %179 = vector.broadcast %cst_95 : f32 to vector<32x1xf32>
    %180 = arith.mulf %179, %176 : vector<32x1xf32>
    %181 = arith.select %178, %176, %180 : vector<32x1xi1>, vector<32x1xf32>
    %182 = vector.shape_cast %181 : vector<32x1xf32> to vector<1x32x1xf32>
    %cst_96 = arith.constant dense<0xFF800000> : vector<1xf32>
    %183 = vector.multi_reduction <maximumf>, %182, %cst_96 [1, 2] : vector<1x32x1xf32> to vector<1xf32>
    %184 = vector.shape_cast %183 : vector<1xf32> to vector<1x1x1xf32>
    %185 = vector.extract %184[0, 0, 0] : f32 from vector<1x1x1xf32>
    %186 = vector.broadcast %185 : f32 to vector<32x1xf32>
    %187 = arith.subf %181, %186 : vector<32x1xf32>
    %188 = math.exp %187 : vector<32x1xf32>
    %189 = vector.broadcast %188 : vector<32x1xf32> to vector<32x32xf32>
    %190 = arith.mulf %171, %189 : vector<32x32xf32>
    %cst_97 = arith.constant dense<0.000000e+00> : vector<2x32xf32>
    %191 = tpu.matmul %12, %190, %cst_97 {dimension_numbers = #tpu.dot_dimension_numbers<[1], [0], [0], [1], [0, 0, 1, 1], [], []>} : vector<2x32xf32>, vector<32x32xf32>, vector<2x32xf32> -> vector<2x32xf32>
    %cst_98 = arith.constant dense<0.000000e+00> : vector<2x1xf32>
    %192 = tpu.matmul %12, %188, %cst_98 {dimension_numbers = #tpu.dot_dimension_numbers<[1], [0], [0], [1], [0, 0, 1, 1], [], []>} : vector<2x32xf32>, vector<32x1xf32>, vector<2x1xf32> -> vector<2x1xf32>
    %cst_99 = arith.constant 1.000000e+00 : f32
    %193 = vector.broadcast %cst_99 : f32 to vector<2x1xf32>
    %194 = arith.divf %193, %192 : vector<2x1xf32>
    %195 = vector.broadcast %194 : vector<2x1xf32> to vector<2x32xf32>
    %196 = arith.mulf %191, %195 : vector<2x32xf32>
    %c0_100 = arith.constant 0 : index
    %c0_101 = arith.constant 0 : index
    %197 = vector.load %arg17[%c0_100, %c0_101] : memref<32x16xf32, #tpu.memory_space<vmem>>, vector<32x16xf32>
    %cst_102 = arith.constant dense<0.000000e+00> : vector<2x16xf32>
    %198 = tpu.matmul %196, %197, %cst_102 {dimension_numbers = #tpu.dot_dimension_numbers<[1], [0], [0], [1], [0, 0, 1, 1], [], []>} : vector<2x32xf32>, vector<32x16xf32>, vector<2x16xf32> -> vector<2x16xf32>
    %c0_103 = arith.constant 0 : index
    %c0_104 = arith.constant 0 : index
    %199 = vector.load %arg18[%c0_103, %c0_104] : memref<1x16xf32, #tpu.memory_space<vmem>>, vector<1x16xf32>
    %200 = vector.broadcast %199 : vector<1x16xf32> to vector<2x16xf32>
    %201 = arith.addf %198, %200 : vector<2x16xf32>
    %c0_105 = arith.constant 0 : index
    %c0_106 = arith.constant 0 : index
    %202 = vector.load %arg19[%c0_105, %c0_106] : memref<16x5xf32, #tpu.memory_space<vmem>>, vector<16x5xf32>
    %cst_107 = arith.constant dense<0.000000e+00> : vector<2x5xf32>
    %203 = tpu.matmul %201, %202, %cst_107 {dimension_numbers = #tpu.dot_dimension_numbers<[1], [0], [0], [1], [0, 0, 1, 1], [], []>} : vector<2x16xf32>, vector<16x5xf32>, vector<2x5xf32> -> vector<2x5xf32>
    %c0_108 = arith.constant 0 : index
    %c0_109 = arith.constant 0 : index
    %204 = vector.load %arg20[%c0_108, %c0_109] : memref<1x5xf32, #tpu.memory_space<vmem>>, vector<1x5xf32>
    %205 = vector.broadcast %204 : vector<1x5xf32> to vector<2x5xf32>
    %206 = arith.addf %203, %205 : vector<2x5xf32>
    %cst_110 = arith.constant dense<0xFF800000> : vector<2xf32>
    %207 = vector.multi_reduction <maximumf>, %206, %cst_110 [1] : vector<2x5xf32> to vector<2xf32>
    %208 = vector.shape_cast %207 : vector<2xf32> to vector<2x1xf32>
    %209 = vector.broadcast %208 : vector<2x1xf32> to vector<2x5xf32>
    %210 = arith.subf %206, %209 : vector<2x5xf32>
    %211 = math.exp %210 : vector<2x5xf32>
    %cst_111 = arith.constant dense<0.000000e+00> : vector<2xf32>
    %212 = vector.multi_reduction <add>, %211, %cst_111 [1] : vector<2x5xf32> to vector<2xf32>
    %213 = vector.shape_cast %212 : vector<2xf32> to vector<2x1xf32>
    %214 = vector.broadcast %213 : vector<2x1xf32> to vector<2x5xf32>
    %215 = arith.divf %211, %214 : vector<2x5xf32>
    %c0_112 = arith.constant 0 : index
    %c0_113 = arith.constant 0 : index
    %216 = vector.load %arg21[%c0_112, %c0_113] : memref<2x5xf32, #tpu.memory_space<vmem>>, vector<2x5xf32>
    tpu.vector_store %arg21[%c0_112, %c0_113], %215 {strides = array<i32>} : memref<2x5xf32, #tpu.memory_space<vmem>>, vector<2x5xf32>,
    return
  }
}

</mosaic_0001>

<llo_original>
// kernel: eq.1
$region0: #{eq.1}
  %s0 = inlined_call_operand.vmem [shape: s32[4,2,16], index: 0, kind: input, shape index: {}]
  %s1 = inlined_call_operand.vmem [shape: s32[128], index: 1, kind: output, shape index: {}]
  $region1: #{eq.1} parent=0
    #allocation0 [shape = 'u8[4096]{0}', space=vmem, size = 0x1000, scoped, tag = 'scoped mem for output reshape']
    #allocation1 [shape = 'u8[16384]{0}', space=vmem, size = 0x4000, scoped, tag = 'scoped mem for input reshape']
    %s3 = sshllo.u32 0, 2
    %s4 = smul.addr 2, 3
    %s5 = scalar_lea.vmem %s0, %s4
    %v6 = vld [vmem:[%s5] sm:%s3]
    %s7 = scalar_lea.vmem [#allocation1], 24
    %8 = vst [vmem:[%s7] sm:%s3] %v6
    %s9 = smul.addr 2, 2
    %s10 = scalar_lea.vmem %s0, %s9
    %v11 = vld [vmem:[%s10] sm:%s3]
    %s12 = scalar_lea.vmem [#allocation1], 16
    %13 = vst [vmem:[%s12] sm:%s3] %v11
    %s14 = scalar_lea.vmem %s0, 2
    %v15 = vld [vmem:[%s14] sm:%s3]
    %s16 = scalar_lea.vmem [#allocation1], 8
    %17 = vst [vmem:[%s16] sm:%s3] %v15
    %v18 = vld [vmem:[%s0] sm:%s3]
    %19 = vst [vmem:[#allocation1] sm:%s3] %v18
    %v20 = vld [vmem:[#allocation1] sm:$0x1]
    %vm21 = vcmask 130048
    %22 = vst.msk [vmem:[#allocation0] sm:$0x1] %vm21, %v20
    %s23 = scalar_lea.vmem [#allocation1], 25
    %v24 = vld [vmem:[%s23] sm:$0x1]
    %25 = vrot.lane.b32.xlu0 %v24, 112
    %v26 = vpop.permute.xlu0 %25
    %vm27 = vcmask 1048448
    %28 = vst.msk [vmem:[#allocation0] sm:$0x1] %vm27, %v26
    %s29 = scalar_lea.vmem [#allocation1], 24
    %v30 = vld [vmem:[%s29] sm:$0x1]
    %31 = vrot.lane.b32.xlu0 %v30, 96
    %v32 = vpop.permute.xlu0 %31
    %vm33 = vcmask 917248
    %34 = vst.msk [vmem:[#allocation0] sm:$0x1] %vm33, %v32
    %s35 = scalar_lea.vmem [#allocation1], 17
    %v36 = vld [vmem:[%s35] sm:$0x1]
    %37 = vrot.lane.b32.xlu0 %v36, 80
    %v38 = vpop.permute.xlu0 %37
    %vm39 = vcmask 786048
    %40 = vst.msk [vmem:[#allocation0] sm:$0x1] %vm39, %v38
    %s41 = scalar_lea.vmem [#allocation1], 16
    %v42 = vld [vmem:[%s41] sm:$0x1]
    %43 = vrot.lane.b32.xlu0 %v42, 64
    %v44 = vpop.permute.xlu0 %43
    %vm45 = vcmask 654848
    %46 = vst.msk [vmem:[#allocation0] sm:$0x1] %vm45, %v44
    %s47 = scalar_lea.vmem [#allocation1], 9
    %v48 = vld [vmem:[%s47] sm:$0x1]
    %49 = vrot.lane.b32.xlu0 %v48, 48
    %v50 = vpop.permute.xlu0 %49
    %vm51 = vcmask 523648
    %52 = vst.msk [vmem:[#allocation0] sm:$0x1] %vm51, %v50
    %s53 = scalar_lea.vmem [#allocation1], 8
    %v54 = vld [vmem:[%s53] sm:$0x1]
    %55 = vrot.lane.b32.xlu0 %v54, 32
    %v56 = vpop.permute.xlu0 %55
    %vm57 = vcmask 392448
    %58 = vst.msk [vmem:[#allocation0] sm:$0x1] %vm57, %v56
    %s59 = scalar_lea.vmem [#allocation1], 1
    %v60 = vld [vmem:[%s59] sm:$0x1]
    %61 = vrot.lane.b32.xlu0 %v60, 16
    %v62 = vpop.permute.xlu0 %61
    %vm63 = vcmask 261248
    %64 = vst.msk [vmem:[#allocation0] sm:$0x1] %vm63, %v62
    %s66 = sshllo.u32 0, 1
    %v68 = vld [vmem:[#allocation0] sm:%s66]
    %s69 = sshllo.u32 0, 1
    %70 = vst [vmem:[%s1] sm:%s69] %v68

// kernel: graph_vamp_forward.1
$region0: #{graph_vamp_forward.1}
  #allocation0 [shape = 'u32[]', space=smem, size = 0x4, offset = 0x4, fixed_abs, tag = 'smem constant byte address 0x4 - core index']
  #allocation1 [shape = 'u32[144,128]{1,0:T(1,128)}', space=vmem, size = 0x12000, scoped, tag = 'internal scratch']
  %s0 = inlined_call_operand.vmem [shape: f32[128,1], index: 0, kind: input, shape index: {}]
  %s1 = inlined_call_operand.vmem [shape: f32[128,32], index: 1, kind: input, shape index: {}]
  %s2 = inlined_call_operand.vmem [shape: f32[2,32], index: 2, kind: input, shape index: {}]
  %s3 = inlined_call_operand.vmem [shape: f32[1,9], index: 3, kind: input, shape index: {}]
  %s4 = inlined_call_operand.vmem [shape: f32[32,32], index: 4, kind: input, shape index: {}]
  %s5 = inlined_call_operand.vmem [shape: f32[2,32,32], index: 5, kind: input, shape index: {}]
  %s6 = inlined_call_operand.vmem [shape: f32[2,9,32], index: 6, kind: input, shape index: {}]
  %s7 = inlined_call_operand.vmem [shape: f32[2,1,32], index: 7, kind: input, shape index: {}]
  %s8 = inlined_call_operand.vmem [shape: f32[2,32,32], index: 8, kind: input, shape index: {}]
  %s9 = inlined_call_operand.vmem [shape: f32[2,1,32], index: 9, kind: input, shape index: {}]
  %s10 = inlined_call_operand.vmem [shape: f32[2,1,32], index: 10, kind: input, shape index: {}]
  %s11 = inlined_call_operand.vmem [shape: f32[2,32,32], index: 11, kind: input, shape index: {}]
  %s12 = inlined_call_operand.vmem [shape: f32[2,1,32], index: 12, kind: input, shape index: {}]
  %s13 = inlined_call_operand.vmem [shape: f32[2,32,32], index: 13, kind: input, shape index: {}]
  %s14 = inlined_call_operand.vmem [shape: f32[2,1,32], index: 14, kind: input, shape index: {}]
  %s15 = inlined_call_operand.vmem [shape: f32[32,32], index: 15, kind: input, shape index: {}]
  %s16 = inlined_call_operand.vmem [shape: f32[1,32], index: 16, kind: input, shape index: {}]
  %s17 = inlined_call_operand.vmem [shape: f32[32,16], index: 17, kind: input, shape index: {}]
  %s18 = inlined_call_operand.vmem [shape: f32[1,16], index: 18, kind: input, shape index: {}]
  %s19 = inlined_call_operand.vmem [shape: f32[16,5], index: 19, kind: input, shape index: {}]
  %s20 = inlined_call_operand.vmem [shape: f32[1,5], index: 20, kind: input, shape index: {}]
  %s21 = inlined_call_operand.hbm [shape: f32[2,5], index: 21, kind: output, shape index: {}]
  %s22 = sld [smem:[#allocation0]]
  $region94: #{graph_vamp_forward.1} parent=0
    _
  %s24 = ssub.s32 1, %s22
  %s25 = scalar_select 0, %s24, %s22
  $region1: #{graph_vamp_forward.1} parent=0
    #allocation2 [shape = 'u8[1024]{0}', space=vmem, size = 0x400, scoped, tag = 'output window, operand 0, single buffered']
    #allocation3 [shape = 's32[1]{0}', space=sflag, size = 0x4, scoped, tag = 'scoped memory for graph_vamp_forward.1']
    %26 = vsyncpa [#allocation3], 0
    // Predicated region
    $region2: #{graph_vamp_forward.1} parent=1 // pred_check
      _
    $region3: #{graph_vamp_forward.1} parent=1 // pred_check_branch
      %28 = sbr.rel (0) target = $region5
    $region4: #{graph_vamp_forward.1} parent=1 // pred_region
      _
    $region5: #{graph_vamp_forward.1} parent=1 // pred_fallthru
      _
    // Predicated region
    $region6: #{graph_vamp_forward.1} parent=1 // pred_check
      _
    $region7: #{graph_vamp_forward.1} parent=1 // pred_check_branch
      %30 = sbr.rel (0) target = $region9
    $region8: #{graph_vamp_forward.1} parent=1 // pred_region
      _
    $region9: #{graph_vamp_forward.1} parent=1 // pred_fallthru
      _
    // Predicated region
    $region10: #{graph_vamp_forward.1} parent=1 // pred_check
      _
    $region11: #{graph_vamp_forward.1} parent=1 // pred_check_branch
      %32 = sbr.rel (0) target = $region13
    $region12: #{graph_vamp_forward.1} parent=1 // pred_region
      _
    $region13: #{graph_vamp_forward.1} parent=1 // pred_fallthru
      _
    // Predicated region
    $region14: #{graph_vamp_forward.1} parent=1 // pred_check
      _
    $region15: #{graph_vamp_forward.1} parent=1 // pred_check_branch
      %34 = sbr.rel (0) target = $region17
    $region16: #{graph_vamp_forward.1} parent=1 // pred_region
      _
    $region17: #{graph_vamp_forward.1} parent=1 // pred_fallthru
      _
    // Predicated region
    $region18: #{graph_vamp_forward.1} parent=1 // pred_check
      _
    $region19: #{graph_vamp_forward.1} parent=1 // pred_check_branch
      %36 = sbr.rel (0) target = $region21
    $region20: #{graph_vamp_forward.1} parent=1 // pred_region
      _
    $region21: #{graph_vamp_forward.1} parent=1 // pred_fallthru
      _
    // Predicated region
    $region22: #{graph_vamp_forward.1} parent=1 // pred_check
      _
    $region23: #{graph_vamp_forward.1} parent=1 // pred_check_branch
      %38 = sbr.rel (0) target = $region25
    $region24: #{graph_vamp_forward.1} parent=1 // pred_region
      _
    $region25: #{graph_vamp_forward.1} parent=1 // pred_fallthru
      _
    // Predicated region
    $region26: #{graph_vamp_forward.1} parent=1 // pred_check
      _
    $region27: #{graph_vamp_forward.1} parent=1 // pred_check_branch
      %40 = sbr.rel (0) target = $region29
    $region28: #{graph_vamp_forward.1} parent=1 // pred_region
      _
    $region29: #{graph_vamp_forward.1} parent=1 // pred_fallthru
      _
    // Predicated region
    $region30: #{graph_vamp_forward.1} parent=1 // pred_check
      _
    $region31: #{graph_vamp_forward.1} parent=1 // pred_check_branch
      %42 = sbr.rel (0) target = $region33
    $region32: #{graph_vamp_forward.1} parent=1 // pred_region
      _
    $region33: #{graph_vamp_forward.1} parent=1 // pred_fallthru
      _
    // Predicated region
    $region34: #{graph_vamp_forward.1} parent=1 // pred_check
      _
    $region35: #{graph_vamp_forward.1} parent=1 // pred_check_branch
      %44 = sbr.rel (0) target = $region37
    $region36: #{graph_vamp_forward.1} parent=1 // pred_region
      _
    $region37: #{graph_vamp_forward.1} parent=1 // pred_fallthru
      _
    // Predicated region
    $region38: #{graph_vamp_forward.1} parent=1 // pred_check
      _
    $region39: #{graph_vamp_forward.1} parent=1 // pred_check_branch
      %46 = sbr.rel (0) target = $region41
    $region40: #{graph_vamp_forward.1} parent=1 // pred_region
      _
    $region41: #{graph_vamp_forward.1} parent=1 // pred_fallthru
      _
    // Predicated region
    $region42: #{graph_vamp_forward.1} parent=1 // pred_check
      _
    $region43: #{graph_vamp_forward.1} parent=1 // pred_check_branch
      %48 = sbr.rel (0) target = $region45
    $region44: #{graph_vamp_forward.1} parent=1 // pred_region
      _
    $region45: #{graph_vamp_forward.1} parent=1 // pred_fallthru
      _
    // Predicated region
    $region46: #{graph_vamp_forward.1} parent=1 // pred_check
      _
    $region47: #{graph_vamp_forward.1} parent=1 // pred_check_branch
      %50 = sbr.rel (0) target = $region49
    $region48: #{graph_vamp_forward.1} parent=1 // pred_region
      _
    $region49: #{graph_vamp_forward.1} parent=1 // pred_fallthru
      _
    // Predicated region
    $region50: #{graph_vamp_forward.1} parent=1 // pred_check
      _
    $region51: #{graph_vamp_forward.1} parent=1 // pred_check_branch
      %52 = sbr.rel (0) target = $region53
    $region52: #{graph_vamp_forward.1} parent=1 // pred_region
      _
    $region53: #{graph_vamp_forward.1} parent=1 // pred_fallthru
      _
    // Predicated region
    $region54: #{graph_vamp_forward.1} parent=1 // pred_check
      _
    $region55: #{graph_vamp_forward.1} parent=1 // pred_check_branch
      %54 = sbr.rel (0) target = $region57
    $region56: #{graph_vamp_forward.1} parent=1 // pred_region
      _
    $region57: #{graph_vamp_forward.1} parent=1 // pred_fallthru
      _
    // Predicated region
    $region58: #{graph_vamp_forward.1} parent=1 // pred_check
      _
    $region59: #{graph_vamp_forward.1} parent=1 // pred_check_branch
      %56 = sbr.rel (0) target = $region61
    $region60: #{graph_vamp_forward.1} parent=1 // pred_region
      _
    $region61: #{graph_vamp_forward.1} parent=1 // pred_fallthru
      _
    // Predicated region
    $region62: #{graph_vamp_forward.1} parent=1 // pred_check
      _
    $region63: #{graph_vamp_forward.1} parent=1 // pred_check_branch
      %58 = sbr.rel (0) target = $region65
    $region64: #{graph_vamp_forward.1} parent=1 // pred_region
      _
    $region65: #{graph_vamp_forward.1} parent=1 // pred_fallthru
      _
    // Predicated region
    $region66: #{graph_vamp_forward.1} parent=1 // pred_check
      _
    $region67: #{graph_vamp_forward.1} parent=1 // pred_check_branch
      %60 = sbr.rel (0) target = $region69
    $region68: #{graph_vamp_forward.1} parent=1 // pred_region
      _
    $region69: #{graph_vamp_forward.1} parent=1 // pred_fallthru
      _
    // Predicated region
    $region70: #{graph_vamp_forward.1} parent=1 // pred_check
      _
    $region71: #{graph_vamp_forward.1} parent=1 // pred_check_branch
      %62 = sbr.rel (0) target = $region73
    $region72: #{graph_vamp_forward.1} parent=1 // pred_region
      _
    $region73: #{graph_vamp_forward.1} parent=1 // pred_fallthru
      _
    // Predicated region
    $region74: #{graph_vamp_forward.1} parent=1 // pred_check
      _
    $region75: #{graph_vamp_forward.1} parent=1 // pred_check_branch
      %64 = sbr.rel (0) target = $region77
    $region76: #{graph_vamp_forward.1} parent=1 // pred_region
      _
    $region77: #{graph_vamp_forward.1} parent=1 // pred_fallthru
      _
    // Predicated region
    $region78: #{graph_vamp_forward.1} parent=1 // pred_check
      _
    $region79: #{graph_vamp_forward.1} parent=1 // pred_check_branch
      %66 = sbr.rel (0) target = $region81
    $region80: #{graph_vamp_forward.1} parent=1 // pred_region
      _
    $region81: #{graph_vamp_forward.1} parent=1 // pred_fallthru
      _
    // Predicated region
    $region82: #{graph_vamp_forward.1} parent=1 // pred_check
      _
    $region83: #{graph_vamp_forward.1} parent=1 // pred_check_branch
      %68 = sbr.rel (0) target = $region85
    $region84: #{graph_vamp_forward.1} parent=1 // pred_region
      _
    $region85: #{graph_vamp_forward.1} parent=1 // pred_fallthru
      _
    %v69 = vld [vmem:[%s3] sm:$0x1]
    %v70 = vld [vmem:[%s0] sm:$0xff]
    %v71 = vld [vmem:[%s0 + $0x8] sm:$0xff]
    %v72 = vld [vmem:[%s0 + $0x10] sm:$0xff]
    %v73 = vld [vmem:[%s0 + $0x18] sm:$0xff]
    %v74 = vld [vmem:[%s0 + $0x20] sm:$0xff]
    %v75 = vld [vmem:[%s0 + $0x28] sm:$0xff]
    %v76 = vld [vmem:[%s0 + $0x30] sm:$0xff]
    %v77 = vld [vmem:[%s0 + $0x38] sm:$0xff]
    %v78 = vld [vmem:[%s0 + $0x40] sm:$0xff]
    %v79 = vld [vmem:[%s0 + $0x48] sm:$0xff]
    %v80 = vld [vmem:[%s0 + $0x50] sm:$0xff]
    %v81 = vld [vmem:[%s0 + $0x58] sm:$0xff]
    %v82 = vld [vmem:[%s0 + $0x60] sm:$0xff]
    %v83 = vld [vmem:[%s0 + $0x68] sm:$0xff]
    %v84 = vld [vmem:[%s0 + $0x70] sm:$0xff]
    %v85 = vld [vmem:[%s0 + $0x78] sm:$0xff]
    %87 = vset.pattern.permute.xlu0 0
    %88 = vperm.xlu0 %87, %v70
    %v89 = vpop.permute.xlu0 %88
    %92 = vset.pattern.permute.xlu0 0
    %93 = vperm.xlu0 %92, %v71
    %v94 = vpop.permute.xlu0 %93
    %97 = vset.pattern.permute.xlu0 0
    %98 = vperm.xlu0 %97, %v72
    %v99 = vpop.permute.xlu0 %98
    %102 = vset.pattern.permute.xlu0 0
    %103 = vperm.xlu0 %102, %v73
    %v104 = vpop.permute.xlu0 %103
    %107 = vset.pattern.permute.xlu0 0
    %108 = vperm.xlu0 %107, %v74
    %v109 = vpop.permute.xlu0 %108
    %112 = vset.pattern.permute.xlu0 0
    %113 = vperm.xlu0 %112, %v75
    %v114 = vpop.permute.xlu0 %113
    %117 = vset.pattern.permute.xlu0 0
    %118 = vperm.xlu0 %117, %v76
    %v119 = vpop.permute.xlu0 %118
    %122 = vset.pattern.permute.xlu0 0
    %123 = vperm.xlu0 %122, %v77
    %v124 = vpop.permute.xlu0 %123
    %127 = vset.pattern.permute.xlu0 0
    %128 = vperm.xlu0 %127, %v78
    %v129 = vpop.permute.xlu0 %128
    %132 = vset.pattern.permute.xlu0 0
    %133 = vperm.xlu0 %132, %v79
    %v134 = vpop.permute.xlu0 %133
    %137 = vset.pattern.permute.xlu0 0
    %138 = vperm.xlu0 %137, %v80
    %v139 = vpop.permute.xlu0 %138
    %142 = vset.pattern.permute.xlu0 0
    %143 = vperm.xlu0 %142, %v81
    %v144 = vpop.permute.xlu0 %143
    %147 = vset.pattern.permute.xlu0 0
    %148 = vperm.xlu0 %147, %v82
    %v149 = vpop.permute.xlu0 %148
    %152 = vset.pattern.permute.xlu0 0
    %153 = vperm.xlu0 %152, %v83
    %v154 = vpop.permute.xlu0 %153
    %157 = vset.pattern.permute.xlu0 0
    %158 = vperm.xlu0 %157, %v84
    %v159 = vpop.permute.xlu0 %158
    %162 = vset.pattern.permute.xlu0 0
    %163 = vperm.xlu0 %162, %v85
    %v164 = vpop.permute.xlu0 %163
    %v167 = vlaneseq
    %v168 = vshrl.u32 %v167, 7
    %v169 = vsub.s32 0, %v168
    %v170 = vrot.slane %v69, %v169
    %v172 = vsub.f32 %v89, %v170
    %v173 = vsub.f32 %v94, %v170
    %v174 = vsub.f32 %v99, %v170
    %v175 = vsub.f32 %v104, %v170
    %v176 = vsub.f32 %v109, %v170
    %v177 = vsub.f32 %v114, %v170
    %v178 = vsub.f32 %v119, %v170
    %v179 = vsub.f32 %v124, %v170
    %v180 = vsub.f32 %v129, %v170
    %v181 = vsub.f32 %v134, %v170
    %v182 = vsub.f32 %v139, %v170
    %v183 = vsub.f32 %v144, %v170
    %v184 = vsub.f32 %v149, %v170
    %v185 = vsub.f32 %v154, %v170
    %v186 = vsub.f32 %v159, %v170
    %v187 = vsub.f32 %v164, %v170
    %v188 = vmul.f32 %v172, %v172
    %v189 = vmul.f32 %v173, %v173
    %v190 = vmul.f32 %v174, %v174
    %v191 = vmul.f32 %v175, %v175
    %v192 = vmul.f32 %v176, %v176
    %v193 = vmul.f32 %v177, %v177
    %v194 = vmul.f32 %v178, %v178
    %v195 = vmul.f32 %v179, %v179
    %v196 = vmul.f32 %v180, %v180
    %v197 = vmul.f32 %v181, %v181
    %v198 = vmul.f32 %v182, %v182
    %v199 = vmul.f32 %v183, %v183
    %v200 = vmul.f32 %v184, %v184
    %v201 = vmul.f32 %v185, %v185
    %v202 = vmul.f32 %v186, %v186
    %v203 = vmul.f32 %v187, %v187
    %v204 = vsub.f32 0.0, %v188
    %v205 = vsub.f32 0.0, %v189
    %v206 = vsub.f32 0.0, %v190
    %v207 = vsub.f32 0.0, %v191
    %v208 = vsub.f32 0.0, %v192
    %v209 = vsub.f32 0.0, %v193
    %v210 = vsub.f32 0.0, %v194
    %v211 = vsub.f32 0.0, %v195
    %v212 = vsub.f32 0.0, %v196
    %v213 = vsub.f32 0.0, %v197
    %v214 = vsub.f32 0.0, %v198
    %v215 = vsub.f32 0.0, %v199
    %v216 = vsub.f32 0.0, %v200
    %v217 = vsub.f32 0.0, %v201
    %v218 = vsub.f32 0.0, %v202
    %v219 = vsub.f32 0.0, %v203
    %v220 = vmul.f32 %v204, 4.0
    %v221 = vmul.f32 %v205, 4.0
    %v222 = vmul.f32 %v206, 4.0
    %v223 = vmul.f32 %v207, 4.0
    %v224 = vmul.f32 %v208, 4.0
    %v225 = vmul.f32 %v209, 4.0
    %v226 = vmul.f32 %v210, 4.0
    %v227 = vmul.f32 %v211, 4.0
    %v228 = vmul.f32 %v212, 4.0
    %v229 = vmul.f32 %v213, 4.0
    %v230 = vmul.f32 %v214, 4.0
    %v231 = vmul.f32 %v215, 4.0
    %v232 = vmul.f32 %v216, 4.0
    %v233 = vmul.f32 %v217, 4.0
    %v234 = vmul.f32 %v218, 4.0
    %v235 = vmul.f32 %v219, 4.0
    %v236 = vmul.f32 %v220, 1.442695
    %v237 = vpow.pop %v236
    %v238 = vmul.f32 %v221, 1.442695
    %v239 = vpow.pop %v238
    %v240 = vmul.f32 %v222, 1.442695
    %v241 = vpow.pop %v240
    %v242 = vmul.f32 %v223, 1.442695
    %v243 = vpow.pop %v242
    %v244 = vmul.f32 %v224, 1.442695
    %v245 = vpow.pop %v244
    %v246 = vmul.f32 %v225, 1.442695
    %v247 = vpow.pop %v246
    %v248 = vmul.f32 %v226, 1.442695
    %v249 = vpow.pop %v248
    %v250 = vmul.f32 %v227, 1.442695
    %v251 = vpow.pop %v250
    %v252 = vmul.f32 %v228, 1.442695
    %v253 = vpow.pop %v252
    %v254 = vmul.f32 %v229, 1.442695
    %v255 = vpow.pop %v254
    %v256 = vmul.f32 %v230, 1.442695
    %v257 = vpow.pop %v256
    %v258 = vmul.f32 %v231, 1.442695
    %v259 = vpow.pop %v258
    %v260 = vmul.f32 %v232, 1.442695
    %v261 = vpow.pop %v260
    %v262 = vmul.f32 %v233, 1.442695
    %v263 = vpow.pop %v262
    %v264 = vmul.f32 %v234, 1.442695
    %v265 = vpow.pop %v264
    %v266 = vmul.f32 %v235, 1.442695
    %v267 = vpow.pop %v266
    %v268 = vld [vmem:[%s1] sm:$0xff]
    %v269 = vld [vmem:[%s1 + $0x8] sm:$0xff]
    %v270 = vld [vmem:[%s1 + $0x10] sm:$0xff]
    %v271 = vld [vmem:[%s1 + $0x18] sm:$0xff]
    %v272 = vld [vmem:[%s1 + $0x20] sm:$0xff]
    %v273 = vld [vmem:[%s1 + $0x28] sm:$0xff]
    %v274 = vld [vmem:[%s1 + $0x30] sm:$0xff]
    %v275 = vld [vmem:[%s1 + $0x38] sm:$0xff]
    %v276 = vld [vmem:[%s1 + $0x40] sm:$0xff]
    %v277 = vld [vmem:[%s1 + $0x48] sm:$0xff]
    %v278 = vld [vmem:[%s1 + $0x50] sm:$0xff]
    %v279 = vld [vmem:[%s1 + $0x58] sm:$0xff]
    %v280 = vld [vmem:[%s1 + $0x60] sm:$0xff]
    %v281 = vld [vmem:[%s1 + $0x68] sm:$0xff]
    %v282 = vld [vmem:[%s1 + $0x70] sm:$0xff]
    %v283 = vld [vmem:[%s1 + $0x78] sm:$0xff]
    %v284 = vld [vmem:[%s2] sm:$0x3]
    %v285 = vld [vmem:[%s4] sm:$0xff]
    %v286 = vld [vmem:[%s4 + $0x8] sm:$0xff]
    %v287 = vld [vmem:[%s4 + $0x10] sm:$0xff]
    %v288 = vld [vmem:[%s4 + $0x18] sm:$0xff]
    %v289 = vld [vmem:[%s6] sm:$0xff]
    %v290 = vld [vmem:[%s6 + $0x8] sm:$0x1]
    %v291 = vld [vmem:[%s7] sm:$0x1]
    %v293 = vlaneseq
    %v294 = vshrl.u32 %v293, 7
    %v295 = vsub.s32 0, %v294
    %v296 = vrot.slane %v291, %v295
    %vm298 = vcmask 72704
    %v300 = vsel %vm298, %v237, 0
    %v303 = vsel %vm298, %v239, 0
    %v306 = vsel %vm298, %v241, 0
    %v309 = vsel %vm298, %v243, 0
    %v312 = vsel %vm298, %v245, 0
    %v315 = vsel %vm298, %v247, 0
    %v318 = vsel %vm298, %v249, 0
    %v321 = vsel %vm298, %v251, 0
    %v324 = vsel %vm298, %v253, 0
    %v327 = vsel %vm298, %v255, 0
    %v330 = vsel %vm298, %v257, 0
    %v333 = vsel %vm298, %v259, 0
    %v336 = vsel %vm298, %v261, 0
    %v339 = vsel %vm298, %v263, 0
    %v342 = vsel %vm298, %v265, 0
    %v345 = vsel %vm298, %v267, 0
    %vm347 = vcmask 1040384
    %v349 = vsel %vm347, %v290, 0
    %351 = vmatprep.subr.mxu0 0.0
    %352 = vmatpush1.msra.mxu0 %v289
    %353 = vmatprep.subr.mxu0 0.0
    %354 = vmatpush1.msra.mxu0 %v349
    %355 = vmatprep.subr.mxu0 0.0
    %356 = vmatpush1.msra.mxu0 0.0
    %357 = vmatprep.subr.mxu0 0.0
    %358 = vmatpush1.msra.mxu0 0.0
    %359 = vmatprep.subr.mxu0 0.0
    %360 = vmatpush1.msra.mxu0 0.0
    %361 = vmatprep.subr.mxu0 0.0
    %362 = vmatpush1.msra.mxu0 0.0
    %363 = vmatprep.subr.mxu0 0.0
    %364 = vmatpush1.msra.mxu0 0.0
    %365 = vmatprep.subr.mxu0 0.0
    %366 = vmatpush1.msra.mxu0 0.0
    %367 = vmatprep.subr.mxu0 0.0
    %368 = vmatpush1.msra.mxu0 0.0
    %369 = vmatprep.subr.mxu0 0.0
    %370 = vmatpush1.msra.mxu0 0.0
    %371 = vmatprep.subr.mxu0 0.0
    %372 = vmatpush1.msra.mxu0 0.0
    %373 = vmatprep.subr.mxu0 0.0
    %374 = vmatpush1.msra.mxu0 0.0
    %375 = vmatprep.subr.mxu0 0.0
    %376 = vmatpush1.msra.mxu0 0.0
    %377 = vmatprep.subr.mxu0 0.0
    %378 = vmatpush1.msra.mxu0 0.0
    %379 = vmatprep.subr.mxu0 0.0
    %380 = vmatpush1.msra.mxu0 0.0
    %381 = vmatprep.subr.mxu0 0.0
    %382 = vmatpush1.msra.mxu0 0.0
    %383 = vmatprep.subr.mxu0 0.0
    %384 = vmatpush1.msra.mxu0 0.0
    %385 = vmatprep.subr.mxu0 0.0
    %386 = vmatpush1.msra.mxu0 0.0
    %387 = vmatprep.subr.mxu0 0.0
    %388 = vmatpush1.msra.mxu0 0.0
    %389 = vmatprep.subr.mxu0 0.0
    %390 = vmatpush1.msra.mxu0 0.0
    %391 = vmatprep.subr.mxu0 0.0
    %392 = vmatpush1.msra.mxu0 0.0
    %393 = vmatprep.subr.mxu0 0.0
    %394 = vmatpush1.msra.mxu0 0.0
    %395 = vmatprep.subr.mxu0 0.0
    %396 = vmatpush1.msra.mxu0 0.0
    %397 = vmatprep.subr.mxu0 0.0
    %398 = vmatpush1.msra.mxu0 0.0
    %399 = vmatprep.subr.mxu0 0.0
    %400 = vmatpush1.msra.mxu0 0.0
    %401 = vmatprep.subr.mxu0 0.0
    %402 = vmatpush1.msra.mxu0 0.0
    %403 = vmatprep.subr.mxu0 0.0
    %404 = vmatpush1.msra.mxu0 0.0
    %405 = vmatprep.subr.mxu0 0.0
    %406 = vmatpush1.msra.mxu0 0.0
    %407 = vmatprep.subr.mxu0 0.0
    %408 = vmatpush1.msra.mxu0 0.0
    %409 = vmatprep.subr.mxu0 0.0
    %410 = vmatpush1.msra.mxu0 0.0
    %411 = vmatprep.subr.mxu0 0.0
    %412 = vmatpush1.msra.mxu0 0.0
    %413 = vmatprep.subr.mxu0 0.0
    %414 = vmatpush1.msra.mxu0 0.0
    %415 = vmatprep.mubr.f32.mxu0 0.0
    %416 = vmatmul.mubr.f32.gmra.mrb[0].mxu0 %v300
    %v417 = vpop.f32.mrb[0].mxu0
    %v418 = vadd.f32 %v296, %v417
    %v419 = vpop.f32.mrb[0].mxu0
    %420 = vmatprep.mubr.f32.mxu0 0.0
    %421 = vmatmul.mubr.f32.gmra.mrb[0].mxu0 %v303
    %v422 = vpop.f32.mrb[0].mxu0
    %v423 = vadd.f32 %v296, %v422
    %v424 = vpop.f32.mrb[0].mxu0
    %425 = vmatprep.mubr.f32.mxu0 0.0
    %426 = vmatmul.mubr.f32.gmra.mrb[0].mxu0 %v306
    %v427 = vpop.f32.mrb[0].mxu0
    %v428 = vadd.f32 %v296, %v427
    %v429 = vpop.f32.mrb[0].mxu0
    %430 = vmatprep.mubr.f32.mxu0 0.0
    %431 = vmatmul.mubr.f32.gmra.mrb[0].mxu0 %v309
    %v432 = vpop.f32.mrb[0].mxu0
    %v433 = vadd.f32 %v296, %v432
    %v434 = vpop.f32.mrb[0].mxu0
    %435 = vmatprep.mubr.f32.mxu0 0.0
    %436 = vmatmul.mubr.f32.gmra.mrb[0].mxu0 %v312
    %v437 = vpop.f32.mrb[0].mxu0
    %v438 = vadd.f32 %v296, %v437
    %v439 = vpop.f32.mrb[0].mxu0
    %440 = vmatprep.mubr.f32.mxu0 0.0
    %441 = vmatmul.mubr.f32.gmra.mrb[0].mxu0 %v315
    %v442 = vpop.f32.mrb[0].mxu0
    %v443 = vadd.f32 %v296, %v442
    %v444 = vpop.f32.mrb[0].mxu0
    %445 = vmatprep.mubr.f32.mxu0 0.0
    %446 = vmatmul.mubr.f32.gmra.mrb[0].mxu0 %v318
    %v447 = vpop.f32.mrb[0].mxu0
    %v448 = vadd.f32 %v296, %v447
    %v449 = vpop.f32.mrb[0].mxu0
    %450 = vmatprep.mubr.f32.mxu0 0.0
    %451 = vmatmul.mubr.f32.gmra.mrb[0].mxu0 %v321
    %v452 = vpop.f32.mrb[0].mxu0
    %v453 = vadd.f32 %v296, %v452
    %v454 = vpop.f32.mrb[0].mxu0
    %455 = vmatprep.mubr.f32.mxu0 0.0
    %456 = vmatmul.mubr.f32.gmra.mrb[0].mxu0 %v324
    %v457 = vpop.f32.mrb[0].mxu0
    %v458 = vadd.f32 %v296, %v457
    %v459 = vpop.f32.mrb[0].mxu0
    %460 = vmatprep.mubr.f32.mxu0 0.0
    %461 = vmatmul.mubr.f32.gmra.mrb[0].mxu0 %v327
    %v462 = vpop.f32.mrb[0].mxu0
    %v463 = vadd.f32 %v296, %v462
    %v464 = vpop.f32.mrb[0].mxu0
    %465 = vmatprep.mubr.f32.mxu0 0.0
    %466 = vmatmul.mubr.f32.gmra.mrb[0].mxu0 %v330
    %v467 = vpop.f32.mrb[0].mxu0
    %v468 = vadd.f32 %v296, %v467
    %v469 = vpop.f32.mrb[0].mxu0
    %470 = vmatprep.mubr.f32.mxu0 0.0
    %471 = vmatmul.mubr.f32.gmra.mrb[0].mxu0 %v333
    %v472 = vpop.f32.mrb[0].mxu0
    %v473 = vadd.f32 %v296, %v472
    %v474 = vpop.f32.mrb[0].mxu0
    %475 = vmatprep.mubr.f32.mxu0 0.0
    %476 = vmatmul.mubr.f32.gmra.mrb[0].mxu0 %v336
    %v477 = vpop.f32.mrb[0].mxu0
    %v478 = vadd.f32 %v296, %v477
    %v479 = vpop.f32.mrb[0].mxu0
    %480 = vmatprep.mubr.f32.mxu0 0.0
    %481 = vmatmul.mubr.f32.gmra.mrb[0].mxu0 %v339
    %v482 = vpop.f32.mrb[0].mxu0
    %v483 = vadd.f32 %v296, %v482
    %v484 = vpop.f32.mrb[0].mxu0
    %485 = vmatprep.mubr.f32.mxu0 0.0
    %486 = vmatmul.mubr.f32.gmra.mrb[0].mxu0 %v342
    %v487 = vpop.f32.mrb[0].mxu0
    %v488 = vadd.f32 %v296, %v487
    %v489 = vpop.f32.mrb[0].mxu0
    %490 = vmatprep.mubr.f32.mxu0 0.0
    %491 = vmatmul.mubr.f32.gmra.mrb[0].mxu0 %v345
    %v492 = vpop.f32.mrb[0].mxu0
    %v493 = vadd.f32 %v296, %v492
    %v494 = vpop.f32.mrb[0].mxu0
    %495 = vdwg.mxu0
    %v496 = vtanh.pop %v418
    %v497 = vtanh.pop %v423
    %v498 = vtanh.pop %v428
    %v499 = vtanh.pop %v433
    %v500 = vtanh.pop %v438
    %v501 = vtanh.pop %v443
    %v502 = vtanh.pop %v448
    %v503 = vtanh.pop %v453
    %v504 = vtanh.pop %v458
    %v505 = vtanh.pop %v463
    %v506 = vtanh.pop %v468
    %v507 = vtanh.pop %v473
    %v508 = vtanh.pop %v478
    %v509 = vtanh.pop %v483
    %v510 = vtanh.pop %v488
    %v511 = vtanh.pop %v493
    %v512 = vld [vmem:[%s8] sm:$0xff]
    %v513 = vld [vmem:[%s8 + $0x8] sm:$0xff]
    %v514 = vld [vmem:[%s8 + $0x10] sm:$0xff]
    %v515 = vld [vmem:[%s8 + $0x18] sm:$0xff]
    %v516 = vld [vmem:[%s9] sm:$0x1]
    %v518 = vlaneseq
    %v519 = vshrl.u32 %v518, 7
    %v520 = vsub.s32 0, %v519
    %v521 = vrot.slane %v516, %v520
    %vm523 = vcmask 261120
    %v525 = vsel %vm523, %v496, 0
    %v528 = vsel %vm523, %v497, 0
    %v531 = vsel %vm523, %v498, 0
    %v534 = vsel %vm523, %v499, 0
    %v537 = vsel %vm523, %v500, 0
    %v540 = vsel %vm523, %v501, 0
    %v543 = vsel %vm523, %v502, 0
    %v546 = vsel %vm523, %v503, 0
    %v549 = vsel %vm523, %v504, 0
    %v552 = vsel %vm523, %v505, 0
    %v555 = vsel %vm523, %v506, 0
    %v558 = vsel %vm523, %v507, 0
    %v561 = vsel %vm523, %v508, 0
    %v564 = vsel %vm523, %v509, 0
    %v567 = vsel %vm523, %v510, 0
    %v570 = vsel %vm523, %v511, 0
    %572 = vmatprep.subr.mxu0 0.0
    %573 = vmatpush1.msra.mxu0 %v512
    %574 = vmatprep.subr.mxu0 0.0
    %575 = vmatpush1.msra.mxu0 %v513
    %576 = vmatprep.subr.mxu0 0.0
    %577 = vmatpush1.msra.mxu0 %v514
    %578 = vmatprep.subr.mxu0 0.0
    %579 = vmatpush1.msra.mxu0 %v515
    %580 = vmatprep.subr.mxu0 0.0
    %581 = vmatpush1.msra.mxu0 0.0
    %582 = vmatprep.subr.mxu0 0.0
    %583 = vmatpush1.msra.mxu0 0.0
    %584 = vmatprep.subr.mxu0 0.0
    %585 = vmatpush1.msra.mxu0 0.0
    %586 = vmatprep.subr.mxu0 0.0
    %587 = vmatpush1.msra.mxu0 0.0
    %588 = vmatprep.subr.mxu0 0.0
    %589 = vmatpush1.msra.mxu0 0.0
    %590 = vmatprep.subr.mxu0 0.0
    %591 = vmatpush1.msra.mxu0 0.0
    %592 = vmatprep.subr.mxu0 0.0
    %593 = vmatpush1.msra.mxu0 0.0
    %594 = vmatprep.subr.mxu0 0.0
    %595 = vmatpush1.msra.mxu0 0.0
    %596 = vmatprep.subr.mxu0 0.0
    %597 = vmatpush1.msra.mxu0 0.0
    %598 = vmatprep.subr.mxu0 0.0
    %599 = vmatpush1.msra.mxu0 0.0
    %600 = vmatprep.subr.mxu0 0.0
    %601 = vmatpush1.msra.mxu0 0.0
    %602 = vmatprep.subr.mxu0 0.0
    %603 = vmatpush1.msra.mxu0 0.0
    %604 = vmatprep.subr.mxu0 0.0
    %605 = vmatpush1.msra.mxu0 0.0
    %606 = vmatprep.subr.mxu0 0.0
    %607 = vmatpush1.msra.mxu0 0.0
    %608 = vmatprep.subr.mxu0 0.0
    %609 = vmatpush1.msra.mxu0 0.0
    %610 = vmatprep.subr.mxu0 0.0
    %611 = vmatpush1.msra.mxu0 0.0
    %612 = vmatprep.subr.mxu0 0.0
    %613 = vmatpush1.msra.mxu0 0.0
    %614 = vmatprep.subr.mxu0 0.0
    %615 = vmatpush1.msra.mxu0 0.0
    %616 = vmatprep.subr.mxu0 0.0
    %617 = vmatpush1.msra.mxu0 0.0
    %618 = vmatprep.subr.mxu0 0.0
    %619 = vmatpush1.msra.mxu0 0.0
    %620 = vmatprep.subr.mxu0 0.0
    %621 = vmatpush1.msra.mxu0 0.0
    %622 = vmatprep.subr.mxu0 0.0
    %623 = vmatpush1.msra.mxu0 0.0
    %624 = vmatprep.subr.mxu0 0.0
    %625 = vmatpush1.msra.mxu0 0.0
    %626 = vmatprep.subr.mxu0 0.0
    %627 = vmatpush1.msra.mxu0 0.0
    %628 = vmatprep.subr.mxu0 0.0
    %629 = vmatpush1.msra.mxu0 0.0
    %630 = vmatprep.subr.mxu0 0.0
    %631 = vmatpush1.msra.mxu0 0.0
    %632 = vmatprep.subr.mxu0 0.0
    %633 = vmatpush1.msra.mxu0 0.0
    %634 = vmatprep.subr.mxu0 0.0
    %635 = vmatpush1.msra.mxu0 0.0
    %636 = vmatprep.mubr.f32.mxu0 0.0
    %637 = vmatmul.mubr.f32.gmra.mrb[0].mxu0 %v525
    %v638 = vpop.f32.mrb[0].mxu0
    %v639 = vadd.f32 %v521, %v638
    %v640 = vpop.f32.mrb[0].mxu0
    %641 = vmatprep.mubr.f32.mxu0 0.0
    %642 = vmatmul.mubr.f32.gmra.mrb[0].mxu0 %v528
    %v643 = vpop.f32.mrb[0].mxu0
    %v644 = vadd.f32 %v521, %v643
    %v645 = vpop.f32.mrb[0].mxu0
    %646 = vmatprep.mubr.f32.mxu0 0.0
    %647 = vmatmul.mubr.f32.gmra.mrb[0].mxu0 %v531
    %v648 = vpop.f32.mrb[0].mxu0
    %v649 = vadd.f32 %v521, %v648
    %v650 = vpop.f32.mrb[0].mxu0
    %651 = vmatprep.mubr.f32.mxu0 0.0
    %652 = vmatmul.mubr.f32.gmra.mrb[0].mxu0 %v534
    %v653 = vpop.f32.mrb[0].mxu0
    %v654 = vadd.f32 %v521, %v653
    %v655 = vpop.f32.mrb[0].mxu0
    %656 = vmatprep.mubr.f32.mxu0 0.0
    %657 = vmatmul.mubr.f32.gmra.mrb[0].mxu0 %v537
    %v658 = vpop.f32.mrb[0].mxu0
    %v659 = vadd.f32 %v521, %v658
    %v660 = vpop.f32.mrb[0].mxu0
    %661 = vmatprep.mubr.f32.mxu0 0.0
    %662 = vmatmul.mubr.f32.gmra.mrb[0].mxu0 %v540
    %v663 = vpop.f32.mrb[0].mxu0
    %v664 = vadd.f32 %v521, %v663
    %v665 = vpop.f32.mrb[0].mxu0
    %666 = vmatprep.mubr.f32.mxu0 0.0
    %667 = vmatmul.mubr.f32.gmra.mrb[0].mxu0 %v543
    %v668 = vpop.f32.mrb[0].mxu0
    %v669 = vadd.f32 %v521, %v668
    %v670 = vpop.f32.mrb[0].mxu0
    %671 = vmatprep.mubr.f32.mxu0 0.0
    %672 = vmatmul.mubr.f32.gmra.mrb[0].mxu0 %v546
    %v673 = vpop.f32.mrb[0].mxu0
    %v674 = vadd.f32 %v521, %v673
    %v675 = vpop.f32.mrb[0].mxu0
    %676 = vmatprep.mubr.f32.mxu0 0.0
    %677 = vmatmul.mubr.f32.gmra.mrb[0].mxu0 %v549
    %v678 = vpop.f32.mrb[0].mxu0
    %v679 = vadd.f32 %v521, %v678
    %v680 = vpop.f32.mrb[0].mxu0
    %681 = vmatprep.mubr.f32.mxu0 0.0
    %682 = vmatmul.mubr.f32.gmra.mrb[0].mxu0 %v552
    %v683 = vpop.f32.mrb[0].mxu0
    %v684 = vadd.f32 %v521, %v683
    %v685 = vpop.f32.mrb[0].mxu0
    %686 = vmatprep.mubr.f32.mxu0 0.0
    %687 = vmatmul.mubr.f32.gmra.mrb[0].mxu0 %v555
    %v688 = vpop.f32.mrb[0].mxu0
    %v689 = vadd.f32 %v521, %v688
    %v690 = vpop.f32.mrb[0].mxu0
    %691 = vmatprep.mubr.f32.mxu0 0.0
    %692 = vmatmul.mubr.f32.gmra.mrb[0].mxu0 %v558
    %v693 = vpop.f32.mrb[0].mxu0
    %v694 = vadd.f32 %v521, %v693
    %v695 = vpop.f32.mrb[0].mxu0
    %696 = vmatprep.mubr.f32.mxu0 0.0
    %697 = vmatmul.mubr.f32.gmra.mrb[0].mxu0 %v561
    %v698 = vpop.f32.mrb[0].mxu0
    %v699 = vadd.f32 %v521, %v698
    %v700 = vpop.f32.mrb[0].mxu0
    %701 = vmatprep.mubr.f32.mxu0 0.0
    %702 = vmatmul.mubr.f32.gmra.mrb[0].mxu0 %v564
    %v703 = vpop.f32.mrb[0].mxu0
    %v704 = vadd.f32 %v521, %v703
    %v705 = vpop.f32.mrb[0].mxu0
    %706 = vmatprep.mubr.f32.mxu0 0.0
    %707 = vmatmul.mubr.f32.gmra.mrb[0].mxu0 %v567
    %v708 = vpop.f32.mrb[0].mxu0
    %v709 = vadd.f32 %v521, %v708
    %v710 = vpop.f32.mrb[0].mxu0
    %711 = vmatprep.mubr.f32.mxu0 0.0
    %712 = vmatmul.mubr.f32.gmra.mrb[0].mxu0 %v570
    %v713 = vpop.f32.mrb[0].mxu0
    %v714 = vadd.f32 %v521, %v713
    %v715 = vpop.f32.mrb[0].mxu0
    %716 = vdwg.mxu0
    %v717 = vld [vmem:[%s5] sm:$0xff]
    %v718 = vld [vmem:[%s5 + $0x8] sm:$0xff]
    %v719 = vld [vmem:[%s5 + $0x10] sm:$0xff]
    %v720 = vld [vmem:[%s5 + $0x18] sm:$0xff]
    %v722 = vsel %vm523, %v285, 0
    %v725 = vsel %vm523, %v286, 0
    %v728 = vsel %vm523, %v287, 0
    %v731 = vsel %vm523, %v288, 0
    %733 = vmatprep.subr.mxu0 0.0
    %734 = vmatpush1.msra.mxu0 %v717
    %735 = vmatprep.subr.mxu0 0.0
    %736 = vmatpush1.msra.mxu0 %v718
    %737 = vmatprep.subr.mxu0 0.0
    %738 = vmatpush1.msra.mxu0 %v719
    %739 = vmatprep.subr.mxu0 0.0
    %740 = vmatpush1.msra.mxu0 %v720
    %741 = vmatprep.subr.mxu0 0.0
    %742 = vmatpush1.msra.mxu0 0.0
    %743 = vmatprep.subr.mxu0 0.0
    %744 = vmatpush1.msra.mxu0 0.0
    %745 = vmatprep.subr.mxu0 0.0
    %746 = vmatpush1.msra.mxu0 0.0
    %747 = vmatprep.subr.mxu0 0.0
    %748 = vmatpush1.msra.mxu0 0.0
    %749 = vmatprep.subr.mxu0 0.0
    %750 = vmatpush1.msra.mxu0 0.0
    %751 = vmatprep.subr.mxu0 0.0
    %752 = vmatpush1.msra.mxu0 0.0
    %753 = vmatprep.subr.mxu0 0.0
    %754 = vmatpush1.msra.mxu0 0.0
    %755 = vmatprep.subr.mxu0 0.0
    %756 = vmatpush1.msra.mxu0 0.0
    %757 = vmatprep.subr.mxu0 0.0
    %758 = vmatpush1.msra.mxu0 0.0
    %759 = vmatprep.subr.mxu0 0.0
    %760 = vmatpush1.msra.mxu0 0.0
    %761 = vmatprep.subr.mxu0 0.0
    %762 = vmatpush1.msra.mxu0 0.0
    %763 = vmatprep.subr.mxu0 0.0
    %764 = vmatpush1.msra.mxu0 0.0
    %765 = vmatprep.subr.mxu0 0.0
    %766 = vmatpush1.msra.mxu0 0.0
    %767 = vmatprep.subr.mxu0 0.0
    %768 = vmatpush1.msra.mxu0 0.0
    %769 = vmatprep.subr.mxu0 0.0
    %770 = vmatpush1.msra.mxu0 0.0
    %771 = vmatprep.subr.mxu0 0.0
    %772 = vmatpush1.msra.mxu0 0.0
    %773 = vmatprep.subr.mxu0 0.0
    %774 = vmatpush1.msra.mxu0 0.0
    %775 = vmatprep.subr.mxu0 0.0
    %776 = vmatpush1.msra.mxu0 0.0
    %777 = vmatprep.subr.mxu0 0.0
    %778 = vmatpush1.msra.mxu0 0.0
    %779 = vmatprep.subr.mxu0 0.0
    %780 = vmatpush1.msra.mxu0 0.0
    %781 = vmatprep.subr.mxu0 0.0
    %782 = vmatpush1.msra.mxu0 0.0
    %783 = vmatprep.subr.mxu0 0.0
    %784 = vmatpush1.msra.mxu0 0.0
    %785 = vmatprep.subr.mxu0 0.0
    %786 = vmatpush1.msra.mxu0 0.0
    %787 = vmatprep.subr.mxu0 0.0
    %788 = vmatpush1.msra.mxu0 0.0
    %789 = vmatprep.subr.mxu0 0.0
    %790 = vmatpush1.msra.mxu0 0.0
    %791 = vmatprep.subr.mxu0 0.0
    %792 = vmatpush1.msra.mxu0 0.0
    %793 = vmatprep.subr.mxu0 0.0
    %794 = vmatpush1.msra.mxu0 0.0
    %795 = vmatprep.subr.mxu0 0.0
    %796 = vmatpush1.msra.mxu0 0.0
    %797 = vmatprep.mubr.f32.mxu0 0.0
    %798 = vmatmul.mubr.f32.gmra.mrb[0].mxu0 %v722
    %v799 = vpop.f32.mrb[0].mxu0
    %v800 = vadd.f32 0.0, %v799
    %v801 = vpop.f32.mrb[0].mxu0
    %802 = vmatprep.mubr.f32.mxu0 0.0
    %803 = vmatmul.mubr.f32.gmra.mrb[0].mxu0 %v725
    %v804 = vpop.f32.mrb[0].mxu0
    %v805 = vadd.f32 0.0, %v804
    %v806 = vpop.f32.mrb[0].mxu0
    %807 = vmatprep.mubr.f32.mxu0 0.0
    %808 = vmatmul.mubr.f32.gmra.mrb[0].mxu0 %v728
    %v809 = vpop.f32.mrb[0].mxu0
    %v810 = vadd.f32 0.0, %v809
    %v811 = vpop.f32.mrb[0].mxu0
    %812 = vmatprep.mubr.f32.mxu0 0.0
    %813 = vmatmul.mubr.f32.gmra.mrb[0].mxu0 %v731
    %v814 = vpop.f32.mrb[0].mxu0
    %v815 = vadd.f32 0.0, %v814
    %v816 = vpop.f32.mrb[0].mxu0
    %817 = vdwg.mxu0
    %v819 = vsel %vm523, %v268, 0
    %v822 = vsel %vm523, %v269, 0
    %v825 = vsel %vm523, %v270, 0
    %v828 = vsel %vm523, %v271, 0
    %v831 = vsel %vm523, %v272, 0
    %v834 = vsel %vm523, %v273, 0
    %v837 = vsel %vm523, %v274, 0
    %v840 = vsel %vm523, %v275, 0
    %v843 = vsel %vm523, %v276, 0
    %v846 = vsel %vm523, %v277, 0
    %v849 = vsel %vm523, %v278, 0
    %v852 = vsel %vm523, %v279, 0
    %v855 = vsel %vm523, %v280, 0
    %v858 = vsel %vm523, %v281, 0
    %v861 = vsel %vm523, %v282, 0
    %v864 = vsel %vm523, %v283, 0
    %866 = vmatprep.subr.mxu0 0.0
    %867 = vmatpush1.msra.mxu0 %v800
    %868 = vmatprep.subr.mxu0 0.0
    %869 = vmatpush1.msra.mxu0 %v805
    %870 = vmatprep.subr.mxu0 0.0
    %871 = vmatpush1.msra.mxu0 %v810
    %872 = vmatprep.subr.mxu0 0.0
    %873 = vmatpush1.msra.mxu0 %v815
    %874 = vmatprep.subr.mxu0 0.0
    %875 = vmatpush1.msra.mxu0 0.0
    %876 = vmatprep.subr.mxu0 0.0
    %877 = vmatpush1.msra.mxu0 0.0
    %878 = vmatprep.subr.mxu0 0.0
    %879 = vmatpush1.msra.mxu0 0.0
    %880 = vmatprep.subr.mxu0 0.0
    %881 = vmatpush1.msra.mxu0 0.0
    %882 = vmatprep.subr.mxu0 0.0
    %883 = vmatpush1.msra.mxu0 0.0
    %884 = vmatprep.subr.mxu0 0.0
    %885 = vmatpush1.msra.mxu0 0.0
    %886 = vmatprep.subr.mxu0 0.0
    %887 = vmatpush1.msra.mxu0 0.0
    %888 = vmatprep.subr.mxu0 0.0
    %889 = vmatpush1.msra.mxu0 0.0
    %890 = vmatprep.subr.mxu0 0.0
    %891 = vmatpush1.msra.mxu0 0.0
    %892 = vmatprep.subr.mxu0 0.0
    %893 = vmatpush1.msra.mxu0 0.0
    %894 = vmatprep.subr.mxu0 0.0
    %895 = vmatpush1.msra.mxu0 0.0
    %896 = vmatprep.subr.mxu0 0.0
    %897 = vmatpush1.msra.mxu0 0.0
    %898 = vmatprep.subr.mxu0 0.0
    %899 = vmatpush1.msra.mxu0 0.0
    %900 = vmatprep.subr.mxu0 0.0
    %901 = vmatpush1.msra.mxu0 0.0
    %902 = vmatprep.subr.mxu0 0.0
    %903 = vmatpush1.msra.mxu0 0.0
    %904 = vmatprep.subr.mxu0 0.0
    %905 = vmatpush1.msra.mxu0 0.0
    %906 = vmatprep.subr.mxu0 0.0
    %907 = vmatpush1.msra.mxu0 0.0
    %908 = vmatprep.subr.mxu0 0.0
    %909 = vmatpush1.msra.mxu0 0.0
    %910 = vmatprep.subr.mxu0 0.0
    %911 = vmatpush1.msra.mxu0 0.0
    %912 = vmatprep.subr.mxu0 0.0
    %913 = vmatpush1.msra.mxu0 0.0
    %914 = vmatprep.subr.mxu0 0.0
    %915 = vmatpush1.msra.mxu0 0.0
    %916 = vmatprep.subr.mxu0 0.0
    %917 = vmatpush1.msra.mxu0 0.0
    %918 = vmatprep.subr.mxu0 0.0
    %919 = vmatpush1.msra.mxu0 0.0
    %920 = vmatprep.subr.mxu0 0.0
    %921 = vmatpush1.msra.mxu0 0.0
    %922 = vmatprep.subr.mxu0 0.0
    %923 = vmatpush1.msra.mxu0 0.0
    %924 = vmatprep.subr.mxu0 0.0
    %925 = vmatpush1.msra.mxu0 0.0
    %926 = vmatprep.subr.mxu0 0.0
    %927 = vmatpush1.msra.mxu0 0.0
    %928 = vmatprep.subr.mxu0 0.0
    %929 = vmatpush1.msra.mxu0 0.0
    %930 = vmatprep.mubr.f32.mxu0 0.0
    %931 = vmatmul.mubr.f32.gmra.mrb[0].mxu0 %v819
    %v932 = vpop.f32.mrb[0].mxu0
    %v933 = vadd.f32 0.0, %v932
    %v934 = vpop.f32.mrb[0].mxu0
    %935 = vmatprep.mubr.f32.mxu0 0.0
    %936 = vmatmul.mubr.f32.gmra.mrb[0].mxu0 %v822
    %v937 = vpop.f32.mrb[0].mxu0
    %v938 = vadd.f32 0.0, %v937
    %v939 = vpop.f32.mrb[0].mxu0
    %940 = vmatprep.mubr.f32.mxu0 0.0
    %941 = vmatmul.mubr.f32.gmra.mrb[0].mxu0 %v825
    %v942 = vpop.f32.mrb[0].mxu0
    %v943 = vadd.f32 0.0, %v942
    %v944 = vpop.f32.mrb[0].mxu0
    %945 = vmatprep.mubr.f32.mxu0 0.0
    %946 = vmatmul.mubr.f32.gmra.mrb[0].mxu0 %v828
    %v947 = vpop.f32.mrb[0].mxu0
    %v948 = vadd.f32 0.0, %v947
    %v949 = vpop.f32.mrb[0].mxu0
    %950 = vmatprep.mubr.f32.mxu0 0.0
    %951 = vmatmul.mubr.f32.gmra.mrb[0].mxu0 %v831
    %v952 = vpop.f32.mrb[0].mxu0
    %v953 = vadd.f32 0.0, %v952
    %v954 = vpop.f32.mrb[0].mxu0
    %955 = vmatprep.mubr.f32.mxu0 0.0
    %956 = vmatmul.mubr.f32.gmra.mrb[0].mxu0 %v834
    %v957 = vpop.f32.mrb[0].mxu0
    %v958 = vadd.f32 0.0, %v957
    %v959 = vpop.f32.mrb[0].mxu0
    %960 = vmatprep.mubr.f32.mxu0 0.0
    %961 = vmatmul.mubr.f32.gmra.mrb[0].mxu0 %v837
    %v962 = vpop.f32.mrb[0].mxu0
    %v963 = vadd.f32 0.0, %v962
    %v964 = vpop.f32.mrb[0].mxu0
    %965 = vmatprep.mubr.f32.mxu0 0.0
    %966 = vmatmul.mubr.f32.gmra.mrb[0].mxu0 %v840
    %v967 = vpop.f32.mrb[0].mxu0
    %v968 = vadd.f32 0.0, %v967
    %v969 = vpop.f32.mrb[0].mxu0
    %970 = vmatprep.mubr.f32.mxu0 0.0
    %971 = vmatmul.mubr.f32.gmra.mrb[0].mxu0 %v843
    %v972 = vpop.f32.mrb[0].mxu0
    %v973 = vadd.f32 0.0, %v972
    %v974 = vpop.f32.mrb[0].mxu0
    %975 = vmatprep.mubr.f32.mxu0 0.0
    %976 = vmatmul.mubr.f32.gmra.mrb[0].mxu0 %v846
    %v977 = vpop.f32.mrb[0].mxu0
    %v978 = vadd.f32 0.0, %v977
    %v979 = vpop.f32.mrb[0].mxu0
    %980 = vmatprep.mubr.f32.mxu0 0.0
    %981 = vmatmul.mubr.f32.gmra.mrb[0].mxu0 %v849
    %v982 = vpop.f32.mrb[0].mxu0
    %v983 = vadd.f32 0.0, %v982
    %v984 = vpop.f32.mrb[0].mxu0
    %985 = vmatprep.mubr.f32.mxu0 0.0
    %986 = vmatmul.mubr.f32.gmra.mrb[0].mxu0 %v852
    %v987 = vpop.f32.mrb[0].mxu0
    %v988 = vadd.f32 0.0, %v987
    %v989 = vpop.f32.mrb[0].mxu0
    %990 = vmatprep.mubr.f32.mxu0 0.0
    %991 = vmatmul.mubr.f32.gmra.mrb[0].mxu0 %v855
    %v992 = vpop.f32.mrb[0].mxu0
    %v993 = vadd.f32 0.0, %v992
    %v994 = vpop.f32.mrb[0].mxu0
    %995 = vmatprep.mubr.f32.mxu0 0.0
    %996 = vmatmul.mubr.f32.gmra.mrb[0].mxu0 %v858
    %v997 = vpop.f32.mrb[0].mxu0
    %v998 = vadd.f32 0.0, %v997
    %v999 = vpop.f32.mrb[0].mxu0
    %1000 = vmatprep.mubr.f32.mxu0 0.0
    %1001 = vmatmul.mubr.f32.gmra.mrb[0].mxu0 %v861
    %v1002 = vpop.f32.mrb[0].mxu0
    %v1003 = vadd.f32 0.0, %v1002
    %v1004 = vpop.f32.mrb[0].mxu0
    %1005 = vmatprep.mubr.f32.mxu0 0.0
    %1006 = vmatmul.mubr.f32.gmra.mrb[0].mxu0 %v864
    %v1007 = vpop.f32.mrb[0].mxu0
    %v1008 = vadd.f32 0.0, %v1007
    %v1009 = vpop.f32.mrb[0].mxu0
    %1010 = vdwg.mxu0
    %v1011 = vmul.f32 %v933, %v639
    %v1012 = vmul.f32 %v938, %v644
    %v1013 = vmul.f32 %v943, %v649
    %v1014 = vmul.f32 %v948, %v654
    %v1015 = vmul.f32 %v953, %v659
    %v1016 = vmul.f32 %v958, %v664
    %v1017 = vmul.f32 %v963, %v669
    %v1018 = vmul.f32 %v968, %v674
    %v1019 = vmul.f32 %v973, %v679
    %v1020 = vmul.f32 %v978, %v684
    %v1021 = vmul.f32 %v983, %v689
    %v1022 = vmul.f32 %v988, %v694
    %v1023 = vmul.f32 %v993, %v699
    %v1024 = vmul.f32 %v998, %v704
    %v1025 = vmul.f32 %v1003, %v709
    %v1026 = vmul.f32 %v1008, %v714
    %v1027 = vld [vmem:[%s10] sm:$0x1]
    %v1029 = vlaneseq
    %v1030 = vshrl.u32 %v1029, 7
    %v1031 = vsub.s32 0, %v1030
    %v1032 = vrot.slane %v1027, %v1031
    %v1034 = vmul.f32 %v1011, %v1032
    %v1035 = vmul.f32 %v1012, %v1032
    %v1036 = vmul.f32 %v1013, %v1032
    %v1037 = vmul.f32 %v1014, %v1032
    %v1038 = vmul.f32 %v1015, %v1032
    %v1039 = vmul.f32 %v1016, %v1032
    %v1040 = vmul.f32 %v1017, %v1032
    %v1041 = vmul.f32 %v1018, %v1032
    %v1042 = vmul.f32 %v1019, %v1032
    %v1043 = vmul.f32 %v1020, %v1032
    %v1044 = vmul.f32 %v1021, %v1032
    %v1045 = vmul.f32 %v1022, %v1032
    %v1046 = vmul.f32 %v1023, %v1032
    %v1047 = vmul.f32 %v1024, %v1032
    %v1048 = vmul.f32 %v1025, %v1032
    %v1049 = vmul.f32 %v1026, %v1032
    %v1050 = vsel %vm523, %v1034, 0.0
    %1051 = vadd.xlane.f32.xlu0 %v1050
    %v1052 = vpop.xlane.xlu0 %1051
    %v1053 = vsel %vm523, %v1035, 0.0
    %1054 = vadd.xlane.f32.xlu0 %v1053
    %v1055 = vpop.xlane.xlu0 %1054
    %v1056 = vsel %vm523, %v1036, 0.0
    %1057 = vadd.xlane.f32.xlu0 %v1056
    %v1058 = vpop.xlane.xlu0 %1057
    %v1059 = vsel %vm523, %v1037, 0.0
    %1060 = vadd.xlane.f32.xlu0 %v1059
    %v1061 = vpop.xlane.xlu0 %1060
    %v1062 = vsel %vm523, %v1038, 0.0
    %1063 = vadd.xlane.f32.xlu0 %v1062
    %v1064 = vpop.xlane.xlu0 %1063
    %v1065 = vsel %vm523, %v1039, 0.0
    %1066 = vadd.xlane.f32.xlu0 %v1065
    %v1067 = vpop.xlane.xlu0 %1066
    %v1068 = vsel %vm523, %v1040, 0.0
    %1069 = vadd.xlane.f32.xlu0 %v1068
    %v1070 = vpop.xlane.xlu0 %1069
    %v1071 = vsel %vm523, %v1041, 0.0
    %1072 = vadd.xlane.f32.xlu0 %v1071
    %v1073 = vpop.xlane.xlu0 %1072
    %v1074 = vsel %vm523, %v1042, 0.0
    %1075 = vadd.xlane.f32.xlu0 %v1074
    %v1076 = vpop.xlane.xlu0 %1075
    %v1077 = vsel %vm523, %v1043, 0.0
    %1078 = vadd.xlane.f32.xlu0 %v1077
    %v1079 = vpop.xlane.xlu0 %1078
    %v1080 = vsel %vm523, %v1044, 0.0
    %1081 = vadd.xlane.f32.xlu0 %v1080
    %v1082 = vpop.xlane.xlu0 %1081
    %v1083 = vsel %vm523, %v1045, 0.0
    %1084 = vadd.xlane.f32.xlu0 %v1083
    %v1085 = vpop.xlane.xlu0 %1084
    %v1086 = vsel %vm523, %v1046, 0.0
    %1087 = vadd.xlane.f32.xlu0 %v1086
    %v1088 = vpop.xlane.xlu0 %1087
    %v1089 = vsel %vm523, %v1047, 0.0
    %1090 = vadd.xlane.f32.xlu0 %v1089
    %v1091 = vpop.xlane.xlu0 %1090
    %v1092 = vsel %vm523, %v1048, 0.0
    %1093 = vadd.xlane.f32.xlu0 %v1092
    %v1094 = vpop.xlane.xlu0 %1093
    %v1095 = vsel %vm523, %v1049, 0.0
    %1096 = vadd.xlane.f32.xlu0 %v1095
    %v1097 = vpop.xlane.xlu0 %1096
    %v1098 = vmax.f32 %v1052, %v1064
    %v1099 = vmax.f32 %v1055, %v1067
    %v1100 = vmax.f32 %v1058, %v1070
    %v1101 = vmax.f32 %v1061, %v1073
    %v1102 = vmax.f32 %v1098, %v1076
    %v1103 = vmax.f32 %v1099, %v1079
    %v1104 = vmax.f32 %v1100, %v1082
    %v1105 = vmax.f32 %v1101, %v1085
    %v1106 = vmax.f32 %v1102, %v1088
    %v1107 = vmax.f32 %v1103, %v1091
    %v1108 = vmax.f32 %v1104, %v1094
    %v1109 = vmax.f32 %v1105, %v1097
    %v1110 = vmax.f32 %v1106, %v1107
    %v1111 = vmax.f32 %v1108, %v1109
    %v1112 = vmax.f32 %v1110, %v1111
    %v1113 = vrot.slane %v1112, 4
    %v1114 = vmax.f32 %v1112, %v1113
    %v1115 = vrot.slane %v1114, 2
    %v1116 = vmax.f32 %v1114, %v1115
    %v1117 = vrot.slane %v1116, 1
    %v1118 = vmax.f32 %v1116, %v1117
    %s1119 = vtos %v1118
    %v1120 = vstv %s1119
    %v1121 = vsub.f32 %v1052, %v1120
    %v1122 = vsub.f32 %v1055, %v1120
    %v1123 = vsub.f32 %v1058, %v1120
    %v1124 = vsub.f32 %v1061, %v1120
    %v1125 = vsub.f32 %v1064, %v1120
    %v1126 = vsub.f32 %v1067, %v1120
    %v1127 = vsub.f32 %v1070, %v1120
    %v1128 = vsub.f32 %v1073, %v1120
    %v1129 = vsub.f32 %v1076, %v1120
    %v1130 = vsub.f32 %v1079, %v1120
    %v1131 = vsub.f32 %v1082, %v1120
    %v1132 = vsub.f32 %v1085, %v1120
    %v1133 = vsub.f32 %v1088, %v1120
    %v1134 = vsub.f32 %v1091, %v1120
    %v1135 = vsub.f32 %v1094, %v1120
    %v1136 = vsub.f32 %v1097, %v1120
    %v1137 = vmul.f32 %v1121, 1.442695
    %v1138 = vpow.pop %v1137
    %v1139 = vmul.f32 %v1122, 1.442695
    %v1140 = vpow.pop %v1139
    %v1141 = vmul.f32 %v1123, 1.442695
    %v1142 = vpow.pop %v1141
    %v1143 = vmul.f32 %v1124, 1.442695
    %v1144 = vpow.pop %v1143
    %v1145 = vmul.f32 %v1125, 1.442695
    %v1146 = vpow.pop %v1145
    %v1147 = vmul.f32 %v1126, 1.442695
    %v1148 = vpow.pop %v1147
    %v1149 = vmul.f32 %v1127, 1.442695
    %v1150 = vpow.pop %v1149
    %v1151 = vmul.f32 %v1128, 1.442695
    %v1152 = vpow.pop %v1151
    %v1153 = vmul.f32 %v1129, 1.442695
    %v1154 = vpow.pop %v1153
    %v1155 = vmul.f32 %v1130, 1.442695
    %v1156 = vpow.pop %v1155
    %v1157 = vmul.f32 %v1131, 1.442695
    %v1158 = vpow.pop %v1157
    %v1159 = vmul.f32 %v1132, 1.442695
    %v1160 = vpow.pop %v1159
    %v1161 = vmul.f32 %v1133, 1.442695
    %v1162 = vpow.pop %v1161
    %v1163 = vmul.f32 %v1134, 1.442695
    %v1164 = vpow.pop %v1163
    %v1165 = vmul.f32 %v1135, 1.442695
    %v1166 = vpow.pop %v1165
    %v1167 = vmul.f32 %v1136, 1.442695
    %v1168 = vpow.pop %v1167
    %v1169 = vadd.f32 %v1138, %v1146
    %v1170 = vadd.f32 %v1140, %v1148
    %v1171 = vadd.f32 %v1142, %v1150
    %v1172 = vadd.f32 %v1144, %v1152
    %v1173 = vadd.f32 %v1169, %v1154
    %v1174 = vadd.f32 %v1170, %v1156
    %v1175 = vadd.f32 %v1171, %v1158
    %v1176 = vadd.f32 %v1172, %v1160
    %v1177 = vadd.f32 %v1173, %v1162
    %v1178 = vadd.f32 %v1174, %v1164
    %v1179 = vadd.f32 %v1175, %v1166
    %v1180 = vadd.f32 %v1176, %v1168
    %v1181 = vrcp.pop %v1177
    %v1182 = vmul.f32 1.0, %v1181
    %v1183 = vrcp.pop %v1178
    %v1184 = vmul.f32 1.0, %v1183
    %v1185 = vrcp.pop %v1179
    %v1186 = vmul.f32 1.0, %v1185
    %v1187 = vrcp.pop %v1180
    %v1188 = vmul.f32 1.0, %v1187
    %v1189 = vmul.f32 %v1138, %v1182
    %v1190 = vmul.f32 %v1140, %v1184
    %v1191 = vmul.f32 %v1142, %v1186
    %v1192 = vmul.f32 %v1144, %v1188
    %v1193 = vmul.f32 %v1189, %v1011
    %v1194 = vmul.f32 %v1190, %v1012
    %v1195 = vmul.f32 %v1191, %v1013
    %v1196 = vmul.f32 %v1192, %v1014
    %v1197 = vmul.f32 %v1146, %v1182
    %v1198 = vmul.f32 %v1148, %v1184
    %v1199 = vmul.f32 %v1150, %v1186
    %v1200 = vmul.f32 %v1152, %v1188
    %v1201 = vmul.f32 %v1197, %v1015
    %v1202 = vmul.f32 %v1198, %v1016
    %v1203 = vmul.f32 %v1199, %v1017
    %v1204 = vmul.f32 %v1200, %v1018
    %v1205 = vadd.f32 %v1193, %v1201
    %v1206 = vadd.f32 %v1194, %v1202
    %v1207 = vadd.f32 %v1195, %v1203
    %v1208 = vadd.f32 %v1196, %v1204
    %v1209 = vmul.f32 %v1154, %v1182
    %v1210 = vmul.f32 %v1156, %v1184
    %v1211 = vmul.f32 %v1158, %v1186
    %v1212 = vmul.f32 %v1160, %v1188
    %v1213 = vmul.f32 %v1209, %v1019
    %v1214 = vmul.f32 %v1210, %v1020
    %v1215 = vmul.f32 %v1211, %v1021
    %v1216 = vmul.f32 %v1212, %v1022
    %v1217 = vadd.f32 %v1205, %v1213
    %v1218 = vadd.f32 %v1206, %v1214
    %v1219 = vadd.f32 %v1207, %v1215
    %v1220 = vadd.f32 %v1208, %v1216
    %v1221 = vmul.f32 %v1162, %v1182
    %v1222 = vmul.f32 %v1164, %v1184
    %v1223 = vmul.f32 %v1166, %v1186
    %v1224 = vmul.f32 %v1168, %v1188
    %v1225 = vmul.f32 %v1221, %v1023
    %v1226 = vmul.f32 %v1222, %v1024
    %v1227 = vmul.f32 %v1223, %v1025
    %v1228 = vmul.f32 %v1224, %v1026
    %v1229 = vadd.f32 %v1217, %v1225
    %v1230 = vadd.f32 %v1218, %v1226
    %v1231 = vadd.f32 %v1219, %v1227
    %v1232 = vadd.f32 %v1220, %v1228
    %v1233 = vld [vmem:[%s11] sm:$0xff]
    %v1234 = vld [vmem:[%s11 + $0x8] sm:$0xff]
    %v1235 = vld [vmem:[%s11 + $0x10] sm:$0xff]
    %v1236 = vld [vmem:[%s11 + $0x18] sm:$0xff]
    %v1237 = vld [vmem:[%s12] sm:$0x1]
    %v1239 = vlaneseq
    %v1240 = vshrl.u32 %v1239, 7
    %v1241 = vsub.s32 0, %v1240
    %v1242 = vrot.slane %v1237, %v1241
    %v1245 = vsel %vm523, %v1229, 0
    %v1248 = vsel %vm523, %v1230, 0
    %v1251 = vsel %vm523, %v1231, 0
    %v1254 = vsel %vm523, %v1232, 0
    %1256 = vmatprep.subr.mxu0 0.0
    %1257 = vmatpush1.msra.mxu0 %v1233
    %1258 = vmatprep.subr.mxu0 0.0
    %1259 = vmatpush1.msra.mxu0 %v1234
    %1260 = vmatprep.subr.mxu0 0.0
    %1261 = vmatpush1.msra.mxu0 %v1235
    %1262 = vmatprep.subr.mxu0 0.0
    %1263 = vmatpush1.msra.mxu0 %v1236
    %1264 = vmatprep.subr.mxu0 0.0
    %1265 = vmatpush1.msra.mxu0 0.0
    %1266 = vmatprep.subr.mxu0 0.0
    %1267 = vmatpush1.msra.mxu0 0.0
    %1268 = vmatprep.subr.mxu0 0.0
    %1269 = vmatpush1.msra.mxu0 0.0
    %1270 = vmatprep.subr.mxu0 0.0
    %1271 = vmatpush1.msra.mxu0 0.0
    %1272 = vmatprep.subr.mxu0 0.0
    %1273 = vmatpush1.msra.mxu0 0.0
    %1274 = vmatprep.subr.mxu0 0.0
    %1275 = vmatpush1.msra.mxu0 0.0
    %1276 = vmatprep.subr.mxu0 0.0
    %1277 = vmatpush1.msra.mxu0 0.0
    %1278 = vmatprep.subr.mxu0 0.0
    %1279 = vmatpush1.msra.mxu0 0.0
    %1280 = vmatprep.subr.mxu0 0.0
    %1281 = vmatpush1.msra.mxu0 0.0
    %1282 = vmatprep.subr.mxu0 0.0
    %1283 = vmatpush1.msra.mxu0 0.0
    %1284 = vmatprep.subr.mxu0 0.0
    %1285 = vmatpush1.msra.mxu0 0.0
    %1286 = vmatprep.subr.mxu0 0.0
    %1287 = vmatpush1.msra.mxu0 0.0
    %1288 = vmatprep.subr.mxu0 0.0
    %1289 = vmatpush1.msra.mxu0 0.0
    %1290 = vmatprep.subr.mxu0 0.0
    %1291 = vmatpush1.msra.mxu0 0.0
    %1292 = vmatprep.subr.mxu0 0.0
    %1293 = vmatpush1.msra.mxu0 0.0
    %1294 = vmatprep.subr.mxu0 0.0
    %1295 = vmatpush1.msra.mxu0 0.0
    %1296 = vmatprep.subr.mxu0 0.0
    %1297 = vmatpush1.msra.mxu0 0.0
    %1298 = vmatprep.subr.mxu0 0.0
    %1299 = vmatpush1.msra.mxu0 0.0
    %1300 = vmatprep.subr.mxu0 0.0
    %1301 = vmatpush1.msra.mxu0 0.0
    %1302 = vmatprep.subr.mxu0 0.0
    %1303 = vmatpush1.msra.mxu0 0.0
    %1304 = vmatprep.subr.mxu0 0.0
    %1305 = vmatpush1.msra.mxu0 0.0
    %1306 = vmatprep.subr.mxu0 0.0
    %1307 = vmatpush1.msra.mxu0 0.0
    %1308 = vmatprep.subr.mxu0 0.0
    %1309 = vmatpush1.msra.mxu0 0.0
    %1310 = vmatprep.subr.mxu0 0.0
    %1311 = vmatpush1.msra.mxu0 0.0
    %1312 = vmatprep.subr.mxu0 0.0
    %1313 = vmatpush1.msra.mxu0 0.0
    %1314 = vmatprep.subr.mxu0 0.0
    %1315 = vmatpush1.msra.mxu0 0.0
    %1316 = vmatprep.subr.mxu0 0.0
    %1317 = vmatpush1.msra.mxu0 0.0
    %1318 = vmatprep.subr.mxu0 0.0
    %1319 = vmatpush1.msra.mxu0 0.0
    %1320 = vmatprep.mubr.f32.mxu0 0.0
    %1321 = vmatmul.mubr.f32.gmra.mrb[0].mxu0 %v1245
    %v1322 = vpop.f32.mrb[0].mxu0
    %v1323 = vadd.f32 %v1242, %v1322
    %v1324 = vpop.f32.mrb[0].mxu0
    %1325 = vmatprep.mubr.f32.mxu0 0.0
    %1326 = vmatmul.mubr.f32.gmra.mrb[0].mxu0 %v1248
    %v1327 = vpop.f32.mrb[0].mxu0
    %v1328 = vadd.f32 %v1242, %v1327
    %v1329 = vpop.f32.mrb[0].mxu0
    %1330 = vmatprep.mubr.f32.mxu0 0.0
    %1331 = vmatmul.mubr.f32.gmra.mrb[0].mxu0 %v1251
    %v1332 = vpop.f32.mrb[0].mxu0
    %v1333 = vadd.f32 %v1242, %v1332
    %v1334 = vpop.f32.mrb[0].mxu0
    %1335 = vmatprep.mubr.f32.mxu0 0.0
    %1336 = vmatmul.mubr.f32.gmra.mrb[0].mxu0 %v1254
    %v1337 = vpop.f32.mrb[0].mxu0
    %v1338 = vadd.f32 %v1242, %v1337
    %v1339 = vpop.f32.mrb[0].mxu0
    %1340 = vdwg.mxu0
    %v1341 = vtanh.pop %v1323
    %v1342 = vtanh.pop %v1328
    %v1343 = vtanh.pop %v1333
    %v1344 = vtanh.pop %v1338
    %v1345 = vld [vmem:[%s13] sm:$0xff]
    %v1346 = vld [vmem:[%s13 + $0x8] sm:$0xff]
    %v1347 = vld [vmem:[%s13 + $0x10] sm:$0xff]
    %v1348 = vld [vmem:[%s13 + $0x18] sm:$0xff]
    %v1350 = vsel %vm523, %v1341, 0
    %v1353 = vsel %vm523, %v1342, 0
    %v1356 = vsel %vm523, %v1343, 0
    %v1359 = vsel %vm523, %v1344, 0
    %1361 = vmatprep.subr.mxu0 0.0
    %1362 = vmatpush1.msra.mxu0 %v1345
    %1363 = vmatprep.subr.mxu0 0.0
    %1364 = vmatpush1.msra.mxu0 %v1346
    %1365 = vmatprep.subr.mxu0 0.0
    %1366 = vmatpush1.msra.mxu0 %v1347
    %1367 = vmatprep.subr.mxu0 0.0
    %1368 = vmatpush1.msra.mxu0 %v1348
    %1369 = vmatprep.subr.mxu0 0.0
    %1370 = vmatpush1.msra.mxu0 0.0
    %1371 = vmatprep.subr.mxu0 0.0
    %1372 = vmatpush1.msra.mxu0 0.0
    %1373 = vmatprep.subr.mxu0 0.0
    %1374 = vmatpush1.msra.mxu0 0.0
    %1375 = vmatprep.subr.mxu0 0.0
    %1376 = vmatpush1.msra.mxu0 0.0
    %1377 = vmatprep.subr.mxu0 0.0
    %1378 = vmatpush1.msra.mxu0 0.0
    %1379 = vmatprep.subr.mxu0 0.0
    %1380 = vmatpush1.msra.mxu0 0.0
    %1381 = vmatprep.subr.mxu0 0.0
    %1382 = vmatpush1.msra.mxu0 0.0
    %1383 = vmatprep.subr.mxu0 0.0
    %1384 = vmatpush1.msra.mxu0 0.0
    %1385 = vmatprep.subr.mxu0 0.0
    %1386 = vmatpush1.msra.mxu0 0.0
    %1387 = vmatprep.subr.mxu0 0.0
    %1388 = vmatpush1.msra.mxu0 0.0
    %1389 = vmatprep.subr.mxu0 0.0
    %1390 = vmatpush1.msra.mxu0 0.0
    %1391 = vmatprep.subr.mxu0 0.0
    %1392 = vmatpush1.msra.mxu0 0.0
    %1393 = vmatprep.subr.mxu0 0.0
    %1394 = vmatpush1.msra.mxu0 0.0
    %1395 = vmatprep.subr.mxu0 0.0
    %1396 = vmatpush1.msra.mxu0 0.0
    %1397 = vmatprep.subr.mxu0 0.0
    %1398 = vmatpush1.msra.mxu0 0.0
    %1399 = vmatprep.subr.mxu0 0.0
    %1400 = vmatpush1.msra.mxu0 0.0
    %1401 = vmatprep.subr.mxu0 0.0
    %1402 = vmatpush1.msra.mxu0 0.0
    %1403 = vmatprep.subr.mxu0 0.0
    %1404 = vmatpush1.msra.mxu0 0.0
    %1405 = vmatprep.subr.mxu0 0.0
    %1406 = vmatpush1.msra.mxu0 0.0
    %1407 = vmatprep.subr.mxu0 0.0
    %1408 = vmatpush1.msra.mxu0 0.0
    %1409 = vmatprep.subr.mxu0 0.0
    %1410 = vmatpush1.msra.mxu0 0.0
    %1411 = vmatprep.subr.mxu0 0.0
    %1412 = vmatpush1.msra.mxu0 0.0
    %1413 = vmatprep.subr.mxu0 0.0
    %1414 = vmatpush1.msra.mxu0 0.0
    %1415 = vmatprep.subr.mxu0 0.0
    %1416 = vmatpush1.msra.mxu0 0.0
    %1417 = vmatprep.subr.mxu0 0.0
    %1418 = vmatpush1.msra.mxu0 0.0
    %1419 = vmatprep.subr.mxu0 0.0
    %1420 = vmatpush1.msra.mxu0 0.0
    %1421 = vmatprep.subr.mxu0 0.0
    %1422 = vmatpush1.msra.mxu0 0.0
    %1423 = vmatprep.subr.mxu0 0.0
    %1424 = vmatpush1.msra.mxu0 0.0
    %1425 = vmatprep.mubr.f32.mxu0 0.0
    %1426 = vmatmul.mubr.f32.gmra.mrb[0].mxu0 %v1350
    %v1427 = vpop.f32.mrb[0].mxu0
    %v1428 = vadd.f32 0.0, %v1427
    %v1429 = vpop.f32.mrb[0].mxu0
    %1430 = vmatprep.mubr.f32.mxu0 0.0
    %1431 = vmatmul.mubr.f32.gmra.mrb[0].mxu0 %v1353
    %v1432 = vpop.f32.mrb[0].mxu0
    %v1433 = vadd.f32 0.0, %v1432
    %v1434 = vpop.f32.mrb[0].mxu0
    %1435 = vmatprep.mubr.f32.mxu0 0.0
    %1436 = vmatmul.mubr.f32.gmra.mrb[0].mxu0 %v1356
    %v1437 = vpop.f32.mrb[0].mxu0
    %v1438 = vadd.f32 0.0, %v1437
    %v1439 = vpop.f32.mrb[0].mxu0
    %1440 = vmatprep.mubr.f32.mxu0 0.0
    %1441 = vmatmul.mubr.f32.gmra.mrb[0].mxu0 %v1359
    %v1442 = vpop.f32.mrb[0].mxu0
    %v1443 = vadd.f32 0.0, %v1442
    %v1444 = vpop.f32.mrb[0].mxu0
    %1445 = vdwg.mxu0
    %v1446 = vadd.f32 %v285, %v1428
    %v1447 = vadd.f32 %v286, %v1433
    %v1448 = vadd.f32 %v287, %v1438
    %v1449 = vadd.f32 %v288, %v1443
    %v1450 = vld [vmem:[%s14] sm:$0x1]
    %v1452 = vlaneseq
    %v1453 = vshrl.u32 %v1452, 7
    %v1454 = vsub.s32 0, %v1453
    %v1455 = vrot.slane %v1450, %v1454
    %v1457 = vadd.f32 %v1446, %v1455
    %v1458 = vadd.f32 %v1447, %v1455
    %v1459 = vadd.f32 %v1448, %v1455
    %v1460 = vadd.f32 %v1449, %v1455
    %s1461 = scalar_lea.vmem %s6, 16
    %v1462 = vld [vmem:[%s1461] sm:$0xff]
    %v1463 = vld [vmem:[%s1461 + $0x8] sm:$0x1]
    %s1464 = scalar_lea.vmem %s7, 1
    %v1465 = vld [vmem:[%s1464] sm:$0x1]
    %v1467 = vlaneseq
    %v1468 = vshrl.u32 %v1467, 7
    %v1469 = vsub.s32 0, %v1468
    %v1470 = vrot.slane %v1465, %v1469
    %v1473 = vsel %vm347, %v1463, 0
    %1475 = vmatprep.subr.mxu0 0.0
    %1476 = vmatpush1.msra.mxu0 %v1462
    %1477 = vmatprep.subr.mxu0 0.0
    %1478 = vmatpush1.msra.mxu0 %v1473
    %1479 = vmatprep.subr.mxu0 0.0
    %1480 = vmatpush1.msra.mxu0 0.0
    %1481 = vmatprep.subr.mxu0 0.0
    %1482 = vmatpush1.msra.mxu0 0.0
    %1483 = vmatprep.subr.mxu0 0.0
    %1484 = vmatpush1.msra.mxu0 0.0
    %1485 = vmatprep.subr.mxu0 0.0
    %1486 = vmatpush1.msra.mxu0 0.0
    %1487 = vmatprep.subr.mxu0 0.0
    %1488 = vmatpush1.msra.mxu0 0.0
    %1489 = vmatprep.subr.mxu0 0.0
    %1490 = vmatpush1.msra.mxu0 0.0
    %1491 = vmatprep.subr.mxu0 0.0
    %1492 = vmatpush1.msra.mxu0 0.0
    %1493 = vmatprep.subr.mxu0 0.0
    %1494 = vmatpush1.msra.mxu0 0.0
    %1495 = vmatprep.subr.mxu0 0.0
    %1496 = vmatpush1.msra.mxu0 0.0
    %1497 = vmatprep.subr.mxu0 0.0
    %1498 = vmatpush1.msra.mxu0 0.0
    %1499 = vmatprep.subr.mxu0 0.0
    %1500 = vmatpush1.msra.mxu0 0.0
    %1501 = vmatprep.subr.mxu0 0.0
    %1502 = vmatpush1.msra.mxu0 0.0
    %1503 = vmatprep.subr.mxu0 0.0
    %1504 = vmatpush1.msra.mxu0 0.0
    %1505 = vmatprep.subr.mxu0 0.0
    %1506 = vmatpush1.msra.mxu0 0.0
    %1507 = vmatprep.subr.mxu0 0.0
    %1508 = vmatpush1.msra.mxu0 0.0
    %1509 = vmatprep.subr.mxu0 0.0
    %1510 = vmatpush1.msra.mxu0 0.0
    %1511 = vmatprep.subr.mxu0 0.0
    %1512 = vmatpush1.msra.mxu0 0.0
    %1513 = vmatprep.subr.mxu0 0.0
    %1514 = vmatpush1.msra.mxu0 0.0
    %1515 = vmatprep.subr.mxu0 0.0
    %1516 = vmatpush1.msra.mxu0 0.0
    %1517 = vmatprep.subr.mxu0 0.0
    %1518 = vmatpush1.msra.mxu0 0.0
    %1519 = vmatprep.subr.mxu0 0.0
    %1520 = vmatpush1.msra.mxu0 0.0
    %1521 = vmatprep.subr.mxu0 0.0
    %1522 = vmatpush1.msra.mxu0 0.0
    %1523 = vmatprep.subr.mxu0 0.0
    %1524 = vmatpush1.msra.mxu0 0.0
    %1525 = vmatprep.subr.mxu0 0.0
    %1526 = vmatpush1.msra.mxu0 0.0
    %1527 = vmatprep.subr.mxu0 0.0
    %1528 = vmatpush1.msra.mxu0 0.0
    %1529 = vmatprep.subr.mxu0 0.0
    %1530 = vmatpush1.msra.mxu0 0.0
    %1531 = vmatprep.subr.mxu0 0.0
    %1532 = vmatpush1.msra.mxu0 0.0
    %1533 = vmatprep.subr.mxu0 0.0
    %1534 = vmatpush1.msra.mxu0 0.0
    %1535 = vmatprep.subr.mxu0 0.0
    %1536 = vmatpush1.msra.mxu0 0.0
    %1537 = vmatprep.subr.mxu0 0.0
    %1538 = vmatpush1.msra.mxu0 0.0
    %1539 = vmatprep.mubr.f32.mxu0 0.0
    %1540 = vmatmul.mubr.f32.gmra.mrb[0].mxu0 %v300
    %v1541 = vpop.f32.mrb[0].mxu0
    %v1542 = vadd.f32 %v1470, %v1541
    %v1543 = vpop.f32.mrb[0].mxu0
    %1544 = vmatprep.mubr.f32.mxu0 0.0
    %1545 = vmatmul.mubr.f32.gmra.mrb[0].mxu0 %v303
    %v1546 = vpop.f32.mrb[0].mxu0
    %v1547 = vadd.f32 %v1470, %v1546
    %v1548 = vpop.f32.mrb[0].mxu0
    %1549 = vmatprep.mubr.f32.mxu0 0.0
    %1550 = vmatmul.mubr.f32.gmra.mrb[0].mxu0 %v306
    %v1551 = vpop.f32.mrb[0].mxu0
    %v1552 = vadd.f32 %v1470, %v1551
    %v1553 = vpop.f32.mrb[0].mxu0
    %1554 = vmatprep.mubr.f32.mxu0 0.0
    %1555 = vmatmul.mubr.f32.gmra.mrb[0].mxu0 %v309
    %v1556 = vpop.f32.mrb[0].mxu0
    %v1557 = vadd.f32 %v1470, %v1556
    %v1558 = vpop.f32.mrb[0].mxu0
    %1559 = vmatprep.mubr.f32.mxu0 0.0
    %1560 = vmatmul.mubr.f32.gmra.mrb[0].mxu0 %v312
    %v1561 = vpop.f32.mrb[0].mxu0
    %v1562 = vadd.f32 %v1470, %v1561
    %v1563 = vpop.f32.mrb[0].mxu0
    %1564 = vmatprep.mubr.f32.mxu0 0.0
    %1565 = vmatmul.mubr.f32.gmra.mrb[0].mxu0 %v315
    %v1566 = vpop.f32.mrb[0].mxu0
    %v1567 = vadd.f32 %v1470, %v1566
    %v1568 = vpop.f32.mrb[0].mxu0
    %1569 = vmatprep.mubr.f32.mxu0 0.0
    %1570 = vmatmul.mubr.f32.gmra.mrb[0].mxu0 %v318
    %v1571 = vpop.f32.mrb[0].mxu0
    %v1572 = vadd.f32 %v1470, %v1571
    %v1573 = vpop.f32.mrb[0].mxu0
    %1574 = vmatprep.mubr.f32.mxu0 0.0
    %1575 = vmatmul.mubr.f32.gmra.mrb[0].mxu0 %v321
    %v1576 = vpop.f32.mrb[0].mxu0
    %v1577 = vadd.f32 %v1470, %v1576
    %v1578 = vpop.f32.mrb[0].mxu0
    %1579 = vmatprep.mubr.f32.mxu0 0.0
    %1580 = vmatmul.mubr.f32.gmra.mrb[0].mxu0 %v324
    %v1581 = vpop.f32.mrb[0].mxu0
    %v1582 = vadd.f32 %v1470, %v1581
    %v1583 = vpop.f32.mrb[0].mxu0
    %1584 = vmatprep.mubr.f32.mxu0 0.0
    %1585 = vmatmul.mubr.f32.gmra.mrb[0].mxu0 %v327
    %v1586 = vpop.f32.mrb[0].mxu0
    %v1587 = vadd.f32 %v1470, %v1586
    %v1588 = vpop.f32.mrb[0].mxu0
    %1589 = vmatprep.mubr.f32.mxu0 0.0
    %1590 = vmatmul.mubr.f32.gmra.mrb[0].mxu0 %v330
    %v1591 = vpop.f32.mrb[0].mxu0
    %v1592 = vadd.f32 %v1470, %v1591
    %v1593 = vpop.f32.mrb[0].mxu0
    %1594 = vmatprep.mubr.f32.mxu0 0.0
    %1595 = vmatmul.mubr.f32.gmra.mrb[0].mxu0 %v333
    %v1596 = vpop.f32.mrb[0].mxu0
    %v1597 = vadd.f32 %v1470, %v1596
    %v1598 = vpop.f32.mrb[0].mxu0
    %1599 = vmatprep.mubr.f32.mxu0 0.0
    %1600 = vmatmul.mubr.f32.gmra.mrb[0].mxu0 %v336
    %v1601 = vpop.f32.mrb[0].mxu0
    %v1602 = vadd.f32 %v1470, %v1601
    %v1603 = vpop.f32.mrb[0].mxu0
    %1604 = vmatprep.mubr.f32.mxu0 0.0
    %1605 = vmatmul.mubr.f32.gmra.mrb[0].mxu0 %v339
    %v1606 = vpop.f32.mrb[0].mxu0
    %v1607 = vadd.f32 %v1470, %v1606
    %v1608 = vpop.f32.mrb[0].mxu0
    %1609 = vmatprep.mubr.f32.mxu0 0.0
    %1610 = vmatmul.mubr.f32.gmra.mrb[0].mxu0 %v342
    %v1611 = vpop.f32.mrb[0].mxu0
    %v1612 = vadd.f32 %v1470, %v1611
    %v1613 = vpop.f32.mrb[0].mxu0
    %1614 = vmatprep.mubr.f32.mxu0 0.0
    %1615 = vmatmul.mubr.f32.gmra.mrb[0].mxu0 %v345
    %v1616 = vpop.f32.mrb[0].mxu0
    %v1617 = vadd.f32 %v1470, %v1616
    %v1618 = vpop.f32.mrb[0].mxu0
    %1619 = vdwg.mxu0
    %v1620 = vtanh.pop %v1542
    %v1621 = vtanh.pop %v1547
    %v1622 = vtanh.pop %v1552
    %v1623 = vtanh.pop %v1557
    %v1624 = vtanh.pop %v1562
    %v1625 = vtanh.pop %v1567
    %v1626 = vtanh.pop %v1572
    %v1627 = vtanh.pop %v1577
    %v1628 = vtanh.pop %v1582
    %v1629 = vtanh.pop %v1587
    %v1630 = vtanh.pop %v1592
    %v1631 = vtanh.pop %v1597
    %v1632 = vtanh.pop %v1602
    %v1633 = vtanh.pop %v1607
    %v1634 = vtanh.pop %v1612
    %v1635 = vtanh.pop %v1617
    %s1636 = scalar_lea.vmem %s8, 32
    %v1637 = vld [vmem:[%s1636] sm:$0xff]
    %v1638 = vld [vmem:[%s1636 + $0x8] sm:$0xff]
    %v1639 = vld [vmem:[%s1636 + $0x10] sm:$0xff]
    %v1640 = vld [vmem:[%s1636 + $0x18] sm:$0xff]
    %s1641 = scalar_lea.vmem %s9, 1
    %v1642 = vld [vmem:[%s1641] sm:$0x1]
    %v1644 = vlaneseq
    %v1645 = vshrl.u32 %v1644, 7
    %v1646 = vsub.s32 0, %v1645
    %v1647 = vrot.slane %v1642, %v1646
    %v1650 = vsel %vm523, %v1620, 0
    %v1653 = vsel %vm523, %v1621, 0
    %v1656 = vsel %vm523, %v1622, 0
    %v1659 = vsel %vm523, %v1623, 0
    %v1662 = vsel %vm523, %v1624, 0
    %v1665 = vsel %vm523, %v1625, 0
    %v1668 = vsel %vm523, %v1626, 0
    %v1671 = vsel %vm523, %v1627, 0
    %v1674 = vsel %vm523, %v1628, 0
    %v1677 = vsel %vm523, %v1629, 0
    %v1680 = vsel %vm523, %v1630, 0
    %v1683 = vsel %vm523, %v1631, 0
    %v1686 = vsel %vm523, %v1632, 0
    %v1689 = vsel %vm523, %v1633, 0
    %v1692 = vsel %vm523, %v1634, 0
    %v1695 = vsel %vm523, %v1635, 0
    %1697 = vmatprep.subr.mxu0 0.0
    %1698 = vmatpush1.msra.mxu0 %v1637
    %1699 = vmatprep.subr.mxu0 0.0
    %1700 = vmatpush1.msra.mxu0 %v1638
    %1701 = vmatprep.subr.mxu0 0.0
    %1702 = vmatpush1.msra.mxu0 %v1639
    %1703 = vmatprep.subr.mxu0 0.0
    %1704 = vmatpush1.msra.mxu0 %v1640
    %1705 = vmatprep.subr.mxu0 0.0
    %1706 = vmatpush1.msra.mxu0 0.0
    %1707 = vmatprep.subr.mxu0 0.0
    %1708 = vmatpush1.msra.mxu0 0.0
    %1709 = vmatprep.subr.mxu0 0.0
    %1710 = vmatpush1.msra.mxu0 0.0
    %1711 = vmatprep.subr.mxu0 0.0
    %1712 = vmatpush1.msra.mxu0 0.0
    %1713 = vmatprep.subr.mxu0 0.0
    %1714 = vmatpush1.msra.mxu0 0.0
    %1715 = vmatprep.subr.mxu0 0.0
    %1716 = vmatpush1.msra.mxu0 0.0
    %1717 = vmatprep.subr.mxu0 0.0
    %1718 = vmatpush1.msra.mxu0 0.0
    %1719 = vmatprep.subr.mxu0 0.0
    %1720 = vmatpush1.msra.mxu0 0.0
    %1721 = vmatprep.subr.mxu0 0.0
    %1722 = vmatpush1.msra.mxu0 0.0
    %1723 = vmatprep.subr.mxu0 0.0
    %1724 = vmatpush1.msra.mxu0 0.0
    %1725 = vmatprep.subr.mxu0 0.0
    %1726 = vmatpush1.msra.mxu0 0.0
    %1727 = vmatprep.subr.mxu0 0.0
    %1728 = vmatpush1.msra.mxu0 0.0
    %1729 = vmatprep.subr.mxu0 0.0
    %1730 = vmatpush1.msra.mxu0 0.0
    %1731 = vmatprep.subr.mxu0 0.0
    %1732 = vmatpush1.msra.mxu0 0.0
    %1733 = vmatprep.subr.mxu0 0.0
    %1734 = vmatpush1.msra.mxu0 0.0
    %1735 = vmatprep.subr.mxu0 0.0
    %1736 = vmatpush1.msra.mxu0 0.0
    %1737 = vmatprep.subr.mxu0 0.0
    %1738 = vmatpush1.msra.mxu0 0.0
    %1739 = vmatprep.subr.mxu0 0.0
    %1740 = vmatpush1.msra.mxu0 0.0
    %1741 = vmatprep.subr.mxu0 0.0
    %1742 = vmatpush1.msra.mxu0 0.0
    %1743 = vmatprep.subr.mxu0 0.0
    %1744 = vmatpush1.msra.mxu0 0.0
    %1745 = vmatprep.subr.mxu0 0.0
    %1746 = vmatpush1.msra.mxu0 0.0
    %1747 = vmatprep.subr.mxu0 0.0
    %1748 = vmatpush1.msra.mxu0 0.0
    %1749 = vmatprep.subr.mxu0 0.0
    %1750 = vmatpush1.msra.mxu0 0.0
    %1751 = vmatprep.subr.mxu0 0.0
    %1752 = vmatpush1.msra.mxu0 0.0
    %1753 = vmatprep.subr.mxu0 0.0
    %1754 = vmatpush1.msra.mxu0 0.0
    %1755 = vmatprep.subr.mxu0 0.0
    %1756 = vmatpush1.msra.mxu0 0.0
    %1757 = vmatprep.subr.mxu0 0.0
    %1758 = vmatpush1.msra.mxu0 0.0
    %1759 = vmatprep.subr.mxu0 0.0
    %1760 = vmatpush1.msra.mxu0 0.0
    %1761 = vmatprep.mubr.f32.mxu0 0.0
    %1762 = vmatmul.mubr.f32.gmra.mrb[0].mxu0 %v1650
    %v1763 = vpop.f32.mrb[0].mxu0
    %v1764 = vadd.f32 %v1647, %v1763
    %v1765 = vpop.f32.mrb[0].mxu0
    %1766 = vmatprep.mubr.f32.mxu0 0.0
    %1767 = vmatmul.mubr.f32.gmra.mrb[0].mxu0 %v1653
    %v1768 = vpop.f32.mrb[0].mxu0
    %v1769 = vadd.f32 %v1647, %v1768
    %v1770 = vpop.f32.mrb[0].mxu0
    %1771 = vmatprep.mubr.f32.mxu0 0.0
    %1772 = vmatmul.mubr.f32.gmra.mrb[0].mxu0 %v1656
    %v1773 = vpop.f32.mrb[0].mxu0
    %v1774 = vadd.f32 %v1647, %v1773
    %v1775 = vpop.f32.mrb[0].mxu0
    %1776 = vmatprep.mubr.f32.mxu0 0.0
    %1777 = vmatmul.mubr.f32.gmra.mrb[0].mxu0 %v1659
    %v1778 = vpop.f32.mrb[0].mxu0
    %v1779 = vadd.f32 %v1647, %v1778
    %v1780 = vpop.f32.mrb[0].mxu0
    %1781 = vmatprep.mubr.f32.mxu0 0.0
    %1782 = vmatmul.mubr.f32.gmra.mrb[0].mxu0 %v1662
    %v1783 = vpop.f32.mrb[0].mxu0
    %v1784 = vadd.f32 %v1647, %v1783
    %v1785 = vpop.f32.mrb[0].mxu0
    %1786 = vmatprep.mubr.f32.mxu0 0.0
    %1787 = vmatmul.mubr.f32.gmra.mrb[0].mxu0 %v1665
    %v1788 = vpop.f32.mrb[0].mxu0
    %v1789 = vadd.f32 %v1647, %v1788
    %v1790 = vpop.f32.mrb[0].mxu0
    %1791 = vmatprep.mubr.f32.mxu0 0.0
    %1792 = vmatmul.mubr.f32.gmra.mrb[0].mxu0 %v1668
    %v1793 = vpop.f32.mrb[0].mxu0
    %v1794 = vadd.f32 %v1647, %v1793
    %v1795 = vpop.f32.mrb[0].mxu0
    %1796 = vmatprep.mubr.f32.mxu0 0.0
    %1797 = vmatmul.mubr.f32.gmra.mrb[0].mxu0 %v1671
    %v1798 = vpop.f32.mrb[0].mxu0
    %v1799 = vadd.f32 %v1647, %v1798
    %v1800 = vpop.f32.mrb[0].mxu0
    %1801 = vmatprep.mubr.f32.mxu0 0.0
    %1802 = vmatmul.mubr.f32.gmra.mrb[0].mxu0 %v1674
    %v1803 = vpop.f32.mrb[0].mxu0
    %v1804 = vadd.f32 %v1647, %v1803
    %v1805 = vpop.f32.mrb[0].mxu0
    %1806 = vmatprep.mubr.f32.mxu0 0.0
    %1807 = vmatmul.mubr.f32.gmra.mrb[0].mxu0 %v1677
    %v1808 = vpop.f32.mrb[0].mxu0
    %v1809 = vadd.f32 %v1647, %v1808
    %v1810 = vpop.f32.mrb[0].mxu0
    %1811 = vmatprep.mubr.f32.mxu0 0.0
    %1812 = vmatmul.mubr.f32.gmra.mrb[0].mxu0 %v1680
    %v1813 = vpop.f32.mrb[0].mxu0
    %v1814 = vadd.f32 %v1647, %v1813
    %v1815 = vpop.f32.mrb[0].mxu0
    %1816 = vmatprep.mubr.f32.mxu0 0.0
    %1817 = vmatmul.mubr.f32.gmra.mrb[0].mxu0 %v1683
    %v1818 = vpop.f32.mrb[0].mxu0
    %v1819 = vadd.f32 %v1647, %v1818
    %v1820 = vpop.f32.mrb[0].mxu0
    %1821 = vmatprep.mubr.f32.mxu0 0.0
    %1822 = vmatmul.mubr.f32.gmra.mrb[0].mxu0 %v1686
    %v1823 = vpop.f32.mrb[0].mxu0
    %v1824 = vadd.f32 %v1647, %v1823
    %v1825 = vpop.f32.mrb[0].mxu0
    %1826 = vmatprep.mubr.f32.mxu0 0.0
    %1827 = vmatmul.mubr.f32.gmra.mrb[0].mxu0 %v1689
    %v1828 = vpop.f32.mrb[0].mxu0
    %v1829 = vadd.f32 %v1647, %v1828
    %v1830 = vpop.f32.mrb[0].mxu0
    %1831 = vmatprep.mubr.f32.mxu0 0.0
    %1832 = vmatmul.mubr.f32.gmra.mrb[0].mxu0 %v1692
    %v1833 = vpop.f32.mrb[0].mxu0
    %v1834 = vadd.f32 %v1647, %v1833
    %v1835 = vpop.f32.mrb[0].mxu0
    %1836 = vmatprep.mubr.f32.mxu0 0.0
    %1837 = vmatmul.mubr.f32.gmra.mrb[0].mxu0 %v1695
    %v1838 = vpop.f32.mrb[0].mxu0
    %v1839 = vadd.f32 %v1647, %v1838
    %v1840 = vpop.f32.mrb[0].mxu0
    %1841 = vdwg.mxu0
    %s1842 = scalar_lea.vmem %s5, 32
    %v1843 = vld [vmem:[%s1842] sm:$0xff]
    %v1844 = vld [vmem:[%s1842 + $0x8] sm:$0xff]
    %v1845 = vld [vmem:[%s1842 + $0x10] sm:$0xff]
    %v1846 = vld [vmem:[%s1842 + $0x18] sm:$0xff]
    %v1848 = vsel %vm523, %v1457, 0
    %v1851 = vsel %vm523, %v1458, 0
    %v1854 = vsel %vm523, %v1459, 0
    %v1857 = vsel %vm523, %v1460, 0
    %1859 = vmatprep.subr.mxu0 0.0
    %1860 = vmatpush1.msra.mxu0 %v1843
    %1861 = vmatprep.subr.mxu0 0.0
    %1862 = vmatpush1.msra.mxu0 %v1844
    %1863 = vmatprep.subr.mxu0 0.0
    %1864 = vmatpush1.msra.mxu0 %v1845
    %1865 = vmatprep.subr.mxu0 0.0
    %1866 = vmatpush1.msra.mxu0 %v1846
    %1867 = vmatprep.subr.mxu0 0.0
    %1868 = vmatpush1.msra.mxu0 0.0
    %1869 = vmatprep.subr.mxu0 0.0
    %1870 = vmatpush1.msra.mxu0 0.0
    %1871 = vmatprep.subr.mxu0 0.0
    %1872 = vmatpush1.msra.mxu0 0.0
    %1873 = vmatprep.subr.mxu0 0.0
    %1874 = vmatpush1.msra.mxu0 0.0
    %1875 = vmatprep.subr.mxu0 0.0
    %1876 = vmatpush1.msra.mxu0 0.0
    %1877 = vmatprep.subr.mxu0 0.0
    %1878 = vmatpush1.msra.mxu0 0.0
    %1879 = vmatprep.subr.mxu0 0.0
    %1880 = vmatpush1.msra.mxu0 0.0
    %1881 = vmatprep.subr.mxu0 0.0
    %1882 = vmatpush1.msra.mxu0 0.0
    %1883 = vmatprep.subr.mxu0 0.0
    %1884 = vmatpush1.msra.mxu0 0.0
    %1885 = vmatprep.subr.mxu0 0.0
    %1886 = vmatpush1.msra.mxu0 0.0
    %1887 = vmatprep.subr.mxu0 0.0
    %1888 = vmatpush1.msra.mxu0 0.0
    %1889 = vmatprep.subr.mxu0 0.0
    %1890 = vmatpush1.msra.mxu0 0.0
    %1891 = vmatprep.subr.mxu0 0.0
    %1892 = vmatpush1.msra.mxu0 0.0
    %1893 = vmatprep.subr.mxu0 0.0
    %1894 = vmatpush1.msra.mxu0 0.0
    %1895 = vmatprep.subr.mxu0 0.0
    %1896 = vmatpush1.msra.mxu0 0.0
    %1897 = vmatprep.subr.mxu0 0.0
    %1898 = vmatpush1.msra.mxu0 0.0
    %1899 = vmatprep.subr.mxu0 0.0
    %1900 = vmatpush1.msra.mxu0 0.0
    %1901 = vmatprep.subr.mxu0 0.0
    %1902 = vmatpush1.msra.mxu0 0.0
    %1903 = vmatprep.subr.mxu0 0.0
    %1904 = vmatpush1.msra.mxu0 0.0
    %1905 = vmatprep.subr.mxu0 0.0
    %1906 = vmatpush1.msra.mxu0 0.0
    %1907 = vmatprep.subr.mxu0 0.0
    %1908 = vmatpush1.msra.mxu0 0.0
    %1909 = vmatprep.subr.mxu0 0.0
    %1910 = vmatpush1.msra.mxu0 0.0
    %1911 = vmatprep.subr.mxu0 0.0
    %1912 = vmatpush1.msra.mxu0 0.0
    %1913 = vmatprep.subr.mxu0 0.0
    %1914 = vmatpush1.msra.mxu0 0.0
    %1915 = vmatprep.subr.mxu0 0.0
    %1916 = vmatpush1.msra.mxu0 0.0
    %1917 = vmatprep.subr.mxu0 0.0
    %1918 = vmatpush1.msra.mxu0 0.0
    %1919 = vmatprep.subr.mxu0 0.0
    %1920 = vmatpush1.msra.mxu0 0.0
    %1921 = vmatprep.subr.mxu0 0.0
    %1922 = vmatpush1.msra.mxu0 0.0
    %1923 = vmatprep.mubr.f32.mxu0 0.0
    %1924 = vmatmul.mubr.f32.gmra.mrb[0].mxu0 %v1848
    %v1925 = vpop.f32.mrb[0].mxu0
    %v1926 = vadd.f32 0.0, %v1925
    %v1927 = vpop.f32.mrb[0].mxu0
    %1928 = vmatprep.mubr.f32.mxu0 0.0
    %1929 = vmatmul.mubr.f32.gmra.mrb[0].mxu0 %v1851
    %v1930 = vpop.f32.mrb[0].mxu0
    %v1931 = vadd.f32 0.0, %v1930
    %v1932 = vpop.f32.mrb[0].mxu0
    %1933 = vmatprep.mubr.f32.mxu0 0.0
    %1934 = vmatmul.mubr.f32.gmra.mrb[0].mxu0 %v1854
    %v1935 = vpop.f32.mrb[0].mxu0
    %v1936 = vadd.f32 0.0, %v1935
    %v1937 = vpop.f32.mrb[0].mxu0
    %1938 = vmatprep.mubr.f32.mxu0 0.0
    %1939 = vmatmul.mubr.f32.gmra.mrb[0].mxu0 %v1857
    %v1940 = vpop.f32.mrb[0].mxu0
    %v1941 = vadd.f32 0.0, %v1940
    %v1942 = vpop.f32.mrb[0].mxu0
    %1943 = vdwg.mxu0
    %1944 = vmatprep.subr.mxu0 0.0
    %1945 = vmatpush1.msra.mxu0 %v1926
    %1946 = vmatprep.subr.mxu0 0.0
    %1947 = vmatpush1.msra.mxu0 %v1931
    %1948 = vmatprep.subr.mxu0 0.0
    %1949 = vmatpush1.msra.mxu0 %v1936
    %1950 = vmatprep.subr.mxu0 0.0
    %1951 = vmatpush1.msra.mxu0 %v1941
    %1952 = vmatprep.subr.mxu0 0.0
    %1953 = vmatpush1.msra.mxu0 0.0
    %1954 = vmatprep.subr.mxu0 0.0
    %1955 = vmatpush1.msra.mxu0 0.0
    %1956 = vmatprep.subr.mxu0 0.0
    %1957 = vmatpush1.msra.mxu0 0.0
    %1958 = vmatprep.subr.mxu0 0.0
    %1959 = vmatpush1.msra.mxu0 0.0
    %1960 = vmatprep.subr.mxu0 0.0
    %1961 = vmatpush1.msra.mxu0 0.0
    %1962 = vmatprep.subr.mxu0 0.0
    %1963 = vmatpush1.msra.mxu0 0.0
    %1964 = vmatprep.subr.mxu0 0.0
    %1965 = vmatpush1.msra.mxu0 0.0
    %1966 = vmatprep.subr.mxu0 0.0
    %1967 = vmatpush1.msra.mxu0 0.0
    %1968 = vmatprep.subr.mxu0 0.0
    %1969 = vmatpush1.msra.mxu0 0.0
    %1970 = vmatprep.subr.mxu0 0.0
    %1971 = vmatpush1.msra.mxu0 0.0
    %1972 = vmatprep.subr.mxu0 0.0
    %1973 = vmatpush1.msra.mxu0 0.0
    %1974 = vmatprep.subr.mxu0 0.0
    %1975 = vmatpush1.msra.mxu0 0.0
    %1976 = vmatprep.subr.mxu0 0.0
    %1977 = vmatpush1.msra.mxu0 0.0
    %1978 = vmatprep.subr.mxu0 0.0
    %1979 = vmatpush1.msra.mxu0 0.0
    %1980 = vmatprep.subr.mxu0 0.0
    %1981 = vmatpush1.msra.mxu0 0.0
    %1982 = vmatprep.subr.mxu0 0.0
    %1983 = vmatpush1.msra.mxu0 0.0
    %1984 = vmatprep.subr.mxu0 0.0
    %1985 = vmatpush1.msra.mxu0 0.0
    %1986 = vmatprep.subr.mxu0 0.0
    %1987 = vmatpush1.msra.mxu0 0.0
    %1988 = vmatprep.subr.mxu0 0.0
    %1989 = vmatpush1.msra.mxu0 0.0
    %1990 = vmatprep.subr.mxu0 0.0
    %1991 = vmatpush1.msra.mxu0 0.0
    %1992 = vmatprep.subr.mxu0 0.0
    %1993 = vmatpush1.msra.mxu0 0.0
    %1994 = vmatprep.subr.mxu0 0.0
    %1995 = vmatpush1.msra.mxu0 0.0
    %1996 = vmatprep.subr.mxu0 0.0
    %1997 = vmatpush1.msra.mxu0 0.0
    %1998 = vmatprep.subr.mxu0 0.0
    %1999 = vmatpush1.msra.mxu0 0.0
    %2000 = vmatprep.subr.mxu0 0.0
    %2001 = vmatpush1.msra.mxu0 0.0
    %2002 = vmatprep.subr.mxu0 0.0
    %2003 = vmatpush1.msra.mxu0 0.0
    %2004 = vmatprep.subr.mxu0 0.0
    %2005 = vmatpush1.msra.mxu0 0.0
    %2006 = vmatprep.subr.mxu0 0.0
    %2007 = vmatpush1.msra.mxu0 0.0
    %2008 = vmatprep.mubr.f32.mxu0 0.0
    %2009 = vmatmul.mubr.f32.gmra.mrb[0].mxu0 %v819
    %v2010 = vpop.f32.mrb[0].mxu0
    %v2011 = vadd.f32 0.0, %v2010
    %v2012 = vpop.f32.mrb[0].mxu0
    %2013 = vmatprep.mubr.f32.mxu0 0.0
    %2014 = vmatmul.mubr.f32.gmra.mrb[0].mxu0 %v822
    %v2015 = vpop.f32.mrb[0].mxu0
    %v2016 = vadd.f32 0.0, %v2015
    %v2017 = vpop.f32.mrb[0].mxu0
    %2018 = vmatprep.mubr.f32.mxu0 0.0
    %2019 = vmatmul.mubr.f32.gmra.mrb[0].mxu0 %v825
    %v2020 = vpop.f32.mrb[0].mxu0
    %v2021 = vadd.f32 0.0, %v2020
    %v2022 = vpop.f32.mrb[0].mxu0
    %2023 = vmatprep.mubr.f32.mxu0 0.0
    %2024 = vmatmul.mubr.f32.gmra.mrb[0].mxu0 %v828
    %v2025 = vpop.f32.mrb[0].mxu0
    %v2026 = vadd.f32 0.0, %v2025
    %v2027 = vpop.f32.mrb[0].mxu0
    %2028 = vmatprep.mubr.f32.mxu0 0.0
    %2029 = vmatmul.mubr.f32.gmra.mrb[0].mxu0 %v831
    %v2030 = vpop.f32.mrb[0].mxu0
    %v2031 = vadd.f32 0.0, %v2030
    %v2032 = vpop.f32.mrb[0].mxu0
    %2033 = vmatprep.mubr.f32.mxu0 0.0
    %2034 = vmatmul.mubr.f32.gmra.mrb[0].mxu0 %v834
    %v2035 = vpop.f32.mrb[0].mxu0
    %v2036 = vadd.f32 0.0, %v2035
    %v2037 = vpop.f32.mrb[0].mxu0
    %2038 = vmatprep.mubr.f32.mxu0 0.0
    %2039 = vmatmul.mubr.f32.gmra.mrb[0].mxu0 %v837
    %v2040 = vpop.f32.mrb[0].mxu0
    %v2041 = vadd.f32 0.0, %v2040
    %v2042 = vpop.f32.mrb[0].mxu0
    %2043 = vmatprep.mubr.f32.mxu0 0.0
    %2044 = vmatmul.mubr.f32.gmra.mrb[0].mxu0 %v840
    %v2045 = vpop.f32.mrb[0].mxu0
    %v2046 = vadd.f32 0.0, %v2045
    %v2047 = vpop.f32.mrb[0].mxu0
    %2048 = vmatprep.mubr.f32.mxu0 0.0
    %2049 = vmatmul.mubr.f32.gmra.mrb[0].mxu0 %v843
    %v2050 = vpop.f32.mrb[0].mxu0
    %v2051 = vadd.f32 0.0, %v2050
    %v2052 = vpop.f32.mrb[0].mxu0
    %2053 = vmatprep.mubr.f32.mxu0 0.0
    %2054 = vmatmul.mubr.f32.gmra.mrb[0].mxu0 %v846
    %v2055 = vpop.f32.mrb[0].mxu0
    %v2056 = vadd.f32 0.0, %v2055
    %v2057 = vpop.f32.mrb[0].mxu0
    %2058 = vmatprep.mubr.f32.mxu0 0.0
    %2059 = vmatmul.mubr.f32.gmra.mrb[0].mxu0 %v849
    %v2060 = vpop.f32.mrb[0].mxu0
    %v2061 = vadd.f32 0.0, %v2060
    %v2062 = vpop.f32.mrb[0].mxu0
    %2063 = vmatprep.mubr.f32.mxu0 0.0
    %2064 = vmatmul.mubr.f32.gmra.mrb[0].mxu0 %v852
    %v2065 = vpop.f32.mrb[0].mxu0
    %v2066 = vadd.f32 0.0, %v2065
    %v2067 = vpop.f32.mrb[0].mxu0
    %2068 = vmatprep.mubr.f32.mxu0 0.0
    %2069 = vmatmul.mubr.f32.gmra.mrb[0].mxu0 %v855
    %v2070 = vpop.f32.mrb[0].mxu0
    %v2071 = vadd.f32 0.0, %v2070
    %v2072 = vpop.f32.mrb[0].mxu0
    %2073 = vmatprep.mubr.f32.mxu0 0.0
    %2074 = vmatmul.mubr.f32.gmra.mrb[0].mxu0 %v858
    %v2075 = vpop.f32.mrb[0].mxu0
    %v2076 = vadd.f32 0.0, %v2075
    %v2077 = vpop.f32.mrb[0].mxu0
    %2078 = vmatprep.mubr.f32.mxu0 0.0
    %2079 = vmatmul.mubr.f32.gmra.mrb[0].mxu0 %v861
    %v2080 = vpop.f32.mrb[0].mxu0
    %v2081 = vadd.f32 0.0, %v2080
    %v2082 = vpop.f32.mrb[0].mxu0
    %2083 = vmatprep.mubr.f32.mxu0 0.0
    %2084 = vmatmul.mubr.f32.gmra.mrb[0].mxu0 %v864
    %v2085 = vpop.f32.mrb[0].mxu0
    %v2086 = vadd.f32 0.0, %v2085
    %v2087 = vpop.f32.mrb[0].mxu0
    %2088 = vdwg.mxu0
    %v2089 = vmul.f32 %v2011, %v1764
    %v2090 = vmul.f32 %v2016, %v1769
    %v2091 = vmul.f32 %v2021, %v1774
    %v2092 = vmul.f32 %v2026, %v1779
    %v2093 = vmul.f32 %v2031, %v1784
    %v2094 = vmul.f32 %v2036, %v1789
    %v2095 = vmul.f32 %v2041, %v1794
    %v2096 = vmul.f32 %v2046, %v1799
    %v2097 = vmul.f32 %v2051, %v1804
    %v2098 = vmul.f32 %v2056, %v1809
    %v2099 = vmul.f32 %v2061, %v1814
    %v2100 = vmul.f32 %v2066, %v1819
    %v2101 = vmul.f32 %v2071, %v1824
    %v2102 = vmul.f32 %v2076, %v1829
    %v2103 = vmul.f32 %v2081, %v1834
    %v2104 = vmul.f32 %v2086, %v1839
    %s2105 = scalar_lea.vmem %s10, 1
    %v2106 = vld [vmem:[%s2105] sm:$0x1]
    %v2108 = vlaneseq
    %v2109 = vshrl.u32 %v2108, 7
    %v2110 = vsub.s32 0, %v2109
    %v2111 = vrot.slane %v2106, %v2110
    %v2113 = vmul.f32 %v2089, %v2111
    %v2114 = vmul.f32 %v2090, %v2111
    %v2115 = vmul.f32 %v2091, %v2111
    %v2116 = vmul.f32 %v2092, %v2111
    %v2117 = vmul.f32 %v2093, %v2111
    %v2118 = vmul.f32 %v2094, %v2111
    %v2119 = vmul.f32 %v2095, %v2111
    %v2120 = vmul.f32 %v2096, %v2111
    %v2121 = vmul.f32 %v2097, %v2111
    %v2122 = vmul.f32 %v2098, %v2111
    %v2123 = vmul.f32 %v2099, %v2111
    %v2124 = vmul.f32 %v2100, %v2111
    %v2125 = vmul.f32 %v2101, %v2111
    %v2126 = vmul.f32 %v2102, %v2111
    %v2127 = vmul.f32 %v2103, %v2111
    %v2128 = vmul.f32 %v2104, %v2111
    %v2129 = vsel %vm523, %v2113, 0.0
    %2130 = vadd.xlane.f32.xlu0 %v2129
    %v2131 = vpop.xlane.xlu0 %2130
    %v2132 = vsel %vm523, %v2114, 0.0
    %2133 = vadd.xlane.f32.xlu0 %v2132
    %v2134 = vpop.xlane.xlu0 %2133
    %v2135 = vsel %vm523, %v2115, 0.0
    %2136 = vadd.xlane.f32.xlu0 %v2135
    %v2137 = vpop.xlane.xlu0 %2136
    %v2138 = vsel %vm523, %v2116, 0.0
    %2139 = vadd.xlane.f32.xlu0 %v2138
    %v2140 = vpop.xlane.xlu0 %2139
    %v2141 = vsel %vm523, %v2117, 0.0
    %2142 = vadd.xlane.f32.xlu0 %v2141
    %v2143 = vpop.xlane.xlu0 %2142
    %v2144 = vsel %vm523, %v2118, 0.0
    %2145 = vadd.xlane.f32.xlu0 %v2144
    %v2146 = vpop.xlane.xlu0 %2145
    %v2147 = vsel %vm523, %v2119, 0.0
    %2148 = vadd.xlane.f32.xlu0 %v2147
    %v2149 = vpop.xlane.xlu0 %2148
    %v2150 = vsel %vm523, %v2120, 0.0
    %2151 = vadd.xlane.f32.xlu0 %v2150
    %v2152 = vpop.xlane.xlu0 %2151
    %v2153 = vsel %vm523, %v2121, 0.0
    %2154 = vadd.xlane.f32.xlu0 %v2153
    %v2155 = vpop.xlane.xlu0 %2154
    %v2156 = vsel %vm523, %v2122, 0.0
    %2157 = vadd.xlane.f32.xlu0 %v2156
    %v2158 = vpop.xlane.xlu0 %2157
    %v2159 = vsel %vm523, %v2123, 0.0
    %2160 = vadd.xlane.f32.xlu0 %v2159
    %v2161 = vpop.xlane.xlu0 %2160
    %v2162 = vsel %vm523, %v2124, 0.0
    %2163 = vadd.xlane.f32.xlu0 %v2162
    %v2164 = vpop.xlane.xlu0 %2163
    %v2165 = vsel %vm523, %v2125, 0.0
    %2166 = vadd.xlane.f32.xlu0 %v2165
    %v2167 = vpop.xlane.xlu0 %2166
    %v2168 = vsel %vm523, %v2126, 0.0
    %2169 = vadd.xlane.f32.xlu0 %v2168
    %v2170 = vpop.xlane.xlu0 %2169
    %v2171 = vsel %vm523, %v2127, 0.0
    %2172 = vadd.xlane.f32.xlu0 %v2171
    %v2173 = vpop.xlane.xlu0 %2172
    %v2174 = vsel %vm523, %v2128, 0.0
    %2175 = vadd.xlane.f32.xlu0 %v2174
    %v2176 = vpop.xlane.xlu0 %2175
    %v2177 = vmax.f32 %v2131, %v2143
    %v2178 = vmax.f32 %v2134, %v2146
    %v2179 = vmax.f32 %v2137, %v2149
    %v2180 = vmax.f32 %v2140, %v2152
    %v2181 = vmax.f32 %v2177, %v2155
    %v2182 = vmax.f32 %v2178, %v2158
    %v2183 = vmax.f32 %v2179, %v2161
    %v2184 = vmax.f32 %v2180, %v2164
    %v2185 = vmax.f32 %v2181, %v2167
    %v2186 = vmax.f32 %v2182, %v2170
    %v2187 = vmax.f32 %v2183, %v2173
    %v2188 = vmax.f32 %v2184, %v2176
    %v2189 = vmax.f32 %v2185, %v2186
    %v2190 = vmax.f32 %v2187, %v2188
    %v2191 = vmax.f32 %v2189, %v2190
    %v2192 = vrot.slane %v2191, 4
    %v2193 = vmax.f32 %v2191, %v2192
    %v2194 = vrot.slane %v2193, 2
    %v2195 = vmax.f32 %v2193, %v2194
    %v2196 = vrot.slane %v2195, 1
    %v2197 = vmax.f32 %v2195, %v2196
    %s2198 = vtos %v2197
    %v2199 = vstv %s2198
    %v2200 = vsub.f32 %v2131, %v2199
    %v2201 = vsub.f32 %v2134, %v2199
    %v2202 = vsub.f32 %v2137, %v2199
    %v2203 = vsub.f32 %v2140, %v2199
    %v2204 = vsub.f32 %v2143, %v2199
    %v2205 = vsub.f32 %v2146, %v2199
    %v2206 = vsub.f32 %v2149, %v2199
    %v2207 = vsub.f32 %v2152, %v2199
    %v2208 = vsub.f32 %v2155, %v2199
    %v2209 = vsub.f32 %v2158, %v2199
    %v2210 = vsub.f32 %v2161, %v2199
    %v2211 = vsub.f32 %v2164, %v2199
    %v2212 = vsub.f32 %v2167, %v2199
    %v2213 = vsub.f32 %v2170, %v2199
    %v2214 = vsub.f32 %v2173, %v2199
    %v2215 = vsub.f32 %v2176, %v2199
    %v2216 = vmul.f32 %v2200, 1.442695
    %v2217 = vpow.pop %v2216
    %v2218 = vmul.f32 %v2201, 1.442695
    %v2219 = vpow.pop %v2218
    %v2220 = vmul.f32 %v2202, 1.442695
    %v2221 = vpow.pop %v2220
    %v2222 = vmul.f32 %v2203, 1.442695
    %v2223 = vpow.pop %v2222
    %v2224 = vmul.f32 %v2204, 1.442695
    %v2225 = vpow.pop %v2224
    %v2226 = vmul.f32 %v2205, 1.442695
    %v2227 = vpow.pop %v2226
    %v2228 = vmul.f32 %v2206, 1.442695
    %v2229 = vpow.pop %v2228
    %v2230 = vmul.f32 %v2207, 1.442695
    %v2231 = vpow.pop %v2230
    %v2232 = vmul.f32 %v2208, 1.442695
    %v2233 = vpow.pop %v2232
    %v2234 = vmul.f32 %v2209, 1.442695
    %v2235 = vpow.pop %v2234
    %v2236 = vmul.f32 %v2210, 1.442695
    %v2237 = vpow.pop %v2236
    %v2238 = vmul.f32 %v2211, 1.442695
    %v2239 = vpow.pop %v2238
    %v2240 = vmul.f32 %v2212, 1.442695
    %v2241 = vpow.pop %v2240
    %v2242 = vmul.f32 %v2213, 1.442695
    %v2243 = vpow.pop %v2242
    %v2244 = vmul.f32 %v2214, 1.442695
    %v2245 = vpow.pop %v2244
    %v2246 = vmul.f32 %v2215, 1.442695
    %v2247 = vpow.pop %v2246
    %v2248 = vadd.f32 %v2217, %v2225
    %v2249 = vadd.f32 %v2219, %v2227
    %v2250 = vadd.f32 %v2221, %v2229
    %v2251 = vadd.f32 %v2223, %v2231
    %v2252 = vadd.f32 %v2248, %v2233
    %v2253 = vadd.f32 %v2249, %v2235
    %v2254 = vadd.f32 %v2250, %v2237
    %v2255 = vadd.f32 %v2251, %v2239
    %v2256 = vadd.f32 %v2252, %v2241
    %v2257 = vadd.f32 %v2253, %v2243
    %v2258 = vadd.f32 %v2254, %v2245
    %v2259 = vadd.f32 %v2255, %v2247
    %v2260 = vrcp.pop %v2256
    %v2261 = vmul.f32 1.0, %v2260
    %v2262 = vrcp.pop %v2257
    %v2263 = vmul.f32 1.0, %v2262
    %v2264 = vrcp.pop %v2258
    %v2265 = vmul.f32 1.0, %v2264
    %v2266 = vrcp.pop %v2259
    %v2267 = vmul.f32 1.0, %v2266
    %v2268 = vmul.f32 %v2217, %v2261
    %v2269 = vmul.f32 %v2219, %v2263
    %v2270 = vmul.f32 %v2221, %v2265
    %v2271 = vmul.f32 %v2223, %v2267
    %v2272 = vmul.f32 %v2268, %v2089
    %v2273 = vmul.f32 %v2269, %v2090
    %v2274 = vmul.f32 %v2270, %v2091
    %v2275 = vmul.f32 %v2271, %v2092
    %v2276 = vmul.f32 %v2225, %v2261
    %v2277 = vmul.f32 %v2227, %v2263
    %v2278 = vmul.f32 %v2229, %v2265
    %v2279 = vmul.f32 %v2231, %v2267
    %v2280 = vmul.f32 %v2276, %v2093
    %v2281 = vmul.f32 %v2277, %v2094
    %v2282 = vmul.f32 %v2278, %v2095
    %v2283 = vmul.f32 %v2279, %v2096
    %v2284 = vadd.f32 %v2272, %v2280
    %v2285 = vadd.f32 %v2273, %v2281
    %v2286 = vadd.f32 %v2274, %v2282
    %v2287 = vadd.f32 %v2275, %v2283
    %v2288 = vmul.f32 %v2233, %v2261
    %v2289 = vmul.f32 %v2235, %v2263
    %v2290 = vmul.f32 %v2237, %v2265
    %v2291 = vmul.f32 %v2239, %v2267
    %v2292 = vmul.f32 %v2288, %v2097
    %v2293 = vmul.f32 %v2289, %v2098
    %v2294 = vmul.f32 %v2290, %v2099
    %v2295 = vmul.f32 %v2291, %v2100
    %v2296 = vadd.f32 %v2284, %v2292
    %v2297 = vadd.f32 %v2285, %v2293
    %v2298 = vadd.f32 %v2286, %v2294
    %v2299 = vadd.f32 %v2287, %v2295
    %v2300 = vmul.f32 %v2241, %v2261
    %v2301 = vmul.f32 %v2243, %v2263
    %v2302 = vmul.f32 %v2245, %v2265
    %v2303 = vmul.f32 %v2247, %v2267
    %v2304 = vmul.f32 %v2300, %v2101
    %v2305 = vmul.f32 %v2301, %v2102
    %v2306 = vmul.f32 %v2302, %v2103
    %v2307 = vmul.f32 %v2303, %v2104
    %v2308 = vadd.f32 %v2296, %v2304
    %v2309 = vadd.f32 %v2297, %v2305
    %v2310 = vadd.f32 %v2298, %v2306
    %v2311 = vadd.f32 %v2299, %v2307
    %s2312 = scalar_lea.vmem %s11, 32
    %v2313 = vld [vmem:[%s2312] sm:$0xff]
    %v2314 = vld [vmem:[%s2312 + $0x8] sm:$0xff]
    %v2315 = vld [vmem:[%s2312 + $0x10] sm:$0xff]
    %v2316 = vld [vmem:[%s2312 + $0x18] sm:$0xff]
    %s2317 = scalar_lea.vmem %s12, 1
    %v2318 = vld [vmem:[%s2317] sm:$0x1]
    %v2320 = vlaneseq
    %v2321 = vshrl.u32 %v2320, 7
    %v2322 = vsub.s32 0, %v2321
    %v2323 = vrot.slane %v2318, %v2322
    %v2326 = vsel %vm523, %v2308, 0
    %v2329 = vsel %vm523, %v2309, 0
    %v2332 = vsel %vm523, %v2310, 0
    %v2335 = vsel %vm523, %v2311, 0
    %2337 = vmatprep.subr.mxu0 0.0
    %2338 = vmatpush1.msra.mxu0 %v2313
    %2339 = vmatprep.subr.mxu0 0.0
    %2340 = vmatpush1.msra.mxu0 %v2314
    %2341 = vmatprep.subr.mxu0 0.0
    %2342 = vmatpush1.msra.mxu0 %v2315
    %2343 = vmatprep.subr.mxu0 0.0
    %2344 = vmatpush1.msra.mxu0 %v2316
    %2345 = vmatprep.subr.mxu0 0.0
    %2346 = vmatpush1.msra.mxu0 0.0
    %2347 = vmatprep.subr.mxu0 0.0
    %2348 = vmatpush1.msra.mxu0 0.0
    %2349 = vmatprep.subr.mxu0 0.0
    %2350 = vmatpush1.msra.mxu0 0.0
    %2351 = vmatprep.subr.mxu0 0.0
    %2352 = vmatpush1.msra.mxu0 0.0
    %2353 = vmatprep.subr.mxu0 0.0
    %2354 = vmatpush1.msra.mxu0 0.0
    %2355 = vmatprep.subr.mxu0 0.0
    %2356 = vmatpush1.msra.mxu0 0.0
    %2357 = vmatprep.subr.mxu0 0.0
    %2358 = vmatpush1.msra.mxu0 0.0
    %2359 = vmatprep.subr.mxu0 0.0
    %2360 = vmatpush1.msra.mxu0 0.0
    %2361 = vmatprep.subr.mxu0 0.0
    %2362 = vmatpush1.msra.mxu0 0.0
    %2363 = vmatprep.subr.mxu0 0.0
    %2364 = vmatpush1.msra.mxu0 0.0
    %2365 = vmatprep.subr.mxu0 0.0
    %2366 = vmatpush1.msra.mxu0 0.0
    %2367 = vmatprep.subr.mxu0 0.0
    %2368 = vmatpush1.msra.mxu0 0.0
    %2369 = vmatprep.subr.mxu0 0.0
    %2370 = vmatpush1.msra.mxu0 0.0
    %2371 = vmatprep.subr.mxu0 0.0
    %2372 = vmatpush1.msra.mxu0 0.0
    %2373 = vmatprep.subr.mxu0 0.0
    %2374 = vmatpush1.msra.mxu0 0.0
    %2375 = vmatprep.subr.mxu0 0.0
    %2376 = vmatpush1.msra.mxu0 0.0
    %2377 = vmatprep.subr.mxu0 0.0
    %2378 = vmatpush1.msra.mxu0 0.0
    %2379 = vmatprep.subr.mxu0 0.0
    %2380 = vmatpush1.msra.mxu0 0.0
    %2381 = vmatprep.subr.mxu0 0.0
    %2382 = vmatpush1.msra.mxu0 0.0
    %2383 = vmatprep.subr.mxu0 0.0
    %2384 = vmatpush1.msra.mxu0 0.0
    %2385 = vmatprep.subr.mxu0 0.0
    %2386 = vmatpush1.msra.mxu0 0.0
    %2387 = vmatprep.subr.mxu0 0.0
    %2388 = vmatpush1.msra.mxu0 0.0
    %2389 = vmatprep.subr.mxu0 0.0
    %2390 = vmatpush1.msra.mxu0 0.0
    %2391 = vmatprep.subr.mxu0 0.0
    %2392 = vmatpush1.msra.mxu0 0.0
    %2393 = vmatprep.subr.mxu0 0.0
    %2394 = vmatpush1.msra.mxu0 0.0
    %2395 = vmatprep.subr.mxu0 0.0
    %2396 = vmatpush1.msra.mxu0 0.0
    %2397 = vmatprep.subr.mxu0 0.0
    %2398 = vmatpush1.msra.mxu0 0.0
    %2399 = vmatprep.subr.mxu0 0.0
    %2400 = vmatpush1.msra.mxu0 0.0
    %2401 = vmatprep.mubr.f32.mxu0 0.0
    %2402 = vmatmul.mubr.f32.gmra.mrb[0].mxu0 %v2326
    %v2403 = vpop.f32.mrb[0].mxu0
    %v2404 = vadd.f32 %v2323, %v2403
    %v2405 = vpop.f32.mrb[0].mxu0
    %2406 = vmatprep.mubr.f32.mxu0 0.0
    %2407 = vmatmul.mubr.f32.gmra.mrb[0].mxu0 %v2329
    %v2408 = vpop.f32.mrb[0].mxu0
    %v2409 = vadd.f32 %v2323, %v2408
    %v2410 = vpop.f32.mrb[0].mxu0
    %2411 = vmatprep.mubr.f32.mxu0 0.0
    %2412 = vmatmul.mubr.f32.gmra.mrb[0].mxu0 %v2332
    %v2413 = vpop.f32.mrb[0].mxu0
    %v2414 = vadd.f32 %v2323, %v2413
    %v2415 = vpop.f32.mrb[0].mxu0
    %2416 = vmatprep.mubr.f32.mxu0 0.0
    %2417 = vmatmul.mubr.f32.gmra.mrb[0].mxu0 %v2335
    %v2418 = vpop.f32.mrb[0].mxu0
    %v2419 = vadd.f32 %v2323, %v2418
    %v2420 = vpop.f32.mrb[0].mxu0
    %2421 = vdwg.mxu0
    %v2422 = vtanh.pop %v2404
    %v2423 = vtanh.pop %v2409
    %v2424 = vtanh.pop %v2414
    %v2425 = vtanh.pop %v2419
    %s2426 = scalar_lea.vmem %s13, 32
    %v2427 = vld [vmem:[%s2426] sm:$0xff]
    %v2428 = vld [vmem:[%s2426 + $0x8] sm:$0xff]
    %v2429 = vld [vmem:[%s2426 + $0x10] sm:$0xff]
    %v2430 = vld [vmem:[%s2426 + $0x18] sm:$0xff]
    %v2432 = vsel %vm523, %v2422, 0
    %v2435 = vsel %vm523, %v2423, 0
    %v2438 = vsel %vm523, %v2424, 0
    %v2441 = vsel %vm523, %v2425, 0
    %2443 = vmatprep.subr.mxu0 0.0
    %2444 = vmatpush1.msra.mxu0 %v2427
    %2445 = vmatprep.subr.mxu0 0.0
    %2446 = vmatpush1.msra.mxu0 %v2428
    %2447 = vmatprep.subr.mxu0 0.0
    %2448 = vmatpush1.msra.mxu0 %v2429
    %2449 = vmatprep.subr.mxu0 0.0
    %2450 = vmatpush1.msra.mxu0 %v2430
    %2451 = vmatprep.subr.mxu0 0.0
    %2452 = vmatpush1.msra.mxu0 0.0
    %2453 = vmatprep.subr.mxu0 0.0
    %2454 = vmatpush1.msra.mxu0 0.0
    %2455 = vmatprep.subr.mxu0 0.0
    %2456 = vmatpush1.msra.mxu0 0.0
    %2457 = vmatprep.subr.mxu0 0.0
    %2458 = vmatpush1.msra.mxu0 0.0
    %2459 = vmatprep.subr.mxu0 0.0
    %2460 = vmatpush1.msra.mxu0 0.0
    %2461 = vmatprep.subr.mxu0 0.0
    %2462 = vmatpush1.msra.mxu0 0.0
    %2463 = vmatprep.subr.mxu0 0.0
    %2464 = vmatpush1.msra.mxu0 0.0
    %2465 = vmatprep.subr.mxu0 0.0
    %2466 = vmatpush1.msra.mxu0 0.0
    %2467 = vmatprep.subr.mxu0 0.0
    %2468 = vmatpush1.msra.mxu0 0.0
    %2469 = vmatprep.subr.mxu0 0.0
    %2470 = vmatpush1.msra.mxu0 0.0
    %2471 = vmatprep.subr.mxu0 0.0
    %2472 = vmatpush1.msra.mxu0 0.0
    %2473 = vmatprep.subr.mxu0 0.0
    %2474 = vmatpush1.msra.mxu0 0.0
    %2475 = vmatprep.subr.mxu0 0.0
    %2476 = vmatpush1.msra.mxu0 0.0
    %2477 = vmatprep.subr.mxu0 0.0
    %2478 = vmatpush1.msra.mxu0 0.0
    %2479 = vmatprep.subr.mxu0 0.0
    %2480 = vmatpush1.msra.mxu0 0.0
    %2481 = vmatprep.subr.mxu0 0.0
    %2482 = vmatpush1.msra.mxu0 0.0
    %2483 = vmatprep.subr.mxu0 0.0
    %2484 = vmatpush1.msra.mxu0 0.0
    %2485 = vmatprep.subr.mxu0 0.0
    %2486 = vmatpush1.msra.mxu0 0.0
    %2487 = vmatprep.subr.mxu0 0.0
    %2488 = vmatpush1.msra.mxu0 0.0
    %2489 = vmatprep.subr.mxu0 0.0
    %2490 = vmatpush1.msra.mxu0 0.0
    %2491 = vmatprep.subr.mxu0 0.0
    %2492 = vmatpush1.msra.mxu0 0.0
    %2493 = vmatprep.subr.mxu0 0.0
    %2494 = vmatpush1.msra.mxu0 0.0
    %2495 = vmatprep.subr.mxu0 0.0
    %2496 = vmatpush1.msra.mxu0 0.0
    %2497 = vmatprep.subr.mxu0 0.0
    %2498 = vmatpush1.msra.mxu0 0.0
    %2499 = vmatprep.subr.mxu0 0.0
    %2500 = vmatpush1.msra.mxu0 0.0
    %2501 = vmatprep.subr.mxu0 0.0
    %2502 = vmatpush1.msra.mxu0 0.0
    %2503 = vmatprep.subr.mxu0 0.0
    %2504 = vmatpush1.msra.mxu0 0.0
    %2505 = vmatprep.subr.mxu0 0.0
    %2506 = vmatpush1.msra.mxu0 0.0
    %2507 = vmatprep.mubr.f32.mxu0 0.0
    %2508 = vmatmul.mubr.f32.gmra.mrb[0].mxu0 %v2432
    %v2509 = vpop.f32.mrb[0].mxu0
    %v2510 = vadd.f32 0.0, %v2509
    %v2511 = vpop.f32.mrb[0].mxu0
    %2512 = vmatprep.mubr.f32.mxu0 0.0
    %2513 = vmatmul.mubr.f32.gmra.mrb[0].mxu0 %v2435
    %v2514 = vpop.f32.mrb[0].mxu0
    %v2515 = vadd.f32 0.0, %v2514
    %v2516 = vpop.f32.mrb[0].mxu0
    %2517 = vmatprep.mubr.f32.mxu0 0.0
    %2518 = vmatmul.mubr.f32.gmra.mrb[0].mxu0 %v2438
    %v2519 = vpop.f32.mrb[0].mxu0
    %v2520 = vadd.f32 0.0, %v2519
    %v2521 = vpop.f32.mrb[0].mxu0
    %2522 = vmatprep.mubr.f32.mxu0 0.0
    %2523 = vmatmul.mubr.f32.gmra.mrb[0].mxu0 %v2441
    %v2524 = vpop.f32.mrb[0].mxu0
    %v2525 = vadd.f32 0.0, %v2524
    %v2526 = vpop.f32.mrb[0].mxu0
    %2527 = vdwg.mxu0
    %v2528 = vadd.f32 %v1457, %v2510
    %v2529 = vadd.f32 %v1458, %v2515
    %v2530 = vadd.f32 %v1459, %v2520
    %v2531 = vadd.f32 %v1460, %v2525
    %s2532 = scalar_lea.vmem %s14, 1
    %v2533 = vld [vmem:[%s2532] sm:$0x1]
    %v2535 = vlaneseq
    %v2536 = vshrl.u32 %v2535, 7
    %v2537 = vsub.s32 0, %v2536
    %v2538 = vrot.slane %v2533, %v2537
    %v2540 = vadd.f32 %v2528, %v2538
    %v2541 = vadd.f32 %v2529, %v2538
    %v2542 = vadd.f32 %v2530, %v2538
    %v2543 = vadd.f32 %v2531, %v2538
    %v2544 = vmax.f32 %v2540, 0.0
    %v2545 = vmax.f32 %v2541, 0.0
    %v2546 = vmax.f32 %v2542, 0.0
    %v2547 = vmax.f32 %v2543, 0.0
    %v2548 = vld [vmem:[%s15] sm:$0xff]
    %v2549 = vld [vmem:[%s15 + $0x8] sm:$0xff]
    %v2550 = vld [vmem:[%s15 + $0x10] sm:$0xff]
    %v2551 = vld [vmem:[%s15 + $0x18] sm:$0xff]
    %v2553 = vsel %vm523, %v2544, 0
    %v2556 = vsel %vm523, %v2545, 0
    %v2559 = vsel %vm523, %v2546, 0
    %v2562 = vsel %vm523, %v2547, 0
    %2564 = vmatprep.subr.mxu0 0.0
    %2565 = vmatpush1.msra.mxu0 %v2548
    %2566 = vmatprep.subr.mxu0 0.0
    %2567 = vmatpush1.msra.mxu0 %v2549
    %2568 = vmatprep.subr.mxu0 0.0
    %2569 = vmatpush1.msra.mxu0 %v2550
    %2570 = vmatprep.subr.mxu0 0.0
    %2571 = vmatpush1.msra.mxu0 %v2551
    %2572 = vmatprep.subr.mxu0 0.0
    %2573 = vmatpush1.msra.mxu0 0.0
    %2574 = vmatprep.subr.mxu0 0.0
    %2575 = vmatpush1.msra.mxu0 0.0
    %2576 = vmatprep.subr.mxu0 0.0
    %2577 = vmatpush1.msra.mxu0 0.0
    %2578 = vmatprep.subr.mxu0 0.0
    %2579 = vmatpush1.msra.mxu0 0.0
    %2580 = vmatprep.subr.mxu0 0.0
    %2581 = vmatpush1.msra.mxu0 0.0
    %2582 = vmatprep.subr.mxu0 0.0
    %2583 = vmatpush1.msra.mxu0 0.0
    %2584 = vmatprep.subr.mxu0 0.0
    %2585 = vmatpush1.msra.mxu0 0.0
    %2586 = vmatprep.subr.mxu0 0.0
    %2587 = vmatpush1.msra.mxu0 0.0
    %2588 = vmatprep.subr.mxu0 0.0
    %2589 = vmatpush1.msra.mxu0 0.0
    %2590 = vmatprep.subr.mxu0 0.0
    %2591 = vmatpush1.msra.mxu0 0.0
    %2592 = vmatprep.subr.mxu0 0.0
    %2593 = vmatpush1.msra.mxu0 0.0
    %2594 = vmatprep.subr.mxu0 0.0
    %2595 = vmatpush1.msra.mxu0 0.0
    %2596 = vmatprep.subr.mxu0 0.0
    %2597 = vmatpush1.msra.mxu0 0.0
    %2598 = vmatprep.subr.mxu0 0.0
    %2599 = vmatpush1.msra.mxu0 0.0
    %2600 = vmatprep.subr.mxu0 0.0
    %2601 = vmatpush1.msra.mxu0 0.0
    %2602 = vmatprep.subr.mxu0 0.0
    %2603 = vmatpush1.msra.mxu0 0.0
    %2604 = vmatprep.subr.mxu0 0.0
    %2605 = vmatpush1.msra.mxu0 0.0
    %2606 = vmatprep.subr.mxu0 0.0
    %2607 = vmatpush1.msra.mxu0 0.0
    %2608 = vmatprep.subr.mxu0 0.0
    %2609 = vmatpush1.msra.mxu0 0.0
    %2610 = vmatprep.subr.mxu0 0.0
    %2611 = vmatpush1.msra.mxu0 0.0
    %2612 = vmatprep.subr.mxu0 0.0
    %2613 = vmatpush1.msra.mxu0 0.0
    %2614 = vmatprep.subr.mxu0 0.0
    %2615 = vmatpush1.msra.mxu0 0.0
    %2616 = vmatprep.subr.mxu0 0.0
    %2617 = vmatpush1.msra.mxu0 0.0
    %2618 = vmatprep.subr.mxu0 0.0
    %2619 = vmatpush1.msra.mxu0 0.0
    %2620 = vmatprep.subr.mxu0 0.0
    %2621 = vmatpush1.msra.mxu0 0.0
    %2622 = vmatprep.subr.mxu0 0.0
    %2623 = vmatpush1.msra.mxu0 0.0
    %2624 = vmatprep.subr.mxu0 0.0
    %2625 = vmatpush1.msra.mxu0 0.0
    %2626 = vmatprep.subr.mxu0 0.0
    %2627 = vmatpush1.msra.mxu0 0.0
    %2628 = vmatprep.mubr.f32.mxu0 0.0
    %2629 = vmatmul.mubr.f32.gmra.mrb[0].mxu0 %v2553
    %v2630 = vpop.f32.mrb[0].mxu0
    %v2631 = vadd.f32 0.0, %v2630
    %v2632 = vpop.f32.mrb[0].mxu0
    %2633 = vmatprep.mubr.f32.mxu0 0.0
    %2634 = vmatmul.mubr.f32.gmra.mrb[0].mxu0 %v2556
    %v2635 = vpop.f32.mrb[0].mxu0
    %v2636 = vadd.f32 0.0, %v2635
    %v2637 = vpop.f32.mrb[0].mxu0
    %2638 = vmatprep.mubr.f32.mxu0 0.0
    %2639 = vmatmul.mubr.f32.gmra.mrb[0].mxu0 %v2559
    %v2640 = vpop.f32.mrb[0].mxu0
    %v2641 = vadd.f32 0.0, %v2640
    %v2642 = vpop.f32.mrb[0].mxu0
    %2643 = vmatprep.mubr.f32.mxu0 0.0
    %2644 = vmatmul.mubr.f32.gmra.mrb[0].mxu0 %v2562
    %v2645 = vpop.f32.mrb[0].mxu0
    %v2646 = vadd.f32 0.0, %v2645
    %v2647 = vpop.f32.mrb[0].mxu0
    %2648 = vdwg.mxu0
    %v2649 = vld [vmem:[%s16] sm:$0x1]
    %v2651 = vlaneseq
    %v2652 = vshrl.u32 %v2651, 7
    %v2653 = vsub.s32 0, %v2652
    %v2654 = vrot.slane %v2649, %v2653
    %v2656 = vmul.f32 %v2631, %v2654
    %v2657 = vmul.f32 %v2636, %v2654
    %v2658 = vmul.f32 %v2641, %v2654
    %v2659 = vmul.f32 %v2646, %v2654
    %v2660 = vsel %vm523, %v2656, 0.0
    %2661 = vadd.xlane.f32.xlu0 %v2660
    %v2662 = vpop.xlane.xlu0 %2661
    %v2663 = vsel %vm523, %v2657, 0.0
    %2664 = vadd.xlane.f32.xlu0 %v2663
    %v2665 = vpop.xlane.xlu0 %2664
    %v2666 = vsel %vm523, %v2658, 0.0
    %2667 = vadd.xlane.f32.xlu0 %v2666
    %v2668 = vpop.xlane.xlu0 %2667
    %v2669 = vsel %vm523, %v2659, 0.0
    %2670 = vadd.xlane.f32.xlu0 %v2669
    %v2671 = vpop.xlane.xlu0 %2670
    %vm2672 = vcmp.ge.f32.partialorder %v2662, 0.0
    %vm2673 = vcmp.ge.f32.partialorder %v2665, 0.0
    %vm2674 = vcmp.ge.f32.partialorder %v2668, 0.0
    %vm2675 = vcmp.ge.f32.partialorder %v2671, 0.0
    %v2676 = vmul.f32 %v2662, 0.2
    %v2677 = vmul.f32 %v2665, 0.2
    %v2678 = vmul.f32 %v2668, 0.2
    %v2679 = vmul.f32 %v2671, 0.2
    %v2680 = vsel %vm2672, %v2662, %v2676
    %v2681 = vsel %vm2673, %v2665, %v2677
    %v2682 = vsel %vm2674, %v2668, %v2678
    %v2683 = vsel %vm2675, %v2671, %v2679
    %v2684 = vmax.f32 %v2680, %v2681
    %v2685 = vmax.f32 %v2682, %v2683
    %v2686 = vmax.f32 %v2684, %v2685
    %v2687 = vrot.slane %v2686, 4
    %v2688 = vmax.f32 %v2686, %v2687
    %v2689 = vrot.slane %v2688, 2
    %v2690 = vmax.f32 %v2688, %v2689
    %v2691 = vrot.slane %v2690, 1
    %v2692 = vmax.f32 %v2690, %v2691
    %s2693 = vtos %v2692
    %v2694 = vstv %s2693
    %v2695 = vsub.f32 %v2680, %v2694
    %v2696 = vsub.f32 %v2681, %v2694
    %v2697 = vsub.f32 %v2682, %v2694
    %v2698 = vsub.f32 %v2683, %v2694
    %v2699 = vmul.f32 %v2695, 1.442695
    %v2700 = vpow.pop %v2699
    %v2701 = vmul.f32 %v2696, 1.442695
    %v2702 = vpow.pop %v2701
    %v2703 = vmul.f32 %v2697, 1.442695
    %v2704 = vpow.pop %v2703
    %v2705 = vmul.f32 %v2698, 1.442695
    %v2706 = vpow.pop %v2705
    %v2707 = vmul.f32 %v2631, %v2700
    %v2708 = vmul.f32 %v2636, %v2702
    %v2709 = vmul.f32 %v2641, %v2704
    %v2710 = vmul.f32 %v2646, %v2706
    %v2712 = vsel %vm523, %v284, 0
    %2714 = vmatprep.subr.mxu0 0.0
    %2715 = vmatpush1.msra.mxu0 %v2707
    %2716 = vmatprep.subr.mxu0 0.0
    %2717 = vmatpush1.msra.mxu0 %v2708
    %2718 = vmatprep.subr.mxu0 0.0
    %2719 = vmatpush1.msra.mxu0 %v2709
    %2720 = vmatprep.subr.mxu0 0.0
    %2721 = vmatpush1.msra.mxu0 %v2710
    %2722 = vmatprep.subr.mxu0 0.0
    %2723 = vmatpush1.msra.mxu0 0.0
    %2724 = vmatprep.subr.mxu0 0.0
    %2725 = vmatpush1.msra.mxu0 0.0
    %2726 = vmatprep.subr.mxu0 0.0
    %2727 = vmatpush1.msra.mxu0 0.0
    %2728 = vmatprep.subr.mxu0 0.0
    %2729 = vmatpush1.msra.mxu0 0.0
    %2730 = vmatprep.subr.mxu0 0.0
    %2731 = vmatpush1.msra.mxu0 0.0
    %2732 = vmatprep.subr.mxu0 0.0
    %2733 = vmatpush1.msra.mxu0 0.0
    %2734 = vmatprep.subr.mxu0 0.0
    %2735 = vmatpush1.msra.mxu0 0.0
    %2736 = vmatprep.subr.mxu0 0.0
    %2737 = vmatpush1.msra.mxu0 0.0
    %2738 = vmatprep.subr.mxu0 0.0
    %2739 = vmatpush1.msra.mxu0 0.0
    %2740 = vmatprep.subr.mxu0 0.0
    %2741 = vmatpush1.msra.mxu0 0.0
    %2742 = vmatprep.subr.mxu0 0.0
    %2743 = vmatpush1.msra.mxu0 0.0
    %2744 = vmatprep.subr.mxu0 0.0
    %2745 = vmatpush1.msra.mxu0 0.0
    %2746 = vmatprep.subr.mxu0 0.0
    %2747 = vmatpush1.msra.mxu0 0.0
    %2748 = vmatprep.subr.mxu0 0.0
    %2749 = vmatpush1.msra.mxu0 0.0
    %2750 = vmatprep.subr.mxu0 0.0
    %2751 = vmatpush1.msra.mxu0 0.0
    %2752 = vmatprep.subr.mxu0 0.0
    %2753 = vmatpush1.msra.mxu0 0.0
    %2754 = vmatprep.subr.mxu0 0.0
    %2755 = vmatpush1.msra.mxu0 0.0
    %2756 = vmatprep.subr.mxu0 0.0
    %2757 = vmatpush1.msra.mxu0 0.0
    %2758 = vmatprep.subr.mxu0 0.0
    %2759 = vmatpush1.msra.mxu0 0.0
    %2760 = vmatprep.subr.mxu0 0.0
    %2761 = vmatpush1.msra.mxu0 0.0
    %2762 = vmatprep.subr.mxu0 0.0
    %2763 = vmatpush1.msra.mxu0 0.0
    %2764 = vmatprep.subr.mxu0 0.0
    %2765 = vmatpush1.msra.mxu0 0.0
    %2766 = vmatprep.subr.mxu0 0.0
    %2767 = vmatpush1.msra.mxu0 0.0
    %2768 = vmatprep.subr.mxu0 0.0
    %2769 = vmatpush1.msra.mxu0 0.0
    %2770 = vmatprep.subr.mxu0 0.0
    %2771 = vmatpush1.msra.mxu0 0.0
    %2772 = vmatprep.subr.mxu0 0.0
    %2773 = vmatpush1.msra.mxu0 0.0
    %2774 = vmatprep.subr.mxu0 0.0
    %2775 = vmatpush1.msra.mxu0 0.0
    %2776 = vmatprep.subr.mxu0 0.0
    %2777 = vmatpush1.msra.mxu0 0.0
    %2778 = vmatprep.mubr.f32.mxu0 0.0
    %2779 = vmatmul.mubr.f32.gmra.mrb[0].mxu0 %v2712
    %v2780 = vpop.f32.mrb[0].mxu0
    %v2781 = vadd.f32 0.0, %v2780
    %v2782 = vpop.f32.mrb[0].mxu0
    %2783 = vdwg.mxu0
    %2784 = vmatprep.subr.mxu0 0.0
    %2785 = vmatpush1.msra.mxu0 %v2700
    %2786 = vmatprep.subr.mxu0 0.0
    %2787 = vmatpush1.msra.mxu0 %v2702
    %2788 = vmatprep.subr.mxu0 0.0
    %2789 = vmatpush1.msra.mxu0 %v2704
    %2790 = vmatprep.subr.mxu0 0.0
    %2791 = vmatpush1.msra.mxu0 %v2706
    %2792 = vmatprep.subr.mxu0 0.0
    %2793 = vmatpush1.msra.mxu0 0.0
    %2794 = vmatprep.subr.mxu0 0.0
    %2795 = vmatpush1.msra.mxu0 0.0
    %2796 = vmatprep.subr.mxu0 0.0
    %2797 = vmatpush1.msra.mxu0 0.0
    %2798 = vmatprep.subr.mxu0 0.0
    %2799 = vmatpush1.msra.mxu0 0.0
    %2800 = vmatprep.subr.mxu0 0.0
    %2801 = vmatpush1.msra.mxu0 0.0
    %2802 = vmatprep.subr.mxu0 0.0
    %2803 = vmatpush1.msra.mxu0 0.0
    %2804 = vmatprep.subr.mxu0 0.0
    %2805 = vmatpush1.msra.mxu0 0.0
    %2806 = vmatprep.subr.mxu0 0.0
    %2807 = vmatpush1.msra.mxu0 0.0
    %2808 = vmatprep.subr.mxu0 0.0
    %2809 = vmatpush1.msra.mxu0 0.0
    %2810 = vmatprep.subr.mxu0 0.0
    %2811 = vmatpush1.msra.mxu0 0.0
    %2812 = vmatprep.subr.mxu0 0.0
    %2813 = vmatpush1.msra.mxu0 0.0
    %2814 = vmatprep.subr.mxu0 0.0
    %2815 = vmatpush1.msra.mxu0 0.0
    %2816 = vmatprep.subr.mxu0 0.0
    %2817 = vmatpush1.msra.mxu0 0.0
    %2818 = vmatprep.subr.mxu0 0.0
    %2819 = vmatpush1.msra.mxu0 0.0
    %2820 = vmatprep.subr.mxu0 0.0
    %2821 = vmatpush1.msra.mxu0 0.0
    %2822 = vmatprep.subr.mxu0 0.0
    %2823 = vmatpush1.msra.mxu0 0.0
    %2824 = vmatprep.subr.mxu0 0.0
    %2825 = vmatpush1.msra.mxu0 0.0
    %2826 = vmatprep.subr.mxu0 0.0
    %2827 = vmatpush1.msra.mxu0 0.0
    %2828 = vmatprep.subr.mxu0 0.0
    %2829 = vmatpush1.msra.mxu0 0.0
    %2830 = vmatprep.subr.mxu0 0.0
    %2831 = vmatpush1.msra.mxu0 0.0
    %2832 = vmatprep.subr.mxu0 0.0
    %2833 = vmatpush1.msra.mxu0 0.0
    %2834 = vmatprep.subr.mxu0 0.0
    %2835 = vmatpush1.msra.mxu0 0.0
    %2836 = vmatprep.subr.mxu0 0.0
    %2837 = vmatpush1.msra.mxu0 0.0
    %2838 = vmatprep.subr.mxu0 0.0
    %2839 = vmatpush1.msra.mxu0 0.0
    %2840 = vmatprep.subr.mxu0 0.0
    %2841 = vmatpush1.msra.mxu0 0.0
    %2842 = vmatprep.subr.mxu0 0.0
    %2843 = vmatpush1.msra.mxu0 0.0
    %2844 = vmatprep.subr.mxu0 0.0
    %2845 = vmatpush1.msra.mxu0 0.0
    %2846 = vmatprep.subr.mxu0 0.0
    %2847 = vmatpush1.msra.mxu0 0.0
    %2848 = vmatprep.mubr.f32.mxu0 0.0
    %2849 = vmatmul.mubr.f32.gmra.mrb[0].mxu0 %v2712
    %v2850 = vpop.f32.mrb[0].mxu0
    %v2851 = vadd.f32 0.0, %v2850
    %v2852 = vpop.f32.mrb[0].mxu0
    %2853 = vdwg.mxu0
    %v2854 = vrcp.pop %v2851
    %v2855 = vmul.f32 1.0, %v2854
    %2857 = vset.pattern.permute.xlu0 0
    %2858 = vperm.xlu0 %2857, %v2855
    %v2859 = vpop.permute.xlu0 %2858
    %v2861 = vmul.f32 %v2781, %v2859
    %v2862 = vld [vmem:[%s17] sm:$0xff]
    %v2863 = vld [vmem:[%s17 + $0x8] sm:$0xff]
    %v2864 = vld [vmem:[%s17 + $0x10] sm:$0xff]
    %v2865 = vld [vmem:[%s17 + $0x18] sm:$0xff]
    %v2866 = vld [vmem:[%s18] sm:$0x1]
    %v2868 = vlaneseq
    %v2869 = vshrl.u32 %v2868, 7
    %v2870 = vsub.s32 0, %v2869
    %v2871 = vrot.slane %v2866, %v2870
    %v2874 = vsel %vm523, %v2861, 0
    %2876 = vmatprep.subr.mxu0 0.0
    %2877 = vmatpush1.msra.mxu0 %v2862
    %2878 = vmatprep.subr.mxu0 0.0
    %2879 = vmatpush1.msra.mxu0 %v2863
    %2880 = vmatprep.subr.mxu0 0.0
    %2881 = vmatpush1.msra.mxu0 %v2864
    %2882 = vmatprep.subr.mxu0 0.0
    %2883 = vmatpush1.msra.mxu0 %v2865
    %2884 = vmatprep.subr.mxu0 0.0
    %2885 = vmatpush1.msra.mxu0 0.0
    %2886 = vmatprep.subr.mxu0 0.0
    %2887 = vmatpush1.msra.mxu0 0.0
    %2888 = vmatprep.subr.mxu0 0.0
    %2889 = vmatpush1.msra.mxu0 0.0
    %2890 = vmatprep.subr.mxu0 0.0
    %2891 = vmatpush1.msra.mxu0 0.0
    %2892 = vmatprep.subr.mxu0 0.0
    %2893 = vmatpush1.msra.mxu0 0.0
    %2894 = vmatprep.subr.mxu0 0.0
    %2895 = vmatpush1.msra.mxu0 0.0
    %2896 = vmatprep.subr.mxu0 0.0
    %2897 = vmatpush1.msra.mxu0 0.0
    %2898 = vmatprep.subr.mxu0 0.0
    %2899 = vmatpush1.msra.mxu0 0.0
    %2900 = vmatprep.subr.mxu0 0.0
    %2901 = vmatpush1.msra.mxu0 0.0
    %2902 = vmatprep.subr.mxu0 0.0
    %2903 = vmatpush1.msra.mxu0 0.0
    %2904 = vmatprep.subr.mxu0 0.0
    %2905 = vmatpush1.msra.mxu0 0.0
    %2906 = vmatprep.subr.mxu0 0.0
    %2907 = vmatpush1.msra.mxu0 0.0
    %2908 = vmatprep.subr.mxu0 0.0
    %2909 = vmatpush1.msra.mxu0 0.0
    %2910 = vmatprep.subr.mxu0 0.0
    %2911 = vmatpush1.msra.mxu0 0.0
    %2912 = vmatprep.subr.mxu0 0.0
    %2913 = vmatpush1.msra.mxu0 0.0
    %2914 = vmatprep.subr.mxu0 0.0
    %2915 = vmatpush1.msra.mxu0 0.0
    %2916 = vmatprep.subr.mxu0 0.0
    %2917 = vmatpush1.msra.mxu0 0.0
    %2918 = vmatprep.subr.mxu0 0.0
    %2919 = vmatpush1.msra.mxu0 0.0
    %2920 = vmatprep.subr.mxu0 0.0
    %2921 = vmatpush1.msra.mxu0 0.0
    %2922 = vmatprep.subr.mxu0 0.0
    %2923 = vmatpush1.msra.mxu0 0.0
    %2924 = vmatprep.subr.mxu0 0.0
    %2925 = vmatpush1.msra.mxu0 0.0
    %2926 = vmatprep.subr.mxu0 0.0
    %2927 = vmatpush1.msra.mxu0 0.0
    %2928 = vmatprep.subr.mxu0 0.0
    %2929 = vmatpush1.msra.mxu0 0.0
    %2930 = vmatprep.subr.mxu0 0.0
    %2931 = vmatpush1.msra.mxu0 0.0
    %2932 = vmatprep.subr.mxu0 0.0
    %2933 = vmatpush1.msra.mxu0 0.0
    %2934 = vmatprep.subr.mxu0 0.0
    %2935 = vmatpush1.msra.mxu0 0.0
    %2936 = vmatprep.subr.mxu0 0.0
    %2937 = vmatpush1.msra.mxu0 0.0
    %2938 = vmatprep.subr.mxu0 0.0
    %2939 = vmatpush1.msra.mxu0 0.0
    %2940 = vmatprep.mubr.f32.mxu0 0.0
    %2941 = vmatmul.mubr.f32.gmra.mrb[0].mxu0 %v2874
    %v2942 = vpop.f32.mrb[0].mxu0
    %v2943 = vadd.f32 %v2871, %v2942
    %v2944 = vpop.f32.mrb[0].mxu0
    %2945 = vdwg.mxu0
    %v2946 = vld [vmem:[%s19] sm:$0xff]
    %v2947 = vld [vmem:[%s19 + $0x8] sm:$0xff]
    %v2948 = vld [vmem:[%s20] sm:$0x1]
    %v2950 = vlaneseq
    %v2951 = vshrl.u32 %v2950, 7
    %v2952 = vsub.s32 0, %v2951
    %v2953 = vrot.slane %v2948, %v2952
    %vm2955 = vcmask 130048
    %v2957 = vsel %vm2955, %v2943, 0
    %2959 = vmatprep.subr.mxu0 0.0
    %2960 = vmatpush1.msra.mxu0 %v2946
    %2961 = vmatprep.subr.mxu0 0.0
    %2962 = vmatpush1.msra.mxu0 %v2947
    %2963 = vmatprep.subr.mxu0 0.0
    %2964 = vmatpush1.msra.mxu0 0.0
    %2965 = vmatprep.subr.mxu0 0.0
    %2966 = vmatpush1.msra.mxu0 0.0
    %2967 = vmatprep.subr.mxu0 0.0
    %2968 = vmatpush1.msra.mxu0 0.0
    %2969 = vmatprep.subr.mxu0 0.0
    %2970 = vmatpush1.msra.mxu0 0.0
    %2971 = vmatprep.subr.mxu0 0.0
    %2972 = vmatpush1.msra.mxu0 0.0
    %2973 = vmatprep.subr.mxu0 0.0
    %2974 = vmatpush1.msra.mxu0 0.0
    %2975 = vmatprep.subr.mxu0 0.0
    %2976 = vmatpush1.msra.mxu0 0.0
    %2977 = vmatprep.subr.mxu0 0.0
    %2978 = vmatpush1.msra.mxu0 0.0
    %2979 = vmatprep.subr.mxu0 0.0
    %2980 = vmatpush1.msra.mxu0 0.0
    %2981 = vmatprep.subr.mxu0 0.0
    %2982 = vmatpush1.msra.mxu0 0.0
    %2983 = vmatprep.subr.mxu0 0.0
    %2984 = vmatpush1.msra.mxu0 0.0
    %2985 = vmatprep.subr.mxu0 0.0
    %2986 = vmatpush1.msra.mxu0 0.0
    %2987 = vmatprep.subr.mxu0 0.0
    %2988 = vmatpush1.msra.mxu0 0.0
    %2989 = vmatprep.subr.mxu0 0.0
    %2990 = vmatpush1.msra.mxu0 0.0
    %2991 = vmatprep.subr.mxu0 0.0
    %2992 = vmatpush1.msra.mxu0 0.0
    %2993 = vmatprep.subr.mxu0 0.0
    %2994 = vmatpush1.msra.mxu0 0.0
    %2995 = vmatprep.subr.mxu0 0.0
    %2996 = vmatpush1.msra.mxu0 0.0
    %2997 = vmatprep.subr.mxu0 0.0
    %2998 = vmatpush1.msra.mxu0 0.0
    %2999 = vmatprep.subr.mxu0 0.0
    %3000 = vmatpush1.msra.mxu0 0.0
    %3001 = vmatprep.subr.mxu0 0.0
    %3002 = vmatpush1.msra.mxu0 0.0
    %3003 = vmatprep.subr.mxu0 0.0
    %3004 = vmatpush1.msra.mxu0 0.0
    %3005 = vmatprep.subr.mxu0 0.0
    %3006 = vmatpush1.msra.mxu0 0.0
    %3007 = vmatprep.subr.mxu0 0.0
    %3008 = vmatpush1.msra.mxu0 0.0
    %3009 = vmatprep.subr.mxu0 0.0
    %3010 = vmatpush1.msra.mxu0 0.0
    %3011 = vmatprep.subr.mxu0 0.0
    %3012 = vmatpush1.msra.mxu0 0.0
    %3013 = vmatprep.subr.mxu0 0.0
    %3014 = vmatpush1.msra.mxu0 0.0
    %3015 = vmatprep.subr.mxu0 0.0
    %3016 = vmatpush1.msra.mxu0 0.0
    %3017 = vmatprep.subr.mxu0 0.0
    %3018 = vmatpush1.msra.mxu0 0.0
    %3019 = vmatprep.subr.mxu0 0.0
    %3020 = vmatpush1.msra.mxu0 0.0
    %3021 = vmatprep.subr.mxu0 0.0
    %3022 = vmatpush1.msra.mxu0 0.0
    %3023 = vmatprep.mubr.f32.mxu0 0.0
    %3024 = vmatmul.mubr.f32.gmra.mrb[0].mxu0 %v2957
    %v3025 = vpop.f32.mrb[0].mxu0
    %v3026 = vadd.f32 %v2953, %v3025
    %v3027 = vpop.f32.mrb[0].mxu0
    %3028 = vdwg.mxu0
    %vm3029 = vcmask 33792
    %v3030 = vsel %vm3029, %v3026, -inf
    %3031 = vmax.xlane.f32.xlu0 %v3030
    %v3032 = vpop.xlane.xlu0 %3031
    %v3033 = vsub.f32 %v3026, %v3032
    %v3034 = vmul.f32 %v3033, 1.442695
    %v3035 = vpow.pop %v3034
    %v3036 = vsel %vm3029, %v3035, 0.0
    %3037 = vadd.xlane.f32.xlu0 %v3036
    %v3038 = vpop.xlane.xlu0 %3037
    %v3039 = vrcp.pop %v3038
    %v3040 = vmul.f32 %v3035, %v3039
    %3041 = vst.msk [vmem:[#allocation2] sm:$0x3] %vm3029, %v3040
    // Predicated region
    $region86: #{graph_vamp_forward.1} parent=1 // pred_check
      _
    $region87: #{graph_vamp_forward.1} parent=1 // pred_check_branch
      %3043 = sbr.rel (0) target = $region89
    $region88: #{graph_vamp_forward.1} parent=1 // pred_region
      %s3045 = ssub.s32 32, 32
      %3046 = vsyncadd [#allocation3], %s3045
      %s3048 = sshll.u32 [#allocation2], 4
      %s3049 = int_to_ptr.vmem [resolvable:$true] %s3048
      %3051 = dma.vmem_to_hbm [thread:$0]  %s3049, 32, %s21, [#allocation3]
    $region89: #{graph_vamp_forward.1} parent=1 // pred_fallthru
      _
    // Predicated region
    $region90: #{graph_vamp_forward.1} parent=1 // pred_check
      _
    $region91: #{graph_vamp_forward.1} parent=1 // pred_check_branch
      %3053 = sbr.rel (0) target = $region93
    $region92: #{graph_vamp_forward.1} parent=1 // pred_region
      %3054 = dma.done [#allocation3], 32
    $region93: #{graph_vamp_forward.1} parent=1 // pred_fallthru
      _
    %3055 = vsyncpa [#allocation3], 1

</llo_original>
